<compile_context>
chip_gen: v7x
topology: tpu7x:2x2x1
jax: 0.10.0
libtpu: 0.0.40
codegen_flags: <defaults>
</compile_context>

<pallas_src>
import math

import jax
import jax.numpy as jnp
from jax.experimental import pallas as pl
from jax.experimental.pallas import tpu as pltpu


OUT_PAD = 128  # lane-dense padded class dimension (unmasked vst)


def _cnn3d_kernel(x_ref, w_ref, b_ref, o_ref):
    # x_ref: (TILE_N, K)      f32  flattened NCDHW activations (streamed)
    # w_ref: (K, OUT_PAD)     bf16 folded conv+linear weight (resident, 1 buf)
    # b_ref: (1, OUT_PAD)     f32  folded bias (resident)
    # o_ref: (TILE_N, OUT_PAD) f32
    # In-kernel f32->bf16 cast: VPU work fully hidden under the x DMA; halves
    # the HBM traffic vs casting (copying) x in the wrapper.
    x_bf16 = x_ref[...].astype(jnp.bfloat16)
    acc = jnp.dot(x_bf16, w_ref[...], preferred_element_type=jnp.float32)
    o_ref[...] = acc + b_ref[...]


def _round_up(n, m):
    return ((n + m - 1) // m) * m


def _resident_spec(block_shape):
    """BlockSpec for a grid-invariant operand (constant index_map).

    pipeline_mode=pl.Buffered(1) avoids allocating a second buffer / re-DMA
    bookkeeping for an operand that never changes across grid steps.  Falls
    back gracefully if the running jax lacks the kwarg.
    """
    index_map = lambda i: (0,) * len(block_shape)
    if hasattr(pl, "Buffered"):
        try:
            return pl.BlockSpec(block_shape, index_map,
                                pipeline_mode=pl.Buffered(1))
        except TypeError:
            pass
    return pl.BlockSpec(block_shape, index_map)


def _vmem_limit_and_row_cap():
    """Generation-aware scoped-VMEM limit and max f32-streamed rows per tile."""
    limit = 48 * 1024 * 1024   # safe everywhere (v7x physical VMEM = 64 MiB)
    cap = 512
    try:
        vmem = pltpu.get_tpu_info().vmem_capacity_bytes
        if vmem >= 100 * 1024 * 1024:      # v5e / v6e: 128 MiB physical VMEM
            limit = 96 * 1024 * 1024
            cap = 1024
    except Exception:
        pass                               # older jax / no query: keep defaults
    return limit, cap


def _choose_tile_n(n_rows, k, row_cap, vmem_budget):
    """Rows per tile so 2x f32 x-tile + 1x bf16 weight + 2x f32 out fit VMEM."""
    # TODO(synk): if K grows so large that even TILE_N=8 (or the K x 128 weight
    # itself) no longer fits VMEM, add a K grid axis ("arbitrary") with an f32
    # accumulator scratch + pl.when init/finalize instead of shrinking further.
    w_bytes = k * OUT_PAD * 2                      # bf16 weight, single buffer
    per_row = 2 * k * 4 + 2 * OUT_PAD * 4          # double-buffered x + out
    rows = max(8, (vmem_budget - w_bytes) // per_row)
    cap = max(8, min(row_cap, (rows // 8) * 8))
    if n_rows < 16:
        return n_rows if n_rows <= cap else cap    # full-dim or 8-row tiles
    if n_rows <= 2 * cap:
        # Split into ~2 balanced tiles so ("parallel",) uses both v7x TCs.
        return min(cap, _round_up(pl.cdiv(n_rows, 2), 8))
    return cap


def prepare_params(conv_w, conv_b, lin_w, lin_b):
    """One-time fold + layout prep (keep out of the per-call hot path)."""
    out_ch = conv_w.shape[0]                       # 32
    num_classes = lin_w.shape[0]                   # 5
    K = math.prod(conv_w.shape[1:])                # 3*T*X*Y

    wc = conv_w.reshape(out_ch, K).astype(jnp.float32)       # (32, K)
    wl = lin_w.astype(jnp.float32)                           # (C, 32)

    # y = (x @ Wc.T + bc) @ Wl.T + bl  ==  x @ (Wl @ Wc).T + (bc @ Wl.T + bl)
    w_folded = (wl @ wc).T                                    # (K, C) f32
    b_folded = conv_b.astype(jnp.float32) @ wl.T + lin_b      # (C,)   f32

    # Lane-pad the class dim to 128 with zeros (lane-dense, unmasked stores).
    w_pad = jnp.zeros((K, OUT_PAD), jnp.float32).at[:, :num_classes].set(w_folded)
    b_pad = jnp.zeros((1, OUT_PAD), jnp.float32).at[:, :num_classes].set(b_folded)

    return w_pad.astype(jnp.bfloat16), b_pad, num_classes


def simple_cnn3d_forward(x, w_pad, b_pad, num_classes):
    """x: (N, 3, T, X, Y) float32. Returns (N, num_classes) float32."""
    N = x.shape[0]
    K = math.prod(x.shape[1:])
    assert w_pad.shape == (K, OUT_PAD)

    # Flatten is a view on a contiguous array; x is streamed to the kernel as
    # f32 with NO wrapper-side cast/pad copy (bf16 cast happens in-kernel).
    x_flat = x.reshape(N, K)

    # Only pad when the batch is smaller than one sublane group (8 rows);
    # otherwise a partial last tile is handled by masked stores and the
    # overhanging rows never land in a valid output row.
    n_rows = N
    if N < 8:
        x_flat = jnp.pad(x_flat, ((0, 8 - N), (0, 0)))
        n_rows = 8

    vmem_limit, row_cap = _vmem_limit_and_row_cap()
    tile_n = _choose_tile_n(n_rows, K, row_cap, vmem_limit - 4 * 1024 * 1024)
    grid = (pl.cdiv(n_rows, tile_n),)

    # TODO(synk): if this layer is invoked many times with small N, batch the
    # calls into one pallas_call (or cross-call-prefetch the folded weight);
    # at small N the per-call weight DMA dominates the x stream.
    out_padded = pl.pallas_call(
        _cnn3d_kernel,
        out_shape=jax.ShapeDtypeStruct((n_rows, OUT_PAD), jnp.float32),
        grid=grid,
        in_specs=[
            pl.BlockSpec((tile_n, K), lambda i: (i, 0)),   # streamed x tiles
            _resident_spec((K, OUT_PAD)),                  # resident folded W
            _resident_spec((1, OUT_PAD)),                  # resident folded b
        ],
        out_specs=pl.BlockSpec((tile_n, OUT_PAD), lambda i: (i, 0)),
        compiler_params=pltpu.CompilerParams(
            dimension_semantics=("parallel",),   # shard batch tiles on v7x 2xTC
            vmem_limit_bytes=vmem_limit,
        ),
    )(x_flat, w_pad, b_pad)

    # Strip batch padding / overhang rows and lane-padding columns.
    return out_padded[:N, :num_classes]


if __name__ == "__main__":
    # Small, module-consistent shapes: SimpleCNN3D(t_dim=8, img_x=16, img_y=16,
    # num_classes=5) applied to x of shape (N, 3, 8, 16, 16).
    N, C_in, T, X, Y = 2, 3, 8, 16, 16
    out_ch, num_classes = 32, 5

    key = jax.random.PRNGKey(0)
    kx, kcw, kcb, klw, klb = jax.random.split(key, 5)

    x = jax.random.normal(kx, (N, C_in, T, X, Y), dtype=jnp.float32)

    # Deterministic parameter init (PyTorch-style uniform bounds).
    fan_in_conv = C_in * T * X * Y
    bound_c = 1.0 / (fan_in_conv ** 0.5)
    conv_w = jax.random.uniform(kcw, (out_ch, C_in, T, X, Y),
                                minval=-bound_c, maxval=bound_c,
                                dtype=jnp.float32)
    conv_b = jax.random.uniform(kcb, (out_ch,),
                                minval=-bound_c, maxval=bound_c,
                                dtype=jnp.float32)
    bound_l = 1.0 / (out_ch ** 0.5)
    lin_w = jax.random.uniform(klw, (num_classes, out_ch),
                               minval=-bound_l, maxval=bound_l,
                               dtype=jnp.float32)
    lin_b = jax.random.uniform(klb, (num_classes,),
                               minval=-bound_l, maxval=bound_l,
                               dtype=jnp.float32)

    # One-time parameter prep (weight fold + bf16 cast + lane padding).
    w_pad, b_pad, n_cls = prepare_params(conv_w, conv_b, lin_w, lin_b)

    out = simple_cnn3d_forward(x, w_pad, b_pad, n_cls)
    out = jax.block_until_ready(out)

    # Pure-JAX f32 reference (two-step conv-as-matmul + linear).  The kernel
    # streams bf16 into the MXU (f32 accumulate), so compare at bf16-level
    # tolerance; the weight-fold itself only differs at ~1e-6.
    h_ref = x.reshape(N, -1) @ conv_w.reshape(out_ch, -1).T + conv_b
    ref = h_ref @ lin_w.T + lin_b
    assert out.shape == (N, num_classes)
    assert jnp.allclose(out, ref, atol=2e-2, rtol=2e-2), (
        jnp.max(jnp.abs(out - ref)))

    print("KERNEL_OK")
</pallas_src>

<mosaic_0001>
module attributes {stable_mosaic.version = 11 : i64} {
  func.func @_cnn3d_kernel(%arg0: i32, %arg1: memref<8x6144xf32, #tpu.memory_space<vmem>>, %arg2: memref<6144x128xbf16, #tpu.memory_space<vmem>>, %arg3: memref<1x128xf32, #tpu.memory_space<vmem>>, %arg4: memref<8x128xf32, #tpu.memory_space<vmem>>) attributes {dimension_semantics = [#tpu.dimension_semantics<parallel>], iteration_bounds = array<i64: 1>, scalar_prefetch = 0 : i64, scratch_operands = 0 : i64, tpu.core_type = #tpu.core_type<tc>, window_params = [{transform_indices = @transform_0, window_bounds = array<i64: 8, 6144>}, {pipeline_mode = #tpu.pipeline_mode<synchronous>, transform_indices = @transform_1, window_bounds = array<i64: 6144, 128>}, {pipeline_mode = #tpu.pipeline_mode<synchronous>, transform_indices = @transform_2, window_bounds = array<i64: 1, 128>}, {transform_indices = @transform_3, window_bounds = array<i64: 8, 128>}]} {
    %c0 = arith.constant 0 : index
    %c0_0 = arith.constant 0 : index
    %0 = vector.load %arg1[%c0, %c0_0] : memref<8x6144xf32, #tpu.memory_space<vmem>>, vector<8x6144xf32>
    %1 = arith.truncf %0 : vector<8x6144xf32> to vector<8x6144xbf16>
    %c0_1 = arith.constant 0 : index
    %c0_2 = arith.constant 0 : index
    %2 = vector.load %arg2[%c0_1, %c0_2] : memref<6144x128xbf16, #tpu.memory_space<vmem>>, vector<6144x128xbf16>
    %cst = arith.constant dense<0.000000e+00> : vector<8x128xf32>
    %3 = tpu.matmul %1, %2, %cst {dimension_numbers = #tpu.dot_dimension_numbers<[1], [0], [0], [1], [0, 0, 1, 1], [], []>} : vector<8x6144xbf16>, vector<6144x128xbf16>, vector<8x128xf32> -> vector<8x128xf32>
    %c0_3 = arith.constant 0 : index
    %c0_4 = arith.constant 0 : index
    %4 = vector.load %arg3[%c0_3, %c0_4] : memref<1x128xf32, #tpu.memory_space<vmem>>, vector<1x128xf32>
    %5 = vector.broadcast %4 : vector<1x128xf32> to vector<8x128xf32>
    %6 = arith.addf %3, %5 : vector<8x128xf32>
    %c0_5 = arith.constant 0 : index
    %c0_6 = arith.constant 0 : index
    %7 = vector.load %arg4[%c0_5, %c0_6] : memref<8x128xf32, #tpu.memory_space<vmem>>, vector<8x128xf32>
    tpu.vector_store %arg4[%c0_5, %c0_6], %6 {strides = array<i32>} : memref<8x128xf32, #tpu.memory_space<vmem>>, vector<8x128xf32>,
    return
  }
  func.func @transform_0(%arg0: i32) -> (i32, i32) {
    %c0_i32 = arith.constant 0 : i32
    %c0_i32_0 = arith.constant 0 : i32
    return %arg0, %c0_i32 : i32, i32
  }
  func.func @transform_1(%arg0: i32) -> (i32, i32) {
    %c0_i32 = arith.constant 0 : i32
    %c0_i32_0 = arith.constant 0 : i32
    %c0_i32_1 = arith.constant 0 : i32
    return %c0_i32, %c0_i32_0 : i32, i32
  }
  func.func @transform_2(%arg0: i32) -> (i32, i32) {
    %c0_i32 = arith.constant 0 : i32
    %c0_i32_0 = arith.constant 0 : i32
    %c0_i32_1 = arith.constant 0 : i32
    return %c0_i32, %c0_i32_0 : i32, i32
  }
  func.func @transform_3(%arg0: i32) -> (i32, i32) {
    %c0_i32 = arith.constant 0 : i32
    %c0_i32_0 = arith.constant 0 : i32
    return %arg0, %c0_i32 : i32, i32
  }
}

</mosaic_0001>

<llo_original>
// kernel: tpu_custom_call.1
$region0: #{tpu_custom_call.1}
  #allocation0 [shape = 'u32[]', space=smem, size = 0x4, offset = 0x4, fixed_abs, tag = 'smem constant byte address 0x4 - core index']
  #allocation1 [shape = 'u32[144,128]{1,0:T(1,128)}', space=vmem, size = 0x12000, scoped, tag = 'internal scratch']
  %s0 = inlined_call_operand.hbm [shape: f32[8,6144], index: 0, kind: input, shape index: {}]
  %s1 = inlined_call_operand.hbm [shape: bf16[6144,128], index: 1, kind: input, shape index: {}]
  %s2 = inlined_call_operand.hbm [shape: f32[1,128], index: 2, kind: input, shape index: {}]
  %s3 = inlined_call_operand.hbm [shape: f32[8,128], index: 3, kind: output, shape index: {}]
  %s4 = sld [smem:[#allocation0]]
  $region34: #{tpu_custom_call.1} parent=0
    _
  %s6 = ssub.s32 1, %s4
  %s7 = scalar_select 0, %s6, %s4
  $region1: #{tpu_custom_call.1} parent=0
    #allocation2 [shape = 'u8[196608]{0}', space=vmem, size = 0x30000, scoped, tag = 'input window, operand 0, single buffered']
    #allocation3 [shape = 's32[1]{0}', space=sflag, size = 0x4, scoped, tag = 'scoped memory for tpu_custom_call.1']
    #allocation4 [shape = 's32[1]{0}', space=sflag, size = 0x4, scoped, tag = 'scoped memory for tpu_custom_call.1']
    #allocation5 [shape = 'u8[1572864]{0}', space=vmem, size = 0x180000, scoped, tag = 'input window, operand 1, single buffered']
    #allocation6 [shape = 's32[1]{0}', space=sflag, size = 0x4, scoped, tag = 'scoped memory for tpu_custom_call.1']
    #allocation7 [shape = 'u8[512]{0}', space=vmem, size = 0x400, scoped, tag = 'input window, operand 2, single buffered']
    #allocation8 [shape = 'u8[4096]{0}', space=vmem, size = 0x1000, scoped, tag = 'output window, operand 0, single buffered']
    %8 = vsyncpa [#allocation3], 0
    %9 = vsyncpa [#allocation6], 0
    %10 = vsyncpa [#allocation4], 0
    // Predicated region
    $region2: #{tpu_custom_call.1} parent=1 // pred_check
      _
    $region3: #{tpu_custom_call.1} parent=1 // pred_check_branch
      %12 = sbr.rel (0) target = $region5
    $region4: #{tpu_custom_call.1} parent=1 // pred_region
      %s14 = ssub.s32 6144, 6144
      %15 = vsyncadd [#allocation3], %s14
      %s17 = sshll.u32 [#allocation2], 4
      %s18 = int_to_ptr.vmem [resolvable:$true] %s17
      %20 = dma.hbm_to_vmem [thread:$0]  %s0, 6144, %s18, [#allocation3]
    $region5: #{tpu_custom_call.1} parent=1 // pred_fallthru
      _
    // Predicated region
    $region6: #{tpu_custom_call.1} parent=1 // pred_check
      _
    $region7: #{tpu_custom_call.1} parent=1 // pred_check_branch
      %22 = sbr.rel (0) target = $region9
    $region8: #{tpu_custom_call.1} parent=1 // pred_region
      %s24 = ssub.s32 49152, 49152
      %25 = vsyncadd [#allocation6], %s24
      %s26 = sshll.u32 [#allocation5], 4
      %s27 = int_to_ptr.vmem [resolvable:$true] %s26
      %32 = dma.hbm_to_vmem [thread:$0]  %s1, 49152, %s27, [#allocation6], 64, 64, 4
    $region9: #{tpu_custom_call.1} parent=1 // pred_fallthru
      _
    // Predicated region
    $region10: #{tpu_custom_call.1} parent=1 // pred_check
      _
    $region11: #{tpu_custom_call.1} parent=1 // pred_check_branch
      %34 = sbr.rel (0) target = $region13
    $region12: #{tpu_custom_call.1} parent=1 // pred_region
      %s36 = ssub.s32 16, 16
      %37 = vsyncadd [#allocation6], %s36
      %s39 = sshll.u32 [#allocation7], 4
      %s40 = int_to_ptr.vmem [resolvable:$true] %s39
      %42 = dma.hbm_to_vmem [thread:$0]  %s2, 16, %s40, [#allocation6]
    $region13: #{tpu_custom_call.1} parent=1 // pred_fallthru
      _
    // Predicated region
    $region14: #{tpu_custom_call.1} parent=1 // pred_check
      _
    $region15: #{tpu_custom_call.1} parent=1 // pred_check_branch
      %44 = sbr.rel (0) target = $region17
    $region16: #{tpu_custom_call.1} parent=1 // pred_region
      %45 = dma.done [#allocation3], 6144
    $region17: #{tpu_custom_call.1} parent=1 // pred_fallthru
      _
    // Predicated region
    $region18: #{tpu_custom_call.1} parent=1 // pred_check
      _
    $region19: #{tpu_custom_call.1} parent=1 // pred_check_branch
      %47 = sbr.rel (0) target = $region21
    $region20: #{tpu_custom_call.1} parent=1 // pred_region
      %48 = dma.done [#allocation6], 49152
    $region21: #{tpu_custom_call.1} parent=1 // pred_fallthru
      _
    // Predicated region
    $region22: #{tpu_custom_call.1} parent=1 // pred_check
      _
    $region23: #{tpu_custom_call.1} parent=1 // pred_check_branch
      %50 = sbr.rel (0) target = $region25
    $region24: #{tpu_custom_call.1} parent=1 // pred_region
      %51 = dma.done [#allocation6], 16
    $region25: #{tpu_custom_call.1} parent=1 // pred_fallthru
      _
    %v53 = vld [vmem:[#allocation2] sm:$0xff]
    %v54 = vld [vmem:[#allocation2 + $0x8] sm:$0xff]
    %v55 = vld [vmem:[#allocation2 + $0x10] sm:$0xff]
    %v56 = vld [vmem:[#allocation2 + $0x18] sm:$0xff]
    %v57 = vld [vmem:[#allocation2 + $0x20] sm:$0xff]
    %v58 = vld [vmem:[#allocation2 + $0x28] sm:$0xff]
    %v59 = vld [vmem:[#allocation2 + $0x30] sm:$0xff]
    %v60 = vld [vmem:[#allocation2 + $0x38] sm:$0xff]
    %v61 = vld [vmem:[#allocation2 + $0x40] sm:$0xff]
    %v62 = vld [vmem:[#allocation2 + $0x48] sm:$0xff]
    %v63 = vld [vmem:[#allocation2 + $0x50] sm:$0xff]
    %v64 = vld [vmem:[#allocation2 + $0x58] sm:$0xff]
    %v65 = vld [vmem:[#allocation2 + $0x60] sm:$0xff]
    %v66 = vld [vmem:[#allocation2 + $0x68] sm:$0xff]
    %v67 = vld [vmem:[#allocation2 + $0x70] sm:$0xff]
    %v68 = vld [vmem:[#allocation2 + $0x78] sm:$0xff]
    %v69 = vld [vmem:[#allocation2 + $0x80] sm:$0xff]
    %v70 = vld [vmem:[#allocation2 + $0x88] sm:$0xff]
    %v71 = vld [vmem:[#allocation2 + $0x90] sm:$0xff]
    %v72 = vld [vmem:[#allocation2 + $0x98] sm:$0xff]
    %v73 = vld [vmem:[#allocation2 + $0xa0] sm:$0xff]
    %v74 = vld [vmem:[#allocation2 + $0xa8] sm:$0xff]
    %v75 = vld [vmem:[#allocation2 + $0xb0] sm:$0xff]
    %v76 = vld [vmem:[#allocation2 + $0xb8] sm:$0xff]
    %v77 = vld [vmem:[#allocation2 + $0xc0] sm:$0xff]
    %v78 = vld [vmem:[#allocation2 + $0xc8] sm:$0xff]
    %v79 = vld [vmem:[#allocation2 + $0xd0] sm:$0xff]
    %v80 = vld [vmem:[#allocation2 + $0xd8] sm:$0xff]
    %v81 = vld [vmem:[#allocation2 + $0xe0] sm:$0xff]
    %v82 = vld [vmem:[#allocation2 + $0xe8] sm:$0xff]
    %v83 = vld [vmem:[#allocation2 + $0xf0] sm:$0xff]
    %v84 = vld [vmem:[#allocation2 + $0xf8] sm:$0xff]
    %v85 = vld [vmem:[#allocation2 + $0x100] sm:$0xff]
    %v86 = vld [vmem:[#allocation2 + $0x108] sm:$0xff]
    %v87 = vld [vmem:[#allocation2 + $0x110] sm:$0xff]
    %v88 = vld [vmem:[#allocation2 + $0x118] sm:$0xff]
    %v89 = vld [vmem:[#allocation2 + $0x120] sm:$0xff]
    %v90 = vld [vmem:[#allocation2 + $0x128] sm:$0xff]
    %v91 = vld [vmem:[#allocation2 + $0x130] sm:$0xff]
    %v92 = vld [vmem:[#allocation2 + $0x138] sm:$0xff]
    %v93 = vld [vmem:[#allocation2 + $0x140] sm:$0xff]
    %v94 = vld [vmem:[#allocation2 + $0x148] sm:$0xff]
    %v95 = vld [vmem:[#allocation2 + $0x150] sm:$0xff]
    %v96 = vld [vmem:[#allocation2 + $0x158] sm:$0xff]
    %v97 = vld [vmem:[#allocation2 + $0x160] sm:$0xff]
    %v98 = vld [vmem:[#allocation2 + $0x168] sm:$0xff]
    %v99 = vld [vmem:[#allocation2 + $0x170] sm:$0xff]
    %v100 = vld [vmem:[#allocation2 + $0x178] sm:$0xff]
    %v101 = vpack.c.bf16 %v53, %v53
    %v102 = vpack.c.bf16 %v54, %v54
    %v103 = vpack.c.bf16 %v55, %v55
    %v104 = vpack.c.bf16 %v56, %v56
    %v105 = vpack.c.bf16 %v57, %v57
    %v106 = vpack.c.bf16 %v58, %v58
    %v107 = vpack.c.bf16 %v59, %v59
    %v108 = vpack.c.bf16 %v60, %v60
    %v109 = vpack.c.bf16 %v61, %v61
    %v110 = vpack.c.bf16 %v62, %v62
    %v111 = vpack.c.bf16 %v63, %v63
    %v112 = vpack.c.bf16 %v64, %v64
    %v113 = vpack.c.bf16 %v65, %v65
    %v114 = vpack.c.bf16 %v66, %v66
    %v115 = vpack.c.bf16 %v67, %v67
    %v116 = vpack.c.bf16 %v68, %v68
    %v117 = vpack.c.bf16 %v69, %v69
    %v118 = vpack.c.bf16 %v70, %v70
    %v119 = vpack.c.bf16 %v71, %v71
    %v120 = vpack.c.bf16 %v72, %v72
    %v121 = vpack.c.bf16 %v73, %v73
    %v122 = vpack.c.bf16 %v74, %v74
    %v123 = vpack.c.bf16 %v75, %v75
    %v124 = vpack.c.bf16 %v76, %v76
    %v125 = vpack.c.bf16 %v77, %v77
    %v126 = vpack.c.bf16 %v78, %v78
    %v127 = vpack.c.bf16 %v79, %v79
    %v128 = vpack.c.bf16 %v80, %v80
    %v129 = vpack.c.bf16 %v81, %v81
    %v130 = vpack.c.bf16 %v82, %v82
    %v131 = vpack.c.bf16 %v83, %v83
    %v132 = vpack.c.bf16 %v84, %v84
    %v133 = vpack.c.bf16 %v85, %v85
    %v134 = vpack.c.bf16 %v86, %v86
    %v135 = vpack.c.bf16 %v87, %v87
    %v136 = vpack.c.bf16 %v88, %v88
    %v137 = vpack.c.bf16 %v89, %v89
    %v138 = vpack.c.bf16 %v90, %v90
    %v139 = vpack.c.bf16 %v91, %v91
    %v140 = vpack.c.bf16 %v92, %v92
    %v141 = vpack.c.bf16 %v93, %v93
    %v142 = vpack.c.bf16 %v94, %v94
    %v143 = vpack.c.bf16 %v95, %v95
    %v144 = vpack.c.bf16 %v96, %v96
    %v145 = vpack.c.bf16 %v97, %v97
    %v146 = vpack.c.bf16 %v98, %v98
    %v147 = vpack.c.bf16 %v99, %v99
    %v148 = vpack.c.bf16 %v100, %v100
    %v149 = vld [vmem:[#allocation5] sm:$0xf]
    %v150 = vld [vmem:[#allocation5 + $0x4] sm:$0xf]
    %v151 = vld [vmem:[#allocation5 + $0x8] sm:$0xf]
    %v152 = vld [vmem:[#allocation5 + $0xc] sm:$0xf]
    %v153 = vld [vmem:[#allocation5 + $0x10] sm:$0xf]
    %v154 = vld [vmem:[#allocation5 + $0x14] sm:$0xf]
    %v155 = vld [vmem:[#allocation5 + $0x18] sm:$0xf]
    %v156 = vld [vmem:[#allocation5 + $0x1c] sm:$0xf]
    %v157 = vld [vmem:[#allocation5 + $0x20] sm:$0xf]
    %v158 = vld [vmem:[#allocation5 + $0x24] sm:$0xf]
    %v159 = vld [vmem:[#allocation5 + $0x28] sm:$0xf]
    %v160 = vld [vmem:[#allocation5 + $0x2c] sm:$0xf]
    %v161 = vld [vmem:[#allocation5 + $0x30] sm:$0xf]
    %v162 = vld [vmem:[#allocation5 + $0x34] sm:$0xf]
    %v163 = vld [vmem:[#allocation5 + $0x38] sm:$0xf]
    %v164 = vld [vmem:[#allocation5 + $0x3c] sm:$0xf]
    %v165 = vld [vmem:[#allocation5 + $0x40] sm:$0xf]
    %v166 = vld [vmem:[#allocation5 + $0x44] sm:$0xf]
    %v167 = vld [vmem:[#allocation5 + $0x48] sm:$0xf]
    %v168 = vld [vmem:[#allocation5 + $0x4c] sm:$0xf]
    %v169 = vld [vmem:[#allocation5 + $0x50] sm:$0xf]
    %v170 = vld [vmem:[#allocation5 + $0x54] sm:$0xf]
    %v171 = vld [vmem:[#allocation5 + $0x58] sm:$0xf]
    %v172 = vld [vmem:[#allocation5 + $0x5c] sm:$0xf]
    %v173 = vld [vmem:[#allocation5 + $0x60] sm:$0xf]
    %v174 = vld [vmem:[#allocation5 + $0x64] sm:$0xf]
    %v175 = vld [vmem:[#allocation5 + $0x68] sm:$0xf]
    %v176 = vld [vmem:[#allocation5 + $0x6c] sm:$0xf]
    %v177 = vld [vmem:[#allocation5 + $0x70] sm:$0xf]
    %v178 = vld [vmem:[#allocation5 + $0x74] sm:$0xf]
    %v179 = vld [vmem:[#allocation5 + $0x78] sm:$0xf]
    %v180 = vld [vmem:[#allocation5 + $0x7c] sm:$0xf]
    %v181 = vld [vmem:[#allocation5 + $0x80] sm:$0xf]
    %v182 = vld [vmem:[#allocation5 + $0x84] sm:$0xf]
    %v183 = vld [vmem:[#allocation5 + $0x88] sm:$0xf]
    %v184 = vld [vmem:[#allocation5 + $0x8c] sm:$0xf]
    %v185 = vld [vmem:[#allocation5 + $0x90] sm:$0xf]
    %v186 = vld [vmem:[#allocation5 + $0x94] sm:$0xf]
    %v187 = vld [vmem:[#allocation5 + $0x98] sm:$0xf]
    %v188 = vld [vmem:[#allocation5 + $0x9c] sm:$0xf]
    %v189 = vld [vmem:[#allocation5 + $0xa0] sm:$0xf]
    %v190 = vld [vmem:[#allocation5 + $0xa4] sm:$0xf]
    %v191 = vld [vmem:[#allocation5 + $0xa8] sm:$0xf]
    %v192 = vld [vmem:[#allocation5 + $0xac] sm:$0xf]
    %v193 = vld [vmem:[#allocation5 + $0xb0] sm:$0xf]
    %v194 = vld [vmem:[#allocation5 + $0xb4] sm:$0xf]
    %v195 = vld [vmem:[#allocation5 + $0xb8] sm:$0xf]
    %v196 = vld [vmem:[#allocation5 + $0xbc] sm:$0xf]
    %v197 = vld [vmem:[#allocation5 + $0xc0] sm:$0xf]
    %v198 = vld [vmem:[#allocation5 + $0xc4] sm:$0xf]
    %v199 = vld [vmem:[#allocation5 + $0xc8] sm:$0xf]
    %v200 = vld [vmem:[#allocation5 + $0xcc] sm:$0xf]
    %v201 = vld [vmem:[#allocation5 + $0xd0] sm:$0xf]
    %v202 = vld [vmem:[#allocation5 + $0xd4] sm:$0xf]
    %v203 = vld [vmem:[#allocation5 + $0xd8] sm:$0xf]
    %v204 = vld [vmem:[#allocation5 + $0xdc] sm:$0xf]
    %v205 = vld [vmem:[#allocation5 + $0xe0] sm:$0xf]
    %v206 = vld [vmem:[#allocation5 + $0xe4] sm:$0xf]
    %v207 = vld [vmem:[#allocation5 + $0xe8] sm:$0xf]
    %v208 = vld [vmem:[#allocation5 + $0xec] sm:$0xf]
    %v209 = vld [vmem:[#allocation5 + $0xf0] sm:$0xf]
    %v210 = vld [vmem:[#allocation5 + $0xf4] sm:$0xf]
    %v211 = vld [vmem:[#allocation5 + $0xf8] sm:$0xf]
    %v212 = vld [vmem:[#allocation5 + $0xfc] sm:$0xf]
    %v213 = vld [vmem:[#allocation5 + $0x100] sm:$0xf]
    %v214 = vld [vmem:[#allocation5 + $0x104] sm:$0xf]
    %v215 = vld [vmem:[#allocation5 + $0x108] sm:$0xf]
    %v216 = vld [vmem:[#allocation5 + $0x10c] sm:$0xf]
    %v217 = vld [vmem:[#allocation5 + $0x110] sm:$0xf]
    %v218 = vld [vmem:[#allocation5 + $0x114] sm:$0xf]
    %v219 = vld [vmem:[#allocation5 + $0x118] sm:$0xf]
    %v220 = vld [vmem:[#allocation5 + $0x11c] sm:$0xf]
    %v221 = vld [vmem:[#allocation5 + $0x120] sm:$0xf]
    %v222 = vld [vmem:[#allocation5 + $0x124] sm:$0xf]
    %v223 = vld [vmem:[#allocation5 + $0x128] sm:$0xf]
    %v224 = vld [vmem:[#allocation5 + $0x12c] sm:$0xf]
    %v225 = vld [vmem:[#allocation5 + $0x130] sm:$0xf]
    %v226 = vld [vmem:[#allocation5 + $0x134] sm:$0xf]
    %v227 = vld [vmem:[#allocation5 + $0x138] sm:$0xf]
    %v228 = vld [vmem:[#allocation5 + $0x13c] sm:$0xf]
    %v229 = vld [vmem:[#allocation5 + $0x140] sm:$0xf]
    %v230 = vld [vmem:[#allocation5 + $0x144] sm:$0xf]
    %v231 = vld [vmem:[#allocation5 + $0x148] sm:$0xf]
    %v232 = vld [vmem:[#allocation5 + $0x14c] sm:$0xf]
    %v233 = vld [vmem:[#allocation5 + $0x150] sm:$0xf]
    %v234 = vld [vmem:[#allocation5 + $0x154] sm:$0xf]
    %v235 = vld [vmem:[#allocation5 + $0x158] sm:$0xf]
    %v236 = vld [vmem:[#allocation5 + $0x15c] sm:$0xf]
    %v237 = vld [vmem:[#allocation5 + $0x160] sm:$0xf]
    %v238 = vld [vmem:[#allocation5 + $0x164] sm:$0xf]
    %v239 = vld [vmem:[#allocation5 + $0x168] sm:$0xf]
    %v240 = vld [vmem:[#allocation5 + $0x16c] sm:$0xf]
    %v241 = vld [vmem:[#allocation5 + $0x170] sm:$0xf]
    %v242 = vld [vmem:[#allocation5 + $0x174] sm:$0xf]
    %v243 = vld [vmem:[#allocation5 + $0x178] sm:$0xf]
    %v244 = vld [vmem:[#allocation5 + $0x17c] sm:$0xf]
    %v245 = vld [vmem:[#allocation5 + $0x180] sm:$0xf]
    %v246 = vld [vmem:[#allocation5 + $0x184] sm:$0xf]
    %v247 = vld [vmem:[#allocation5 + $0x188] sm:$0xf]
    %v248 = vld [vmem:[#allocation5 + $0x18c] sm:$0xf]
    %v249 = vld [vmem:[#allocation5 + $0x190] sm:$0xf]
    %v250 = vld [vmem:[#allocation5 + $0x194] sm:$0xf]
    %v251 = vld [vmem:[#allocation5 + $0x198] sm:$0xf]
    %v252 = vld [vmem:[#allocation5 + $0x19c] sm:$0xf]
    %v253 = vld [vmem:[#allocation5 + $0x1a0] sm:$0xf]
    %v254 = vld [vmem:[#allocation5 + $0x1a4] sm:$0xf]
    %v255 = vld [vmem:[#allocation5 + $0x1a8] sm:$0xf]
    %v256 = vld [vmem:[#allocation5 + $0x1ac] sm:$0xf]
    %v257 = vld [vmem:[#allocation5 + $0x1b0] sm:$0xf]
    %v258 = vld [vmem:[#allocation5 + $0x1b4] sm:$0xf]
    %v259 = vld [vmem:[#allocation5 + $0x1b8] sm:$0xf]
    %v260 = vld [vmem:[#allocation5 + $0x1bc] sm:$0xf]
    %v261 = vld [vmem:[#allocation5 + $0x1c0] sm:$0xf]
    %v262 = vld [vmem:[#allocation5 + $0x1c4] sm:$0xf]
    %v263 = vld [vmem:[#allocation5 + $0x1c8] sm:$0xf]
    %v264 = vld [vmem:[#allocation5 + $0x1cc] sm:$0xf]
    %v265 = vld [vmem:[#allocation5 + $0x1d0] sm:$0xf]
    %v266 = vld [vmem:[#allocation5 + $0x1d4] sm:$0xf]
    %v267 = vld [vmem:[#allocation5 + $0x1d8] sm:$0xf]
    %v268 = vld [vmem:[#allocation5 + $0x1dc] sm:$0xf]
    %v269 = vld [vmem:[#allocation5 + $0x1e0] sm:$0xf]
    %v270 = vld [vmem:[#allocation5 + $0x1e4] sm:$0xf]
    %v271 = vld [vmem:[#allocation5 + $0x1e8] sm:$0xf]
    %v272 = vld [vmem:[#allocation5 + $0x1ec] sm:$0xf]
    %v273 = vld [vmem:[#allocation5 + $0x1f0] sm:$0xf]
    %v274 = vld [vmem:[#allocation5 + $0x1f4] sm:$0xf]
    %v275 = vld [vmem:[#allocation5 + $0x1f8] sm:$0xf]
    %v276 = vld [vmem:[#allocation5 + $0x1fc] sm:$0xf]
    %v277 = vld [vmem:[#allocation5 + $0x200] sm:$0xf]
    %v278 = vld [vmem:[#allocation5 + $0x204] sm:$0xf]
    %v279 = vld [vmem:[#allocation5 + $0x208] sm:$0xf]
    %v280 = vld [vmem:[#allocation5 + $0x20c] sm:$0xf]
    %v281 = vld [vmem:[#allocation5 + $0x210] sm:$0xf]
    %v282 = vld [vmem:[#allocation5 + $0x214] sm:$0xf]
    %v283 = vld [vmem:[#allocation5 + $0x218] sm:$0xf]
    %v284 = vld [vmem:[#allocation5 + $0x21c] sm:$0xf]
    %v285 = vld [vmem:[#allocation5 + $0x220] sm:$0xf]
    %v286 = vld [vmem:[#allocation5 + $0x224] sm:$0xf]
    %v287 = vld [vmem:[#allocation5 + $0x228] sm:$0xf]
    %v288 = vld [vmem:[#allocation5 + $0x22c] sm:$0xf]
    %v289 = vld [vmem:[#allocation5 + $0x230] sm:$0xf]
    %v290 = vld [vmem:[#allocation5 + $0x234] sm:$0xf]
    %v291 = vld [vmem:[#allocation5 + $0x238] sm:$0xf]
    %v292 = vld [vmem:[#allocation5 + $0x23c] sm:$0xf]
    %v293 = vld [vmem:[#allocation5 + $0x240] sm:$0xf]
    %v294 = vld [vmem:[#allocation5 + $0x244] sm:$0xf]
    %v295 = vld [vmem:[#allocation5 + $0x248] sm:$0xf]
    %v296 = vld [vmem:[#allocation5 + $0x24c] sm:$0xf]
    %v297 = vld [vmem:[#allocation5 + $0x250] sm:$0xf]
    %v298 = vld [vmem:[#allocation5 + $0x254] sm:$0xf]
    %v299 = vld [vmem:[#allocation5 + $0x258] sm:$0xf]
    %v300 = vld [vmem:[#allocation5 + $0x25c] sm:$0xf]
    %v301 = vld [vmem:[#allocation5 + $0x260] sm:$0xf]
    %v302 = vld [vmem:[#allocation5 + $0x264] sm:$0xf]
    %v303 = vld [vmem:[#allocation5 + $0x268] sm:$0xf]
    %v304 = vld [vmem:[#allocation5 + $0x26c] sm:$0xf]
    %v305 = vld [vmem:[#allocation5 + $0x270] sm:$0xf]
    %v306 = vld [vmem:[#allocation5 + $0x274] sm:$0xf]
    %v307 = vld [vmem:[#allocation5 + $0x278] sm:$0xf]
    %v308 = vld [vmem:[#allocation5 + $0x27c] sm:$0xf]
    %v309 = vld [vmem:[#allocation5 + $0x280] sm:$0xf]
    %v310 = vld [vmem:[#allocation5 + $0x284] sm:$0xf]
    %v311 = vld [vmem:[#allocation5 + $0x288] sm:$0xf]
    %v312 = vld [vmem:[#allocation5 + $0x28c] sm:$0xf]
    %v313 = vld [vmem:[#allocation5 + $0x290] sm:$0xf]
    %v314 = vld [vmem:[#allocation5 + $0x294] sm:$0xf]
    %v315 = vld [vmem:[#allocation5 + $0x298] sm:$0xf]
    %v316 = vld [vmem:[#allocation5 + $0x29c] sm:$0xf]
    %v317 = vld [vmem:[#allocation5 + $0x2a0] sm:$0xf]
    %v318 = vld [vmem:[#allocation5 + $0x2a4] sm:$0xf]
    %v319 = vld [vmem:[#allocation5 + $0x2a8] sm:$0xf]
    %v320 = vld [vmem:[#allocation5 + $0x2ac] sm:$0xf]
    %v321 = vld [vmem:[#allocation5 + $0x2b0] sm:$0xf]
    %v322 = vld [vmem:[#allocation5 + $0x2b4] sm:$0xf]
    %v323 = vld [vmem:[#allocation5 + $0x2b8] sm:$0xf]
    %v324 = vld [vmem:[#allocation5 + $0x2bc] sm:$0xf]
    %v325 = vld [vmem:[#allocation5 + $0x2c0] sm:$0xf]
    %v326 = vld [vmem:[#allocation5 + $0x2c4] sm:$0xf]
    %v327 = vld [vmem:[#allocation5 + $0x2c8] sm:$0xf]
    %v328 = vld [vmem:[#allocation5 + $0x2cc] sm:$0xf]
    %v329 = vld [vmem:[#allocation5 + $0x2d0] sm:$0xf]
    %v330 = vld [vmem:[#allocation5 + $0x2d4] sm:$0xf]
    %v331 = vld [vmem:[#allocation5 + $0x2d8] sm:$0xf]
    %v332 = vld [vmem:[#allocation5 + $0x2dc] sm:$0xf]
    %v333 = vld [vmem:[#allocation5 + $0x2e0] sm:$0xf]
    %v334 = vld [vmem:[#allocation5 + $0x2e4] sm:$0xf]
    %v335 = vld [vmem:[#allocation5 + $0x2e8] sm:$0xf]
    %v336 = vld [vmem:[#allocation5 + $0x2ec] sm:$0xf]
    %v337 = vld [vmem:[#allocation5 + $0x2f0] sm:$0xf]
    %v338 = vld [vmem:[#allocation5 + $0x2f4] sm:$0xf]
    %v339 = vld [vmem:[#allocation5 + $0x2f8] sm:$0xf]
    %v340 = vld [vmem:[#allocation5 + $0x2fc] sm:$0xf]
    %v341 = vld [vmem:[#allocation5 + $0x300] sm:$0xf]
    %v342 = vld [vmem:[#allocation5 + $0x304] sm:$0xf]
    %v343 = vld [vmem:[#allocation5 + $0x308] sm:$0xf]
    %v344 = vld [vmem:[#allocation5 + $0x30c] sm:$0xf]
    %v345 = vld [vmem:[#allocation5 + $0x310] sm:$0xf]
    %v346 = vld [vmem:[#allocation5 + $0x314] sm:$0xf]
    %v347 = vld [vmem:[#allocation5 + $0x318] sm:$0xf]
    %v348 = vld [vmem:[#allocation5 + $0x31c] sm:$0xf]
    %v349 = vld [vmem:[#allocation5 + $0x320] sm:$0xf]
    %v350 = vld [vmem:[#allocation5 + $0x324] sm:$0xf]
    %v351 = vld [vmem:[#allocation5 + $0x328] sm:$0xf]
    %v352 = vld [vmem:[#allocation5 + $0x32c] sm:$0xf]
    %v353 = vld [vmem:[#allocation5 + $0x330] sm:$0xf]
    %v354 = vld [vmem:[#allocation5 + $0x334] sm:$0xf]
    %v355 = vld [vmem:[#allocation5 + $0x338] sm:$0xf]
    %v356 = vld [vmem:[#allocation5 + $0x33c] sm:$0xf]
    %v357 = vld [vmem:[#allocation5 + $0x340] sm:$0xf]
    %v358 = vld [vmem:[#allocation5 + $0x344] sm:$0xf]
    %v359 = vld [vmem:[#allocation5 + $0x348] sm:$0xf]
    %v360 = vld [vmem:[#allocation5 + $0x34c] sm:$0xf]
    %v361 = vld [vmem:[#allocation5 + $0x350] sm:$0xf]
    %v362 = vld [vmem:[#allocation5 + $0x354] sm:$0xf]
    %v363 = vld [vmem:[#allocation5 + $0x358] sm:$0xf]
    %v364 = vld [vmem:[#allocation5 + $0x35c] sm:$0xf]
    %v365 = vld [vmem:[#allocation5 + $0x360] sm:$0xf]
    %v366 = vld [vmem:[#allocation5 + $0x364] sm:$0xf]
    %v367 = vld [vmem:[#allocation5 + $0x368] sm:$0xf]
    %v368 = vld [vmem:[#allocation5 + $0x36c] sm:$0xf]
    %v369 = vld [vmem:[#allocation5 + $0x370] sm:$0xf]
    %v370 = vld [vmem:[#allocation5 + $0x374] sm:$0xf]
    %v371 = vld [vmem:[#allocation5 + $0x378] sm:$0xf]
    %v372 = vld [vmem:[#allocation5 + $0x37c] sm:$0xf]
    %v373 = vld [vmem:[#allocation5 + $0x380] sm:$0xf]
    %v374 = vld [vmem:[#allocation5 + $0x384] sm:$0xf]
    %v375 = vld [vmem:[#allocation5 + $0x388] sm:$0xf]
    %v376 = vld [vmem:[#allocation5 + $0x38c] sm:$0xf]
    %v377 = vld [vmem:[#allocation5 + $0x390] sm:$0xf]
    %v378 = vld [vmem:[#allocation5 + $0x394] sm:$0xf]
    %v379 = vld [vmem:[#allocation5 + $0x398] sm:$0xf]
    %v380 = vld [vmem:[#allocation5 + $0x39c] sm:$0xf]
    %v381 = vld [vmem:[#allocation5 + $0x3a0] sm:$0xf]
    %v382 = vld [vmem:[#allocation5 + $0x3a4] sm:$0xf]
    %v383 = vld [vmem:[#allocation5 + $0x3a8] sm:$0xf]
    %v384 = vld [vmem:[#allocation5 + $0x3ac] sm:$0xf]
    %v385 = vld [vmem:[#allocation5 + $0x3b0] sm:$0xf]
    %v386 = vld [vmem:[#allocation5 + $0x3b4] sm:$0xf]
    %v387 = vld [vmem:[#allocation5 + $0x3b8] sm:$0xf]
    %v388 = vld [vmem:[#allocation5 + $0x3bc] sm:$0xf]
    %v389 = vld [vmem:[#allocation5 + $0x3c0] sm:$0xf]
    %v390 = vld [vmem:[#allocation5 + $0x3c4] sm:$0xf]
    %v391 = vld [vmem:[#allocation5 + $0x3c8] sm:$0xf]
    %v392 = vld [vmem:[#allocation5 + $0x3cc] sm:$0xf]
    %v393 = vld [vmem:[#allocation5 + $0x3d0] sm:$0xf]
    %v394 = vld [vmem:[#allocation5 + $0x3d4] sm:$0xf]
    %v395 = vld [vmem:[#allocation5 + $0x3d8] sm:$0xf]
    %v396 = vld [vmem:[#allocation5 + $0x3dc] sm:$0xf]
    %v397 = vld [vmem:[#allocation5 + $0x3e0] sm:$0xf]
    %v398 = vld [vmem:[#allocation5 + $0x3e4] sm:$0xf]
    %v399 = vld [vmem:[#allocation5 + $0x3e8] sm:$0xf]
    %v400 = vld [vmem:[#allocation5 + $0x3ec] sm:$0xf]
    %v401 = vld [vmem:[#allocation5 + $0x3f0] sm:$0xf]
    %v402 = vld [vmem:[#allocation5 + $0x3f4] sm:$0xf]
    %v403 = vld [vmem:[#allocation5 + $0x3f8] sm:$0xf]
    %v404 = vld [vmem:[#allocation5 + $0x3fc] sm:$0xf]
    %v405 = vld [vmem:[#allocation5 + $0x400] sm:$0xf]
    %v406 = vld [vmem:[#allocation5 + $0x404] sm:$0xf]
    %v407 = vld [vmem:[#allocation5 + $0x408] sm:$0xf]
    %v408 = vld [vmem:[#allocation5 + $0x40c] sm:$0xf]
    %v409 = vld [vmem:[#allocation5 + $0x410] sm:$0xf]
    %v410 = vld [vmem:[#allocation5 + $0x414] sm:$0xf]
    %v411 = vld [vmem:[#allocation5 + $0x418] sm:$0xf]
    %v412 = vld [vmem:[#allocation5 + $0x41c] sm:$0xf]
    %v413 = vld [vmem:[#allocation5 + $0x420] sm:$0xf]
    %v414 = vld [vmem:[#allocation5 + $0x424] sm:$0xf]
    %v415 = vld [vmem:[#allocation5 + $0x428] sm:$0xf]
    %v416 = vld [vmem:[#allocation5 + $0x42c] sm:$0xf]
    %v417 = vld [vmem:[#allocation5 + $0x430] sm:$0xf]
    %v418 = vld [vmem:[#allocation5 + $0x434] sm:$0xf]
    %v419 = vld [vmem:[#allocation5 + $0x438] sm:$0xf]
    %v420 = vld [vmem:[#allocation5 + $0x43c] sm:$0xf]
    %v421 = vld [vmem:[#allocation5 + $0x440] sm:$0xf]
    %v422 = vld [vmem:[#allocation5 + $0x444] sm:$0xf]
    %v423 = vld [vmem:[#allocation5 + $0x448] sm:$0xf]
    %v424 = vld [vmem:[#allocation5 + $0x44c] sm:$0xf]
    %v425 = vld [vmem:[#allocation5 + $0x450] sm:$0xf]
    %v426 = vld [vmem:[#allocation5 + $0x454] sm:$0xf]
    %v427 = vld [vmem:[#allocation5 + $0x458] sm:$0xf]
    %v428 = vld [vmem:[#allocation5 + $0x45c] sm:$0xf]
    %v429 = vld [vmem:[#allocation5 + $0x460] sm:$0xf]
    %v430 = vld [vmem:[#allocation5 + $0x464] sm:$0xf]
    %v431 = vld [vmem:[#allocation5 + $0x468] sm:$0xf]
    %v432 = vld [vmem:[#allocation5 + $0x46c] sm:$0xf]
    %v433 = vld [vmem:[#allocation5 + $0x470] sm:$0xf]
    %v434 = vld [vmem:[#allocation5 + $0x474] sm:$0xf]
    %v435 = vld [vmem:[#allocation5 + $0x478] sm:$0xf]
    %v436 = vld [vmem:[#allocation5 + $0x47c] sm:$0xf]
    %v437 = vld [vmem:[#allocation5 + $0x480] sm:$0xf]
    %v438 = vld [vmem:[#allocation5 + $0x484] sm:$0xf]
    %v439 = vld [vmem:[#allocation5 + $0x488] sm:$0xf]
    %v440 = vld [vmem:[#allocation5 + $0x48c] sm:$0xf]
    %v441 = vld [vmem:[#allocation5 + $0x490] sm:$0xf]
    %v442 = vld [vmem:[#allocation5 + $0x494] sm:$0xf]
    %v443 = vld [vmem:[#allocation5 + $0x498] sm:$0xf]
    %v444 = vld [vmem:[#allocation5 + $0x49c] sm:$0xf]
    %v445 = vld [vmem:[#allocation5 + $0x4a0] sm:$0xf]
    %v446 = vld [vmem:[#allocation5 + $0x4a4] sm:$0xf]
    %v447 = vld [vmem:[#allocation5 + $0x4a8] sm:$0xf]
    %v448 = vld [vmem:[#allocation5 + $0x4ac] sm:$0xf]
    %v449 = vld [vmem:[#allocation5 + $0x4b0] sm:$0xf]
    %v450 = vld [vmem:[#allocation5 + $0x4b4] sm:$0xf]
    %v451 = vld [vmem:[#allocation5 + $0x4b8] sm:$0xf]
    %v452 = vld [vmem:[#allocation5 + $0x4bc] sm:$0xf]
    %v453 = vld [vmem:[#allocation5 + $0x4c0] sm:$0xf]
    %v454 = vld [vmem:[#allocation5 + $0x4c4] sm:$0xf]
    %v455 = vld [vmem:[#allocation5 + $0x4c8] sm:$0xf]
    %v456 = vld [vmem:[#allocation5 + $0x4cc] sm:$0xf]
    %v457 = vld [vmem:[#allocation5 + $0x4d0] sm:$0xf]
    %v458 = vld [vmem:[#allocation5 + $0x4d4] sm:$0xf]
    %v459 = vld [vmem:[#allocation5 + $0x4d8] sm:$0xf]
    %v460 = vld [vmem:[#allocation5 + $0x4dc] sm:$0xf]
    %v461 = vld [vmem:[#allocation5 + $0x4e0] sm:$0xf]
    %v462 = vld [vmem:[#allocation5 + $0x4e4] sm:$0xf]
    %v463 = vld [vmem:[#allocation5 + $0x4e8] sm:$0xf]
    %v464 = vld [vmem:[#allocation5 + $0x4ec] sm:$0xf]
    %v465 = vld [vmem:[#allocation5 + $0x4f0] sm:$0xf]
    %v466 = vld [vmem:[#allocation5 + $0x4f4] sm:$0xf]
    %v467 = vld [vmem:[#allocation5 + $0x4f8] sm:$0xf]
    %v468 = vld [vmem:[#allocation5 + $0x4fc] sm:$0xf]
    %v469 = vld [vmem:[#allocation5 + $0x500] sm:$0xf]
    %v470 = vld [vmem:[#allocation5 + $0x504] sm:$0xf]
    %v471 = vld [vmem:[#allocation5 + $0x508] sm:$0xf]
    %v472 = vld [vmem:[#allocation5 + $0x50c] sm:$0xf]
    %v473 = vld [vmem:[#allocation5 + $0x510] sm:$0xf]
    %v474 = vld [vmem:[#allocation5 + $0x514] sm:$0xf]
    %v475 = vld [vmem:[#allocation5 + $0x518] sm:$0xf]
    %v476 = vld [vmem:[#allocation5 + $0x51c] sm:$0xf]
    %v477 = vld [vmem:[#allocation5 + $0x520] sm:$0xf]
    %v478 = vld [vmem:[#allocation5 + $0x524] sm:$0xf]
    %v479 = vld [vmem:[#allocation5 + $0x528] sm:$0xf]
    %v480 = vld [vmem:[#allocation5 + $0x52c] sm:$0xf]
    %v481 = vld [vmem:[#allocation5 + $0x530] sm:$0xf]
    %v482 = vld [vmem:[#allocation5 + $0x534] sm:$0xf]
    %v483 = vld [vmem:[#allocation5 + $0x538] sm:$0xf]
    %v484 = vld [vmem:[#allocation5 + $0x53c] sm:$0xf]
    %v485 = vld [vmem:[#allocation5 + $0x540] sm:$0xf]
    %v486 = vld [vmem:[#allocation5 + $0x544] sm:$0xf]
    %v487 = vld [vmem:[#allocation5 + $0x548] sm:$0xf]
    %v488 = vld [vmem:[#allocation5 + $0x54c] sm:$0xf]
    %v489 = vld [vmem:[#allocation5 + $0x550] sm:$0xf]
    %v490 = vld [vmem:[#allocation5 + $0x554] sm:$0xf]
    %v491 = vld [vmem:[#allocation5 + $0x558] sm:$0xf]
    %v492 = vld [vmem:[#allocation5 + $0x55c] sm:$0xf]
    %v493 = vld [vmem:[#allocation5 + $0x560] sm:$0xf]
    %v494 = vld [vmem:[#allocation5 + $0x564] sm:$0xf]
    %v495 = vld [vmem:[#allocation5 + $0x568] sm:$0xf]
    %v496 = vld [vmem:[#allocation5 + $0x56c] sm:$0xf]
    %v497 = vld [vmem:[#allocation5 + $0x570] sm:$0xf]
    %v498 = vld [vmem:[#allocation5 + $0x574] sm:$0xf]
    %v499 = vld [vmem:[#allocation5 + $0x578] sm:$0xf]
    %v500 = vld [vmem:[#allocation5 + $0x57c] sm:$0xf]
    %v501 = vld [vmem:[#allocation5 + $0x580] sm:$0xf]
    %v502 = vld [vmem:[#allocation5 + $0x584] sm:$0xf]
    %v503 = vld [vmem:[#allocation5 + $0x588] sm:$0xf]
    %v504 = vld [vmem:[#allocation5 + $0x58c] sm:$0xf]
    %v505 = vld [vmem:[#allocation5 + $0x590] sm:$0xf]
    %v506 = vld [vmem:[#allocation5 + $0x594] sm:$0xf]
    %v507 = vld [vmem:[#allocation5 + $0x598] sm:$0xf]
    %v508 = vld [vmem:[#allocation5 + $0x59c] sm:$0xf]
    %v509 = vld [vmem:[#allocation5 + $0x5a0] sm:$0xf]
    %v510 = vld [vmem:[#allocation5 + $0x5a4] sm:$0xf]
    %v511 = vld [vmem:[#allocation5 + $0x5a8] sm:$0xf]
    %v512 = vld [vmem:[#allocation5 + $0x5ac] sm:$0xf]
    %v513 = vld [vmem:[#allocation5 + $0x5b0] sm:$0xf]
    %v514 = vld [vmem:[#allocation5 + $0x5b4] sm:$0xf]
    %v515 = vld [vmem:[#allocation5 + $0x5b8] sm:$0xf]
    %v516 = vld [vmem:[#allocation5 + $0x5bc] sm:$0xf]
    %v517 = vld [vmem:[#allocation5 + $0x5c0] sm:$0xf]
    %v518 = vld [vmem:[#allocation5 + $0x5c4] sm:$0xf]
    %v519 = vld [vmem:[#allocation5 + $0x5c8] sm:$0xf]
    %v520 = vld [vmem:[#allocation5 + $0x5cc] sm:$0xf]
    %v521 = vld [vmem:[#allocation5 + $0x5d0] sm:$0xf]
    %v522 = vld [vmem:[#allocation5 + $0x5d4] sm:$0xf]
    %v523 = vld [vmem:[#allocation5 + $0x5d8] sm:$0xf]
    %v524 = vld [vmem:[#allocation5 + $0x5dc] sm:$0xf]
    %v525 = vld [vmem:[#allocation5 + $0x5e0] sm:$0xf]
    %v526 = vld [vmem:[#allocation5 + $0x5e4] sm:$0xf]
    %v527 = vld [vmem:[#allocation5 + $0x5e8] sm:$0xf]
    %v528 = vld [vmem:[#allocation5 + $0x5ec] sm:$0xf]
    %v529 = vld [vmem:[#allocation5 + $0x5f0] sm:$0xf]
    %v530 = vld [vmem:[#allocation5 + $0x5f4] sm:$0xf]
    %v531 = vld [vmem:[#allocation5 + $0x5f8] sm:$0xf]
    %v532 = vld [vmem:[#allocation5 + $0x5fc] sm:$0xf]
    %v533 = vld [vmem:[#allocation5 + $0x600] sm:$0xf]
    %v534 = vld [vmem:[#allocation5 + $0x604] sm:$0xf]
    %v535 = vld [vmem:[#allocation5 + $0x608] sm:$0xf]
    %v536 = vld [vmem:[#allocation5 + $0x60c] sm:$0xf]
    %v537 = vld [vmem:[#allocation5 + $0x610] sm:$0xf]
    %v538 = vld [vmem:[#allocation5 + $0x614] sm:$0xf]
    %v539 = vld [vmem:[#allocation5 + $0x618] sm:$0xf]
    %v540 = vld [vmem:[#allocation5 + $0x61c] sm:$0xf]
    %v541 = vld [vmem:[#allocation5 + $0x620] sm:$0xf]
    %v542 = vld [vmem:[#allocation5 + $0x624] sm:$0xf]
    %v543 = vld [vmem:[#allocation5 + $0x628] sm:$0xf]
    %v544 = vld [vmem:[#allocation5 + $0x62c] sm:$0xf]
    %v545 = vld [vmem:[#allocation5 + $0x630] sm:$0xf]
    %v546 = vld [vmem:[#allocation5 + $0x634] sm:$0xf]
    %v547 = vld [vmem:[#allocation5 + $0x638] sm:$0xf]
    %v548 = vld [vmem:[#allocation5 + $0x63c] sm:$0xf]
    %v549 = vld [vmem:[#allocation5 + $0x640] sm:$0xf]
    %v550 = vld [vmem:[#allocation5 + $0x644] sm:$0xf]
    %v551 = vld [vmem:[#allocation5 + $0x648] sm:$0xf]
    %v552 = vld [vmem:[#allocation5 + $0x64c] sm:$0xf]
    %v553 = vld [vmem:[#allocation5 + $0x650] sm:$0xf]
    %v554 = vld [vmem:[#allocation5 + $0x654] sm:$0xf]
    %v555 = vld [vmem:[#allocation5 + $0x658] sm:$0xf]
    %v556 = vld [vmem:[#allocation5 + $0x65c] sm:$0xf]
    %v557 = vld [vmem:[#allocation5 + $0x660] sm:$0xf]
    %v558 = vld [vmem:[#allocation5 + $0x664] sm:$0xf]
    %v559 = vld [vmem:[#allocation5 + $0x668] sm:$0xf]
    %v560 = vld [vmem:[#allocation5 + $0x66c] sm:$0xf]
    %v561 = vld [vmem:[#allocation5 + $0x670] sm:$0xf]
    %v562 = vld [vmem:[#allocation5 + $0x674] sm:$0xf]
    %v563 = vld [vmem:[#allocation5 + $0x678] sm:$0xf]
    %v564 = vld [vmem:[#allocation5 + $0x67c] sm:$0xf]
    %v565 = vld [vmem:[#allocation5 + $0x680] sm:$0xf]
    %v566 = vld [vmem:[#allocation5 + $0x684] sm:$0xf]
    %v567 = vld [vmem:[#allocation5 + $0x688] sm:$0xf]
    %v568 = vld [vmem:[#allocation5 + $0x68c] sm:$0xf]
    %v569 = vld [vmem:[#allocation5 + $0x690] sm:$0xf]
    %v570 = vld [vmem:[#allocation5 + $0x694] sm:$0xf]
    %v571 = vld [vmem:[#allocation5 + $0x698] sm:$0xf]
    %v572 = vld [vmem:[#allocation5 + $0x69c] sm:$0xf]
    %v573 = vld [vmem:[#allocation5 + $0x6a0] sm:$0xf]
    %v574 = vld [vmem:[#allocation5 + $0x6a4] sm:$0xf]
    %v575 = vld [vmem:[#allocation5 + $0x6a8] sm:$0xf]
    %v576 = vld [vmem:[#allocation5 + $0x6ac] sm:$0xf]
    %v577 = vld [vmem:[#allocation5 + $0x6b0] sm:$0xf]
    %v578 = vld [vmem:[#allocation5 + $0x6b4] sm:$0xf]
    %v579 = vld [vmem:[#allocation5 + $0x6b8] sm:$0xf]
    %v580 = vld [vmem:[#allocation5 + $0x6bc] sm:$0xf]
    %v581 = vld [vmem:[#allocation5 + $0x6c0] sm:$0xf]
    %v582 = vld [vmem:[#allocation5 + $0x6c4] sm:$0xf]
    %v583 = vld [vmem:[#allocation5 + $0x6c8] sm:$0xf]
    %v584 = vld [vmem:[#allocation5 + $0x6cc] sm:$0xf]
    %v585 = vld [vmem:[#allocation5 + $0x6d0] sm:$0xf]
    %v586 = vld [vmem:[#allocation5 + $0x6d4] sm:$0xf]
    %v587 = vld [vmem:[#allocation5 + $0x6d8] sm:$0xf]
    %v588 = vld [vmem:[#allocation5 + $0x6dc] sm:$0xf]
    %v589 = vld [vmem:[#allocation5 + $0x6e0] sm:$0xf]
    %v590 = vld [vmem:[#allocation5 + $0x6e4] sm:$0xf]
    %v591 = vld [vmem:[#allocation5 + $0x6e8] sm:$0xf]
    %v592 = vld [vmem:[#allocation5 + $0x6ec] sm:$0xf]
    %v593 = vld [vmem:[#allocation5 + $0x6f0] sm:$0xf]
    %v594 = vld [vmem:[#allocation5 + $0x6f4] sm:$0xf]
    %v595 = vld [vmem:[#allocation5 + $0x6f8] sm:$0xf]
    %v596 = vld [vmem:[#allocation5 + $0x6fc] sm:$0xf]
    %v597 = vld [vmem:[#allocation5 + $0x700] sm:$0xf]
    %v598 = vld [vmem:[#allocation5 + $0x704] sm:$0xf]
    %v599 = vld [vmem:[#allocation5 + $0x708] sm:$0xf]
    %v600 = vld [vmem:[#allocation5 + $0x70c] sm:$0xf]
    %v601 = vld [vmem:[#allocation5 + $0x710] sm:$0xf]
    %v602 = vld [vmem:[#allocation5 + $0x714] sm:$0xf]
    %v603 = vld [vmem:[#allocation5 + $0x718] sm:$0xf]
    %v604 = vld [vmem:[#allocation5 + $0x71c] sm:$0xf]
    %v605 = vld [vmem:[#allocation5 + $0x720] sm:$0xf]
    %v606 = vld [vmem:[#allocation5 + $0x724] sm:$0xf]
    %v607 = vld [vmem:[#allocation5 + $0x728] sm:$0xf]
    %v608 = vld [vmem:[#allocation5 + $0x72c] sm:$0xf]
    %v609 = vld [vmem:[#allocation5 + $0x730] sm:$0xf]
    %v610 = vld [vmem:[#allocation5 + $0x734] sm:$0xf]
    %v611 = vld [vmem:[#allocation5 + $0x738] sm:$0xf]
    %v612 = vld [vmem:[#allocation5 + $0x73c] sm:$0xf]
    %v613 = vld [vmem:[#allocation5 + $0x740] sm:$0xf]
    %v614 = vld [vmem:[#allocation5 + $0x744] sm:$0xf]
    %v615 = vld [vmem:[#allocation5 + $0x748] sm:$0xf]
    %v616 = vld [vmem:[#allocation5 + $0x74c] sm:$0xf]
    %v617 = vld [vmem:[#allocation5 + $0x750] sm:$0xf]
    %v618 = vld [vmem:[#allocation5 + $0x754] sm:$0xf]
    %v619 = vld [vmem:[#allocation5 + $0x758] sm:$0xf]
    %v620 = vld [vmem:[#allocation5 + $0x75c] sm:$0xf]
    %v621 = vld [vmem:[#allocation5 + $0x760] sm:$0xf]
    %v622 = vld [vmem:[#allocation5 + $0x764] sm:$0xf]
    %v623 = vld [vmem:[#allocation5 + $0x768] sm:$0xf]
    %v624 = vld [vmem:[#allocation5 + $0x76c] sm:$0xf]
    %v625 = vld [vmem:[#allocation5 + $0x770] sm:$0xf]
    %v626 = vld [vmem:[#allocation5 + $0x774] sm:$0xf]
    %v627 = vld [vmem:[#allocation5 + $0x778] sm:$0xf]
    %v628 = vld [vmem:[#allocation5 + $0x77c] sm:$0xf]
    %v629 = vld [vmem:[#allocation5 + $0x780] sm:$0xf]
    %v630 = vld [vmem:[#allocation5 + $0x784] sm:$0xf]
    %v631 = vld [vmem:[#allocation5 + $0x788] sm:$0xf]
    %v632 = vld [vmem:[#allocation5 + $0x78c] sm:$0xf]
    %v633 = vld [vmem:[#allocation5 + $0x790] sm:$0xf]
    %v634 = vld [vmem:[#allocation5 + $0x794] sm:$0xf]
    %v635 = vld [vmem:[#allocation5 + $0x798] sm:$0xf]
    %v636 = vld [vmem:[#allocation5 + $0x79c] sm:$0xf]
    %v637 = vld [vmem:[#allocation5 + $0x7a0] sm:$0xf]
    %v638 = vld [vmem:[#allocation5 + $0x7a4] sm:$0xf]
    %v639 = vld [vmem:[#allocation5 + $0x7a8] sm:$0xf]
    %v640 = vld [vmem:[#allocation5 + $0x7ac] sm:$0xf]
    %v641 = vld [vmem:[#allocation5 + $0x7b0] sm:$0xf]
    %v642 = vld [vmem:[#allocation5 + $0x7b4] sm:$0xf]
    %v643 = vld [vmem:[#allocation5 + $0x7b8] sm:$0xf]
    %v644 = vld [vmem:[#allocation5 + $0x7bc] sm:$0xf]
    %v645 = vld [vmem:[#allocation5 + $0x7c0] sm:$0xf]
    %v646 = vld [vmem:[#allocation5 + $0x7c4] sm:$0xf]
    %v647 = vld [vmem:[#allocation5 + $0x7c8] sm:$0xf]
    %v648 = vld [vmem:[#allocation5 + $0x7cc] sm:$0xf]
    %v649 = vld [vmem:[#allocation5 + $0x7d0] sm:$0xf]
    %v650 = vld [vmem:[#allocation5 + $0x7d4] sm:$0xf]
    %v651 = vld [vmem:[#allocation5 + $0x7d8] sm:$0xf]
    %v652 = vld [vmem:[#allocation5 + $0x7dc] sm:$0xf]
    %v653 = vld [vmem:[#allocation5 + $0x7e0] sm:$0xf]
    %v654 = vld [vmem:[#allocation5 + $0x7e4] sm:$0xf]
    %v655 = vld [vmem:[#allocation5 + $0x7e8] sm:$0xf]
    %v656 = vld [vmem:[#allocation5 + $0x7ec] sm:$0xf]
    %v657 = vld [vmem:[#allocation5 + $0x7f0] sm:$0xf]
    %v658 = vld [vmem:[#allocation5 + $0x7f4] sm:$0xf]
    %v659 = vld [vmem:[#allocation5 + $0x7f8] sm:$0xf]
    %v660 = vld [vmem:[#allocation5 + $0x7fc] sm:$0xf]
    %v661 = vld [vmem:[#allocation5 + $0x800] sm:$0xf]
    %v662 = vld [vmem:[#allocation5 + $0x804] sm:$0xf]
    %v663 = vld [vmem:[#allocation5 + $0x808] sm:$0xf]
    %v664 = vld [vmem:[#allocation5 + $0x80c] sm:$0xf]
    %v665 = vld [vmem:[#allocation5 + $0x810] sm:$0xf]
    %v666 = vld [vmem:[#allocation5 + $0x814] sm:$0xf]
    %v667 = vld [vmem:[#allocation5 + $0x818] sm:$0xf]
    %v668 = vld [vmem:[#allocation5 + $0x81c] sm:$0xf]
    %v669 = vld [vmem:[#allocation5 + $0x820] sm:$0xf]
    %v670 = vld [vmem:[#allocation5 + $0x824] sm:$0xf]
    %v671 = vld [vmem:[#allocation5 + $0x828] sm:$0xf]
    %v672 = vld [vmem:[#allocation5 + $0x82c] sm:$0xf]
    %v673 = vld [vmem:[#allocation5 + $0x830] sm:$0xf]
    %v674 = vld [vmem:[#allocation5 + $0x834] sm:$0xf]
    %v675 = vld [vmem:[#allocation5 + $0x838] sm:$0xf]
    %v676 = vld [vmem:[#allocation5 + $0x83c] sm:$0xf]
    %v677 = vld [vmem:[#allocation5 + $0x840] sm:$0xf]
    %v678 = vld [vmem:[#allocation5 + $0x844] sm:$0xf]
    %v679 = vld [vmem:[#allocation5 + $0x848] sm:$0xf]
    %v680 = vld [vmem:[#allocation5 + $0x84c] sm:$0xf]
    %v681 = vld [vmem:[#allocation5 + $0x850] sm:$0xf]
    %v682 = vld [vmem:[#allocation5 + $0x854] sm:$0xf]
    %v683 = vld [vmem:[#allocation5 + $0x858] sm:$0xf]
    %v684 = vld [vmem:[#allocation5 + $0x85c] sm:$0xf]
    %v685 = vld [vmem:[#allocation5 + $0x860] sm:$0xf]
    %v686 = vld [vmem:[#allocation5 + $0x864] sm:$0xf]
    %v687 = vld [vmem:[#allocation5 + $0x868] sm:$0xf]
    %v688 = vld [vmem:[#allocation5 + $0x86c] sm:$0xf]
    %v689 = vld [vmem:[#allocation5 + $0x870] sm:$0xf]
    %v690 = vld [vmem:[#allocation5 + $0x874] sm:$0xf]
    %v691 = vld [vmem:[#allocation5 + $0x878] sm:$0xf]
    %v692 = vld [vmem:[#allocation5 + $0x87c] sm:$0xf]
    %v693 = vld [vmem:[#allocation5 + $0x880] sm:$0xf]
    %v694 = vld [vmem:[#allocation5 + $0x884] sm:$0xf]
    %v695 = vld [vmem:[#allocation5 + $0x888] sm:$0xf]
    %v696 = vld [vmem:[#allocation5 + $0x88c] sm:$0xf]
    %v697 = vld [vmem:[#allocation5 + $0x890] sm:$0xf]
    %v698 = vld [vmem:[#allocation5 + $0x894] sm:$0xf]
    %v699 = vld [vmem:[#allocation5 + $0x898] sm:$0xf]
    %v700 = vld [vmem:[#allocation5 + $0x89c] sm:$0xf]
    %v701 = vld [vmem:[#allocation5 + $0x8a0] sm:$0xf]
    %v702 = vld [vmem:[#allocation5 + $0x8a4] sm:$0xf]
    %v703 = vld [vmem:[#allocation5 + $0x8a8] sm:$0xf]
    %v704 = vld [vmem:[#allocation5 + $0x8ac] sm:$0xf]
    %v705 = vld [vmem:[#allocation5 + $0x8b0] sm:$0xf]
    %v706 = vld [vmem:[#allocation5 + $0x8b4] sm:$0xf]
    %v707 = vld [vmem:[#allocation5 + $0x8b8] sm:$0xf]
    %v708 = vld [vmem:[#allocation5 + $0x8bc] sm:$0xf]
    %v709 = vld [vmem:[#allocation5 + $0x8c0] sm:$0xf]
    %v710 = vld [vmem:[#allocation5 + $0x8c4] sm:$0xf]
    %v711 = vld [vmem:[#allocation5 + $0x8c8] sm:$0xf]
    %v712 = vld [vmem:[#allocation5 + $0x8cc] sm:$0xf]
    %v713 = vld [vmem:[#allocation5 + $0x8d0] sm:$0xf]
    %v714 = vld [vmem:[#allocation5 + $0x8d4] sm:$0xf]
    %v715 = vld [vmem:[#allocation5 + $0x8d8] sm:$0xf]
    %v716 = vld [vmem:[#allocation5 + $0x8dc] sm:$0xf]
    %v717 = vld [vmem:[#allocation5 + $0x8e0] sm:$0xf]
    %v718 = vld [vmem:[#allocation5 + $0x8e4] sm:$0xf]
    %v719 = vld [vmem:[#allocation5 + $0x8e8] sm:$0xf]
    %v720 = vld [vmem:[#allocation5 + $0x8ec] sm:$0xf]
    %v721 = vld [vmem:[#allocation5 + $0x8f0] sm:$0xf]
    %v722 = vld [vmem:[#allocation5 + $0x8f4] sm:$0xf]
    %v723 = vld [vmem:[#allocation5 + $0x8f8] sm:$0xf]
    %v724 = vld [vmem:[#allocation5 + $0x8fc] sm:$0xf]
    %v725 = vld [vmem:[#allocation5 + $0x900] sm:$0xf]
    %v726 = vld [vmem:[#allocation5 + $0x904] sm:$0xf]
    %v727 = vld [vmem:[#allocation5 + $0x908] sm:$0xf]
    %v728 = vld [vmem:[#allocation5 + $0x90c] sm:$0xf]
    %v729 = vld [vmem:[#allocation5 + $0x910] sm:$0xf]
    %v730 = vld [vmem:[#allocation5 + $0x914] sm:$0xf]
    %v731 = vld [vmem:[#allocation5 + $0x918] sm:$0xf]
    %v732 = vld [vmem:[#allocation5 + $0x91c] sm:$0xf]
    %v733 = vld [vmem:[#allocation5 + $0x920] sm:$0xf]
    %v734 = vld [vmem:[#allocation5 + $0x924] sm:$0xf]
    %v735 = vld [vmem:[#allocation5 + $0x928] sm:$0xf]
    %v736 = vld [vmem:[#allocation5 + $0x92c] sm:$0xf]
    %v737 = vld [vmem:[#allocation5 + $0x930] sm:$0xf]
    %v738 = vld [vmem:[#allocation5 + $0x934] sm:$0xf]
    %v739 = vld [vmem:[#allocation5 + $0x938] sm:$0xf]
    %v740 = vld [vmem:[#allocation5 + $0x93c] sm:$0xf]
    %v741 = vld [vmem:[#allocation5 + $0x940] sm:$0xf]
    %v742 = vld [vmem:[#allocation5 + $0x944] sm:$0xf]
    %v743 = vld [vmem:[#allocation5 + $0x948] sm:$0xf]
    %v744 = vld [vmem:[#allocation5 + $0x94c] sm:$0xf]
    %v745 = vld [vmem:[#allocation5 + $0x950] sm:$0xf]
    %v746 = vld [vmem:[#allocation5 + $0x954] sm:$0xf]
    %v747 = vld [vmem:[#allocation5 + $0x958] sm:$0xf]
    %v748 = vld [vmem:[#allocation5 + $0x95c] sm:$0xf]
    %v749 = vld [vmem:[#allocation5 + $0x960] sm:$0xf]
    %v750 = vld [vmem:[#allocation5 + $0x964] sm:$0xf]
    %v751 = vld [vmem:[#allocation5 + $0x968] sm:$0xf]
    %v752 = vld [vmem:[#allocation5 + $0x96c] sm:$0xf]
    %v753 = vld [vmem:[#allocation5 + $0x970] sm:$0xf]
    %v754 = vld [vmem:[#allocation5 + $0x974] sm:$0xf]
    %v755 = vld [vmem:[#allocation5 + $0x978] sm:$0xf]
    %v756 = vld [vmem:[#allocation5 + $0x97c] sm:$0xf]
    %v757 = vld [vmem:[#allocation5 + $0x980] sm:$0xf]
    %v758 = vld [vmem:[#allocation5 + $0x984] sm:$0xf]
    %v759 = vld [vmem:[#allocation5 + $0x988] sm:$0xf]
    %v760 = vld [vmem:[#allocation5 + $0x98c] sm:$0xf]
    %v761 = vld [vmem:[#allocation5 + $0x990] sm:$0xf]
    %v762 = vld [vmem:[#allocation5 + $0x994] sm:$0xf]
    %v763 = vld [vmem:[#allocation5 + $0x998] sm:$0xf]
    %v764 = vld [vmem:[#allocation5 + $0x99c] sm:$0xf]
    %v765 = vld [vmem:[#allocation5 + $0x9a0] sm:$0xf]
    %v766 = vld [vmem:[#allocation5 + $0x9a4] sm:$0xf]
    %v767 = vld [vmem:[#allocation5 + $0x9a8] sm:$0xf]
    %v768 = vld [vmem:[#allocation5 + $0x9ac] sm:$0xf]
    %v769 = vld [vmem:[#allocation5 + $0x9b0] sm:$0xf]
    %v770 = vld [vmem:[#allocation5 + $0x9b4] sm:$0xf]
    %v771 = vld [vmem:[#allocation5 + $0x9b8] sm:$0xf]
    %v772 = vld [vmem:[#allocation5 + $0x9bc] sm:$0xf]
    %v773 = vld [vmem:[#allocation5 + $0x9c0] sm:$0xf]
    %v774 = vld [vmem:[#allocation5 + $0x9c4] sm:$0xf]
    %v775 = vld [vmem:[#allocation5 + $0x9c8] sm:$0xf]
    %v776 = vld [vmem:[#allocation5 + $0x9cc] sm:$0xf]
    %v777 = vld [vmem:[#allocation5 + $0x9d0] sm:$0xf]
    %v778 = vld [vmem:[#allocation5 + $0x9d4] sm:$0xf]
    %v779 = vld [vmem:[#allocation5 + $0x9d8] sm:$0xf]
    %v780 = vld [vmem:[#allocation5 + $0x9dc] sm:$0xf]
    %v781 = vld [vmem:[#allocation5 + $0x9e0] sm:$0xf]
    %v782 = vld [vmem:[#allocation5 + $0x9e4] sm:$0xf]
    %v783 = vld [vmem:[#allocation5 + $0x9e8] sm:$0xf]
    %v784 = vld [vmem:[#allocation5 + $0x9ec] sm:$0xf]
    %v785 = vld [vmem:[#allocation5 + $0x9f0] sm:$0xf]
    %v786 = vld [vmem:[#allocation5 + $0x9f4] sm:$0xf]
    %v787 = vld [vmem:[#allocation5 + $0x9f8] sm:$0xf]
    %v788 = vld [vmem:[#allocation5 + $0x9fc] sm:$0xf]
    %v789 = vld [vmem:[#allocation5 + $0xa00] sm:$0xf]
    %v790 = vld [vmem:[#allocation5 + $0xa04] sm:$0xf]
    %v791 = vld [vmem:[#allocation5 + $0xa08] sm:$0xf]
    %v792 = vld [vmem:[#allocation5 + $0xa0c] sm:$0xf]
    %v793 = vld [vmem:[#allocation5 + $0xa10] sm:$0xf]
    %v794 = vld [vmem:[#allocation5 + $0xa14] sm:$0xf]
    %v795 = vld [vmem:[#allocation5 + $0xa18] sm:$0xf]
    %v796 = vld [vmem:[#allocation5 + $0xa1c] sm:$0xf]
    %v797 = vld [vmem:[#allocation5 + $0xa20] sm:$0xf]
    %v798 = vld [vmem:[#allocation5 + $0xa24] sm:$0xf]
    %v799 = vld [vmem:[#allocation5 + $0xa28] sm:$0xf]
    %v800 = vld [vmem:[#allocation5 + $0xa2c] sm:$0xf]
    %v801 = vld [vmem:[#allocation5 + $0xa30] sm:$0xf]
    %v802 = vld [vmem:[#allocation5 + $0xa34] sm:$0xf]
    %v803 = vld [vmem:[#allocation5 + $0xa38] sm:$0xf]
    %v804 = vld [vmem:[#allocation5 + $0xa3c] sm:$0xf]
    %v805 = vld [vmem:[#allocation5 + $0xa40] sm:$0xf]
    %v806 = vld [vmem:[#allocation5 + $0xa44] sm:$0xf]
    %v807 = vld [vmem:[#allocation5 + $0xa48] sm:$0xf]
    %v808 = vld [vmem:[#allocation5 + $0xa4c] sm:$0xf]
    %v809 = vld [vmem:[#allocation5 + $0xa50] sm:$0xf]
    %v810 = vld [vmem:[#allocation5 + $0xa54] sm:$0xf]
    %v811 = vld [vmem:[#allocation5 + $0xa58] sm:$0xf]
    %v812 = vld [vmem:[#allocation5 + $0xa5c] sm:$0xf]
    %v813 = vld [vmem:[#allocation5 + $0xa60] sm:$0xf]
    %v814 = vld [vmem:[#allocation5 + $0xa64] sm:$0xf]
    %v815 = vld [vmem:[#allocation5 + $0xa68] sm:$0xf]
    %v816 = vld [vmem:[#allocation5 + $0xa6c] sm:$0xf]
    %v817 = vld [vmem:[#allocation5 + $0xa70] sm:$0xf]
    %v818 = vld [vmem:[#allocation5 + $0xa74] sm:$0xf]
    %v819 = vld [vmem:[#allocation5 + $0xa78] sm:$0xf]
    %v820 = vld [vmem:[#allocation5 + $0xa7c] sm:$0xf]
    %v821 = vld [vmem:[#allocation5 + $0xa80] sm:$0xf]
    %v822 = vld [vmem:[#allocation5 + $0xa84] sm:$0xf]
    %v823 = vld [vmem:[#allocation5 + $0xa88] sm:$0xf]
    %v824 = vld [vmem:[#allocation5 + $0xa8c] sm:$0xf]
    %v825 = vld [vmem:[#allocation5 + $0xa90] sm:$0xf]
    %v826 = vld [vmem:[#allocation5 + $0xa94] sm:$0xf]
    %v827 = vld [vmem:[#allocation5 + $0xa98] sm:$0xf]
    %v828 = vld [vmem:[#allocation5 + $0xa9c] sm:$0xf]
    %v829 = vld [vmem:[#allocation5 + $0xaa0] sm:$0xf]
    %v830 = vld [vmem:[#allocation5 + $0xaa4] sm:$0xf]
    %v831 = vld [vmem:[#allocation5 + $0xaa8] sm:$0xf]
    %v832 = vld [vmem:[#allocation5 + $0xaac] sm:$0xf]
    %v833 = vld [vmem:[#allocation5 + $0xab0] sm:$0xf]
    %v834 = vld [vmem:[#allocation5 + $0xab4] sm:$0xf]
    %v835 = vld [vmem:[#allocation5 + $0xab8] sm:$0xf]
    %v836 = vld [vmem:[#allocation5 + $0xabc] sm:$0xf]
    %v837 = vld [vmem:[#allocation5 + $0xac0] sm:$0xf]
    %v838 = vld [vmem:[#allocation5 + $0xac4] sm:$0xf]
    %v839 = vld [vmem:[#allocation5 + $0xac8] sm:$0xf]
    %v840 = vld [vmem:[#allocation5 + $0xacc] sm:$0xf]
    %v841 = vld [vmem:[#allocation5 + $0xad0] sm:$0xf]
    %v842 = vld [vmem:[#allocation5 + $0xad4] sm:$0xf]
    %v843 = vld [vmem:[#allocation5 + $0xad8] sm:$0xf]
    %v844 = vld [vmem:[#allocation5 + $0xadc] sm:$0xf]
    %v845 = vld [vmem:[#allocation5 + $0xae0] sm:$0xf]
    %v846 = vld [vmem:[#allocation5 + $0xae4] sm:$0xf]
    %v847 = vld [vmem:[#allocation5 + $0xae8] sm:$0xf]
    %v848 = vld [vmem:[#allocation5 + $0xaec] sm:$0xf]
    %v849 = vld [vmem:[#allocation5 + $0xaf0] sm:$0xf]
    %v850 = vld [vmem:[#allocation5 + $0xaf4] sm:$0xf]
    %v851 = vld [vmem:[#allocation5 + $0xaf8] sm:$0xf]
    %v852 = vld [vmem:[#allocation5 + $0xafc] sm:$0xf]
    %v853 = vld [vmem:[#allocation5 + $0xb00] sm:$0xf]
    %v854 = vld [vmem:[#allocation5 + $0xb04] sm:$0xf]
    %v855 = vld [vmem:[#allocation5 + $0xb08] sm:$0xf]
    %v856 = vld [vmem:[#allocation5 + $0xb0c] sm:$0xf]
    %v857 = vld [vmem:[#allocation5 + $0xb10] sm:$0xf]
    %v858 = vld [vmem:[#allocation5 + $0xb14] sm:$0xf]
    %v859 = vld [vmem:[#allocation5 + $0xb18] sm:$0xf]
    %v860 = vld [vmem:[#allocation5 + $0xb1c] sm:$0xf]
    %v861 = vld [vmem:[#allocation5 + $0xb20] sm:$0xf]
    %v862 = vld [vmem:[#allocation5 + $0xb24] sm:$0xf]
    %v863 = vld [vmem:[#allocation5 + $0xb28] sm:$0xf]
    %v864 = vld [vmem:[#allocation5 + $0xb2c] sm:$0xf]
    %v865 = vld [vmem:[#allocation5 + $0xb30] sm:$0xf]
    %v866 = vld [vmem:[#allocation5 + $0xb34] sm:$0xf]
    %v867 = vld [vmem:[#allocation5 + $0xb38] sm:$0xf]
    %v868 = vld [vmem:[#allocation5 + $0xb3c] sm:$0xf]
    %v869 = vld [vmem:[#allocation5 + $0xb40] sm:$0xf]
    %v870 = vld [vmem:[#allocation5 + $0xb44] sm:$0xf]
    %v871 = vld [vmem:[#allocation5 + $0xb48] sm:$0xf]
    %v872 = vld [vmem:[#allocation5 + $0xb4c] sm:$0xf]
    %v873 = vld [vmem:[#allocation5 + $0xb50] sm:$0xf]
    %v874 = vld [vmem:[#allocation5 + $0xb54] sm:$0xf]
    %v875 = vld [vmem:[#allocation5 + $0xb58] sm:$0xf]
    %v876 = vld [vmem:[#allocation5 + $0xb5c] sm:$0xf]
    %v877 = vld [vmem:[#allocation5 + $0xb60] sm:$0xf]
    %v878 = vld [vmem:[#allocation5 + $0xb64] sm:$0xf]
    %v879 = vld [vmem:[#allocation5 + $0xb68] sm:$0xf]
    %v880 = vld [vmem:[#allocation5 + $0xb6c] sm:$0xf]
    %v881 = vld [vmem:[#allocation5 + $0xb70] sm:$0xf]
    %v882 = vld [vmem:[#allocation5 + $0xb74] sm:$0xf]
    %v883 = vld [vmem:[#allocation5 + $0xb78] sm:$0xf]
    %v884 = vld [vmem:[#allocation5 + $0xb7c] sm:$0xf]
    %v885 = vld [vmem:[#allocation5 + $0xb80] sm:$0xf]
    %v886 = vld [vmem:[#allocation5 + $0xb84] sm:$0xf]
    %v887 = vld [vmem:[#allocation5 + $0xb88] sm:$0xf]
    %v888 = vld [vmem:[#allocation5 + $0xb8c] sm:$0xf]
    %v889 = vld [vmem:[#allocation5 + $0xb90] sm:$0xf]
    %v890 = vld [vmem:[#allocation5 + $0xb94] sm:$0xf]
    %v891 = vld [vmem:[#allocation5 + $0xb98] sm:$0xf]
    %v892 = vld [vmem:[#allocation5 + $0xb9c] sm:$0xf]
    %v893 = vld [vmem:[#allocation5 + $0xba0] sm:$0xf]
    %v894 = vld [vmem:[#allocation5 + $0xba4] sm:$0xf]
    %v895 = vld [vmem:[#allocation5 + $0xba8] sm:$0xf]
    %v896 = vld [vmem:[#allocation5 + $0xbac] sm:$0xf]
    %v897 = vld [vmem:[#allocation5 + $0xbb0] sm:$0xf]
    %v898 = vld [vmem:[#allocation5 + $0xbb4] sm:$0xf]
    %v899 = vld [vmem:[#allocation5 + $0xbb8] sm:$0xf]
    %v900 = vld [vmem:[#allocation5 + $0xbbc] sm:$0xf]
    %v901 = vld [vmem:[#allocation5 + $0xbc0] sm:$0xf]
    %v902 = vld [vmem:[#allocation5 + $0xbc4] sm:$0xf]
    %v903 = vld [vmem:[#allocation5 + $0xbc8] sm:$0xf]
    %v904 = vld [vmem:[#allocation5 + $0xbcc] sm:$0xf]
    %v905 = vld [vmem:[#allocation5 + $0xbd0] sm:$0xf]
    %v906 = vld [vmem:[#allocation5 + $0xbd4] sm:$0xf]
    %v907 = vld [vmem:[#allocation5 + $0xbd8] sm:$0xf]
    %v908 = vld [vmem:[#allocation5 + $0xbdc] sm:$0xf]
    %v909 = vld [vmem:[#allocation5 + $0xbe0] sm:$0xf]
    %v910 = vld [vmem:[#allocation5 + $0xbe4] sm:$0xf]
    %v911 = vld [vmem:[#allocation5 + $0xbe8] sm:$0xf]
    %v912 = vld [vmem:[#allocation5 + $0xbec] sm:$0xf]
    %v913 = vld [vmem:[#allocation5 + $0xbf0] sm:$0xf]
    %v914 = vld [vmem:[#allocation5 + $0xbf4] sm:$0xf]
    %v915 = vld [vmem:[#allocation5 + $0xbf8] sm:$0xf]
    %v916 = vld [vmem:[#allocation5 + $0xbfc] sm:$0xf]
    %v917 = vld [vmem:[#allocation7] sm:$0x1]
    %v919 = vlaneseq
    %v920 = vshrl.u32 %v919, 7
    %v921 = vsub.s32 0, %v920
    %v922 = vrot.slane %v917, %v921
    %v1692 = vunpack.c.l.b16 %v149
    %v1693 = vunpack.c.l.b16 %v150
    %v1694 = vunpack.c.l.b16 %v151
    %v1695 = vunpack.c.l.b16 %v152
    %v1696 = vunpack.c.l.b16 %v153
    %v1697 = vunpack.c.l.b16 %v154
    %v1698 = vunpack.c.l.b16 %v155
    %v1699 = vunpack.c.l.b16 %v156
    %v1700 = vunpack.c.l.b16 %v157
    %v1701 = vunpack.c.l.b16 %v158
    %v1702 = vunpack.c.l.b16 %v159
    %v1703 = vunpack.c.l.b16 %v160
    %v1704 = vunpack.c.l.b16 %v161
    %v1705 = vunpack.c.l.b16 %v162
    %v1706 = vunpack.c.l.b16 %v163
    %v1707 = vunpack.c.l.b16 %v164
    %v1708 = vunpack.c.l.b16 %v165
    %v1709 = vunpack.c.l.b16 %v166
    %v1710 = vunpack.c.l.b16 %v167
    %v1711 = vunpack.c.l.b16 %v168
    %v1712 = vunpack.c.l.b16 %v169
    %v1713 = vunpack.c.l.b16 %v170
    %v1714 = vunpack.c.l.b16 %v171
    %v1715 = vunpack.c.l.b16 %v172
    %v1716 = vunpack.c.l.b16 %v173
    %v1717 = vunpack.c.l.b16 %v174
    %v1718 = vunpack.c.l.b16 %v175
    %v1719 = vunpack.c.l.b16 %v176
    %v1720 = vunpack.c.l.b16 %v177
    %v1721 = vunpack.c.l.b16 %v178
    %v1722 = vunpack.c.l.b16 %v179
    %v1723 = vunpack.c.l.b16 %v180
    %v1724 = vunpack.c.l.b16 %v181
    %v1725 = vunpack.c.l.b16 %v182
    %v1726 = vunpack.c.l.b16 %v183
    %v1727 = vunpack.c.l.b16 %v184
    %v1728 = vunpack.c.l.b16 %v185
    %v1729 = vunpack.c.l.b16 %v186
    %v1730 = vunpack.c.l.b16 %v187
    %v1731 = vunpack.c.l.b16 %v188
    %v1732 = vunpack.c.l.b16 %v189
    %v1733 = vunpack.c.l.b16 %v190
    %v1734 = vunpack.c.l.b16 %v191
    %v1735 = vunpack.c.l.b16 %v192
    %v1736 = vunpack.c.l.b16 %v193
    %v1737 = vunpack.c.l.b16 %v194
    %v1738 = vunpack.c.l.b16 %v195
    %v1739 = vunpack.c.l.b16 %v196
    %v1740 = vunpack.c.l.b16 %v197
    %v1741 = vunpack.c.l.b16 %v198
    %v1742 = vunpack.c.l.b16 %v199
    %v1743 = vunpack.c.l.b16 %v200
    %v1744 = vunpack.c.l.b16 %v201
    %v1745 = vunpack.c.l.b16 %v202
    %v1746 = vunpack.c.l.b16 %v203
    %v1747 = vunpack.c.l.b16 %v204
    %v1748 = vunpack.c.l.b16 %v205
    %v1749 = vunpack.c.l.b16 %v206
    %v1750 = vunpack.c.l.b16 %v207
    %v1751 = vunpack.c.l.b16 %v208
    %v1752 = vunpack.c.l.b16 %v209
    %v1753 = vunpack.c.l.b16 %v210
    %v1754 = vunpack.c.l.b16 %v211
    %v1755 = vunpack.c.l.b16 %v212
    %v1756 = vunpack.c.l.b16 %v213
    %v1757 = vunpack.c.l.b16 %v214
    %v1758 = vunpack.c.l.b16 %v215
    %v1759 = vunpack.c.l.b16 %v216
    %v1760 = vunpack.c.l.b16 %v217
    %v1761 = vunpack.c.l.b16 %v218
    %v1762 = vunpack.c.l.b16 %v219
    %v1763 = vunpack.c.l.b16 %v220
    %v1764 = vunpack.c.l.b16 %v221
    %v1765 = vunpack.c.l.b16 %v222
    %v1766 = vunpack.c.l.b16 %v223
    %v1767 = vunpack.c.l.b16 %v224
    %v1768 = vunpack.c.l.b16 %v225
    %v1769 = vunpack.c.l.b16 %v226
    %v1770 = vunpack.c.l.b16 %v227
    %v1771 = vunpack.c.l.b16 %v228
    %v1772 = vunpack.c.l.b16 %v229
    %v1773 = vunpack.c.l.b16 %v230
    %v1774 = vunpack.c.l.b16 %v231
    %v1775 = vunpack.c.l.b16 %v232
    %v1776 = vunpack.c.l.b16 %v233
    %v1777 = vunpack.c.l.b16 %v234
    %v1778 = vunpack.c.l.b16 %v235
    %v1779 = vunpack.c.l.b16 %v236
    %v1780 = vunpack.c.l.b16 %v237
    %v1781 = vunpack.c.l.b16 %v238
    %v1782 = vunpack.c.l.b16 %v239
    %v1783 = vunpack.c.l.b16 %v240
    %v1784 = vunpack.c.l.b16 %v241
    %v1785 = vunpack.c.l.b16 %v242
    %v1786 = vunpack.c.l.b16 %v243
    %v1787 = vunpack.c.l.b16 %v244
    %v1788 = vunpack.c.l.b16 %v245
    %v1789 = vunpack.c.l.b16 %v246
    %v1790 = vunpack.c.l.b16 %v247
    %v1791 = vunpack.c.l.b16 %v248
    %v1792 = vunpack.c.l.b16 %v249
    %v1793 = vunpack.c.l.b16 %v250
    %v1794 = vunpack.c.l.b16 %v251
    %v1795 = vunpack.c.l.b16 %v252
    %v1796 = vunpack.c.l.b16 %v253
    %v1797 = vunpack.c.l.b16 %v254
    %v1798 = vunpack.c.l.b16 %v255
    %v1799 = vunpack.c.l.b16 %v256
    %v1800 = vunpack.c.l.b16 %v257
    %v1801 = vunpack.c.l.b16 %v258
    %v1802 = vunpack.c.l.b16 %v259
    %v1803 = vunpack.c.l.b16 %v260
    %v1804 = vunpack.c.l.b16 %v261
    %v1805 = vunpack.c.l.b16 %v262
    %v1806 = vunpack.c.l.b16 %v263
    %v1807 = vunpack.c.l.b16 %v264
    %v1808 = vunpack.c.l.b16 %v265
    %v1809 = vunpack.c.l.b16 %v266
    %v1810 = vunpack.c.l.b16 %v267
    %v1811 = vunpack.c.l.b16 %v268
    %v1812 = vunpack.c.l.b16 %v269
    %v1813 = vunpack.c.l.b16 %v270
    %v1814 = vunpack.c.l.b16 %v271
    %v1815 = vunpack.c.l.b16 %v272
    %v1816 = vunpack.c.l.b16 %v273
    %v1817 = vunpack.c.l.b16 %v274
    %v1818 = vunpack.c.l.b16 %v275
    %v1819 = vunpack.c.l.b16 %v276
    %v1820 = vunpack.c.l.b16 %v277
    %v1821 = vunpack.c.l.b16 %v278
    %v1822 = vunpack.c.l.b16 %v279
    %v1823 = vunpack.c.l.b16 %v280
    %v1824 = vunpack.c.l.b16 %v281
    %v1825 = vunpack.c.l.b16 %v282
    %v1826 = vunpack.c.l.b16 %v283
    %v1827 = vunpack.c.l.b16 %v284
    %v1828 = vunpack.c.l.b16 %v285
    %v1829 = vunpack.c.l.b16 %v286
    %v1830 = vunpack.c.l.b16 %v287
    %v1831 = vunpack.c.l.b16 %v288
    %v1832 = vunpack.c.l.b16 %v289
    %v1833 = vunpack.c.l.b16 %v290
    %v1834 = vunpack.c.l.b16 %v291
    %v1835 = vunpack.c.l.b16 %v292
    %v1836 = vunpack.c.l.b16 %v293
    %v1837 = vunpack.c.l.b16 %v294
    %v1838 = vunpack.c.l.b16 %v295
    %v1839 = vunpack.c.l.b16 %v296
    %v1840 = vunpack.c.l.b16 %v297
    %v1841 = vunpack.c.l.b16 %v298
    %v1842 = vunpack.c.l.b16 %v299
    %v1843 = vunpack.c.l.b16 %v300
    %v1844 = vunpack.c.l.b16 %v301
    %v1845 = vunpack.c.l.b16 %v302
    %v1846 = vunpack.c.l.b16 %v303
    %v1847 = vunpack.c.l.b16 %v304
    %v1848 = vunpack.c.l.b16 %v305
    %v1849 = vunpack.c.l.b16 %v306
    %v1850 = vunpack.c.l.b16 %v307
    %v1851 = vunpack.c.l.b16 %v308
    %v1852 = vunpack.c.l.b16 %v309
    %v1853 = vunpack.c.l.b16 %v310
    %v1854 = vunpack.c.l.b16 %v311
    %v1855 = vunpack.c.l.b16 %v312
    %v1856 = vunpack.c.l.b16 %v313
    %v1857 = vunpack.c.l.b16 %v314
    %v1858 = vunpack.c.l.b16 %v315
    %v1859 = vunpack.c.l.b16 %v316
    %v1860 = vunpack.c.l.b16 %v317
    %v1861 = vunpack.c.l.b16 %v318
    %v1862 = vunpack.c.l.b16 %v319
    %v1863 = vunpack.c.l.b16 %v320
    %v1864 = vunpack.c.l.b16 %v321
    %v1865 = vunpack.c.l.b16 %v322
    %v1866 = vunpack.c.l.b16 %v323
    %v1867 = vunpack.c.l.b16 %v324
    %v1868 = vunpack.c.l.b16 %v325
    %v1869 = vunpack.c.l.b16 %v326
    %v1870 = vunpack.c.l.b16 %v327
    %v1871 = vunpack.c.l.b16 %v328
    %v1872 = vunpack.c.l.b16 %v329
    %v1873 = vunpack.c.l.b16 %v330
    %v1874 = vunpack.c.l.b16 %v331
    %v1875 = vunpack.c.l.b16 %v332
    %v1876 = vunpack.c.l.b16 %v333
    %v1877 = vunpack.c.l.b16 %v334
    %v1878 = vunpack.c.l.b16 %v335
    %v1879 = vunpack.c.l.b16 %v336
    %v1880 = vunpack.c.l.b16 %v337
    %v1881 = vunpack.c.l.b16 %v338
    %v1882 = vunpack.c.l.b16 %v339
    %v1883 = vunpack.c.l.b16 %v340
    %v1884 = vunpack.c.l.b16 %v341
    %v1885 = vunpack.c.l.b16 %v342
    %v1886 = vunpack.c.l.b16 %v343
    %v1887 = vunpack.c.l.b16 %v344
    %v1888 = vunpack.c.l.b16 %v345
    %v1889 = vunpack.c.l.b16 %v346
    %v1890 = vunpack.c.l.b16 %v347
    %v1891 = vunpack.c.l.b16 %v348
    %v1892 = vunpack.c.l.b16 %v349
    %v1893 = vunpack.c.l.b16 %v350
    %v1894 = vunpack.c.l.b16 %v351
    %v1895 = vunpack.c.l.b16 %v352
    %v1896 = vunpack.c.l.b16 %v353
    %v1897 = vunpack.c.l.b16 %v354
    %v1898 = vunpack.c.l.b16 %v355
    %v1899 = vunpack.c.l.b16 %v356
    %v1900 = vunpack.c.l.b16 %v357
    %v1901 = vunpack.c.l.b16 %v358
    %v1902 = vunpack.c.l.b16 %v359
    %v1903 = vunpack.c.l.b16 %v360
    %v1904 = vunpack.c.l.b16 %v361
    %v1905 = vunpack.c.l.b16 %v362
    %v1906 = vunpack.c.l.b16 %v363
    %v1907 = vunpack.c.l.b16 %v364
    %v1908 = vunpack.c.l.b16 %v365
    %v1909 = vunpack.c.l.b16 %v366
    %v1910 = vunpack.c.l.b16 %v367
    %v1911 = vunpack.c.l.b16 %v368
    %v1912 = vunpack.c.l.b16 %v369
    %v1913 = vunpack.c.l.b16 %v370
    %v1914 = vunpack.c.l.b16 %v371
    %v1915 = vunpack.c.l.b16 %v372
    %v1916 = vunpack.c.l.b16 %v373
    %v1917 = vunpack.c.l.b16 %v374
    %v1918 = vunpack.c.l.b16 %v375
    %v1919 = vunpack.c.l.b16 %v376
    %v1920 = vunpack.c.l.b16 %v377
    %v1921 = vunpack.c.l.b16 %v378
    %v1922 = vunpack.c.l.b16 %v379
    %v1923 = vunpack.c.l.b16 %v380
    %v1924 = vunpack.c.l.b16 %v381
    %v1925 = vunpack.c.l.b16 %v382
    %v1926 = vunpack.c.l.b16 %v383
    %v1927 = vunpack.c.l.b16 %v384
    %v1928 = vunpack.c.l.b16 %v385
    %v1929 = vunpack.c.l.b16 %v386
    %v1930 = vunpack.c.l.b16 %v387
    %v1931 = vunpack.c.l.b16 %v388
    %v1932 = vunpack.c.l.b16 %v389
    %v1933 = vunpack.c.l.b16 %v390
    %v1934 = vunpack.c.l.b16 %v391
    %v1935 = vunpack.c.l.b16 %v392
    %v1936 = vunpack.c.l.b16 %v393
    %v1937 = vunpack.c.l.b16 %v394
    %v1938 = vunpack.c.l.b16 %v395
    %v1939 = vunpack.c.l.b16 %v396
    %v1940 = vunpack.c.l.b16 %v397
    %v1941 = vunpack.c.l.b16 %v398
    %v1942 = vunpack.c.l.b16 %v399
    %v1943 = vunpack.c.l.b16 %v400
    %v1944 = vunpack.c.l.b16 %v401
    %v1945 = vunpack.c.l.b16 %v402
    %v1946 = vunpack.c.l.b16 %v403
    %v1947 = vunpack.c.l.b16 %v404
    %v1948 = vunpack.c.l.b16 %v405
    %v1949 = vunpack.c.l.b16 %v406
    %v1950 = vunpack.c.l.b16 %v407
    %v1951 = vunpack.c.l.b16 %v408
    %v1952 = vunpack.c.l.b16 %v409
    %v1953 = vunpack.c.l.b16 %v410
    %v1954 = vunpack.c.l.b16 %v411
    %v1955 = vunpack.c.l.b16 %v412
    %v1956 = vunpack.c.l.b16 %v413
    %v1957 = vunpack.c.l.b16 %v414
    %v1958 = vunpack.c.l.b16 %v415
    %v1959 = vunpack.c.l.b16 %v416
    %v1960 = vunpack.c.l.b16 %v417
    %v1961 = vunpack.c.l.b16 %v418
    %v1962 = vunpack.c.l.b16 %v419
    %v1963 = vunpack.c.l.b16 %v420
    %v1964 = vunpack.c.l.b16 %v421
    %v1965 = vunpack.c.l.b16 %v422
    %v1966 = vunpack.c.l.b16 %v423
    %v1967 = vunpack.c.l.b16 %v424
    %v1968 = vunpack.c.l.b16 %v425
    %v1969 = vunpack.c.l.b16 %v426
    %v1970 = vunpack.c.l.b16 %v427
    %v1971 = vunpack.c.l.b16 %v428
    %v1972 = vunpack.c.l.b16 %v429
    %v1973 = vunpack.c.l.b16 %v430
    %v1974 = vunpack.c.l.b16 %v431
    %v1975 = vunpack.c.l.b16 %v432
    %v1976 = vunpack.c.l.b16 %v433
    %v1977 = vunpack.c.l.b16 %v434
    %v1978 = vunpack.c.l.b16 %v435
    %v1979 = vunpack.c.l.b16 %v436
    %v1980 = vunpack.c.l.b16 %v437
    %v1981 = vunpack.c.l.b16 %v438
    %v1982 = vunpack.c.l.b16 %v439
    %v1983 = vunpack.c.l.b16 %v440
    %v1984 = vunpack.c.l.b16 %v441
    %v1985 = vunpack.c.l.b16 %v442
    %v1986 = vunpack.c.l.b16 %v443
    %v1987 = vunpack.c.l.b16 %v444
    %v1988 = vunpack.c.l.b16 %v445
    %v1989 = vunpack.c.l.b16 %v446
    %v1990 = vunpack.c.l.b16 %v447
    %v1991 = vunpack.c.l.b16 %v448
    %v1992 = vunpack.c.l.b16 %v449
    %v1993 = vunpack.c.l.b16 %v450
    %v1994 = vunpack.c.l.b16 %v451
    %v1995 = vunpack.c.l.b16 %v452
    %v1996 = vunpack.c.l.b16 %v453
    %v1997 = vunpack.c.l.b16 %v454
    %v1998 = vunpack.c.l.b16 %v455
    %v1999 = vunpack.c.l.b16 %v456
    %v2000 = vunpack.c.l.b16 %v457
    %v2001 = vunpack.c.l.b16 %v458
    %v2002 = vunpack.c.l.b16 %v459
    %v2003 = vunpack.c.l.b16 %v460
    %v2004 = vunpack.c.l.b16 %v461
    %v2005 = vunpack.c.l.b16 %v462
    %v2006 = vunpack.c.l.b16 %v463
    %v2007 = vunpack.c.l.b16 %v464
    %v2008 = vunpack.c.l.b16 %v465
    %v2009 = vunpack.c.l.b16 %v466
    %v2010 = vunpack.c.l.b16 %v467
    %v2011 = vunpack.c.l.b16 %v468
    %v2012 = vunpack.c.l.b16 %v469
    %v2013 = vunpack.c.l.b16 %v470
    %v2014 = vunpack.c.l.b16 %v471
    %v2015 = vunpack.c.l.b16 %v472
    %v2016 = vunpack.c.l.b16 %v473
    %v2017 = vunpack.c.l.b16 %v474
    %v2018 = vunpack.c.l.b16 %v475
    %v2019 = vunpack.c.l.b16 %v476
    %v2020 = vunpack.c.l.b16 %v477
    %v2021 = vunpack.c.l.b16 %v478
    %v2022 = vunpack.c.l.b16 %v479
    %v2023 = vunpack.c.l.b16 %v480
    %v2024 = vunpack.c.l.b16 %v481
    %v2025 = vunpack.c.l.b16 %v482
    %v2026 = vunpack.c.l.b16 %v483
    %v2027 = vunpack.c.l.b16 %v484
    %v2028 = vunpack.c.l.b16 %v485
    %v2029 = vunpack.c.l.b16 %v486
    %v2030 = vunpack.c.l.b16 %v487
    %v2031 = vunpack.c.l.b16 %v488
    %v2032 = vunpack.c.l.b16 %v489
    %v2033 = vunpack.c.l.b16 %v490
    %v2034 = vunpack.c.l.b16 %v491
    %v2035 = vunpack.c.l.b16 %v492
    %v2036 = vunpack.c.l.b16 %v493
    %v2037 = vunpack.c.l.b16 %v494
    %v2038 = vunpack.c.l.b16 %v495
    %v2039 = vunpack.c.l.b16 %v496
    %v2040 = vunpack.c.l.b16 %v497
    %v2041 = vunpack.c.l.b16 %v498
    %v2042 = vunpack.c.l.b16 %v499
    %v2043 = vunpack.c.l.b16 %v500
    %v2044 = vunpack.c.l.b16 %v501
    %v2045 = vunpack.c.l.b16 %v502
    %v2046 = vunpack.c.l.b16 %v503
    %v2047 = vunpack.c.l.b16 %v504
    %v2048 = vunpack.c.l.b16 %v505
    %v2049 = vunpack.c.l.b16 %v506
    %v2050 = vunpack.c.l.b16 %v507
    %v2051 = vunpack.c.l.b16 %v508
    %v2052 = vunpack.c.l.b16 %v509
    %v2053 = vunpack.c.l.b16 %v510
    %v2054 = vunpack.c.l.b16 %v511
    %v2055 = vunpack.c.l.b16 %v512
    %v2056 = vunpack.c.l.b16 %v513
    %v2057 = vunpack.c.l.b16 %v514
    %v2058 = vunpack.c.l.b16 %v515
    %v2059 = vunpack.c.l.b16 %v516
    %v2060 = vunpack.c.l.b16 %v517
    %v2061 = vunpack.c.l.b16 %v518
    %v2062 = vunpack.c.l.b16 %v519
    %v2063 = vunpack.c.l.b16 %v520
    %v2064 = vunpack.c.l.b16 %v521
    %v2065 = vunpack.c.l.b16 %v522
    %v2066 = vunpack.c.l.b16 %v523
    %v2067 = vunpack.c.l.b16 %v524
    %v2068 = vunpack.c.l.b16 %v525
    %v2069 = vunpack.c.l.b16 %v526
    %v2070 = vunpack.c.l.b16 %v527
    %v2071 = vunpack.c.l.b16 %v528
    %v2072 = vunpack.c.l.b16 %v529
    %v2073 = vunpack.c.l.b16 %v530
    %v2074 = vunpack.c.l.b16 %v531
    %v2075 = vunpack.c.l.b16 %v532
    %v2076 = vunpack.c.l.b16 %v533
    %v2077 = vunpack.c.l.b16 %v534
    %v2078 = vunpack.c.l.b16 %v535
    %v2079 = vunpack.c.l.b16 %v536
    %v2080 = vunpack.c.l.b16 %v537
    %v2081 = vunpack.c.l.b16 %v538
    %v2082 = vunpack.c.l.b16 %v539
    %v2083 = vunpack.c.l.b16 %v540
    %v2084 = vunpack.c.l.b16 %v541
    %v2085 = vunpack.c.l.b16 %v542
    %v2086 = vunpack.c.l.b16 %v543
    %v2087 = vunpack.c.l.b16 %v544
    %v2088 = vunpack.c.l.b16 %v545
    %v2089 = vunpack.c.l.b16 %v546
    %v2090 = vunpack.c.l.b16 %v547
    %v2091 = vunpack.c.l.b16 %v548
    %v2092 = vunpack.c.l.b16 %v549
    %v2093 = vunpack.c.l.b16 %v550
    %v2094 = vunpack.c.l.b16 %v551
    %v2095 = vunpack.c.l.b16 %v552
    %v2096 = vunpack.c.l.b16 %v553
    %v2097 = vunpack.c.l.b16 %v554
    %v2098 = vunpack.c.l.b16 %v555
    %v2099 = vunpack.c.l.b16 %v556
    %v2100 = vunpack.c.l.b16 %v557
    %v2101 = vunpack.c.l.b16 %v558
    %v2102 = vunpack.c.l.b16 %v559
    %v2103 = vunpack.c.l.b16 %v560
    %v2104 = vunpack.c.l.b16 %v561
    %v2105 = vunpack.c.l.b16 %v562
    %v2106 = vunpack.c.l.b16 %v563
    %v2107 = vunpack.c.l.b16 %v564
    %v2108 = vunpack.c.l.b16 %v565
    %v2109 = vunpack.c.l.b16 %v566
    %v2110 = vunpack.c.l.b16 %v567
    %v2111 = vunpack.c.l.b16 %v568
    %v2112 = vunpack.c.l.b16 %v569
    %v2113 = vunpack.c.l.b16 %v570
    %v2114 = vunpack.c.l.b16 %v571
    %v2115 = vunpack.c.l.b16 %v572
    %v2116 = vunpack.c.l.b16 %v573
    %v2117 = vunpack.c.l.b16 %v574
    %v2118 = vunpack.c.l.b16 %v575
    %v2119 = vunpack.c.l.b16 %v576
    %v2120 = vunpack.c.l.b16 %v577
    %v2121 = vunpack.c.l.b16 %v578
    %v2122 = vunpack.c.l.b16 %v579
    %v2123 = vunpack.c.l.b16 %v580
    %v2124 = vunpack.c.l.b16 %v581
    %v2125 = vunpack.c.l.b16 %v582
    %v2126 = vunpack.c.l.b16 %v583
    %v2127 = vunpack.c.l.b16 %v584
    %v2128 = vunpack.c.l.b16 %v585
    %v2129 = vunpack.c.l.b16 %v586
    %v2130 = vunpack.c.l.b16 %v587
    %v2131 = vunpack.c.l.b16 %v588
    %v2132 = vunpack.c.l.b16 %v589
    %v2133 = vunpack.c.l.b16 %v590
    %v2134 = vunpack.c.l.b16 %v591
    %v2135 = vunpack.c.l.b16 %v592
    %v2136 = vunpack.c.l.b16 %v593
    %v2137 = vunpack.c.l.b16 %v594
    %v2138 = vunpack.c.l.b16 %v595
    %v2139 = vunpack.c.l.b16 %v596
    %v2140 = vunpack.c.l.b16 %v597
    %v2141 = vunpack.c.l.b16 %v598
    %v2142 = vunpack.c.l.b16 %v599
    %v2143 = vunpack.c.l.b16 %v600
    %v2144 = vunpack.c.l.b16 %v601
    %v2145 = vunpack.c.l.b16 %v602
    %v2146 = vunpack.c.l.b16 %v603
    %v2147 = vunpack.c.l.b16 %v604
    %v2148 = vunpack.c.l.b16 %v605
    %v2149 = vunpack.c.l.b16 %v606
    %v2150 = vunpack.c.l.b16 %v607
    %v2151 = vunpack.c.l.b16 %v608
    %v2152 = vunpack.c.l.b16 %v609
    %v2153 = vunpack.c.l.b16 %v610
    %v2154 = vunpack.c.l.b16 %v611
    %v2155 = vunpack.c.l.b16 %v612
    %v2156 = vunpack.c.l.b16 %v613
    %v2157 = vunpack.c.l.b16 %v614
    %v2158 = vunpack.c.l.b16 %v615
    %v2159 = vunpack.c.l.b16 %v616
    %v2160 = vunpack.c.l.b16 %v617
    %v2161 = vunpack.c.l.b16 %v618
    %v2162 = vunpack.c.l.b16 %v619
    %v2163 = vunpack.c.l.b16 %v620
    %v2164 = vunpack.c.l.b16 %v621
    %v2165 = vunpack.c.l.b16 %v622
    %v2166 = vunpack.c.l.b16 %v623
    %v2167 = vunpack.c.l.b16 %v624
    %v2168 = vunpack.c.l.b16 %v625
    %v2169 = vunpack.c.l.b16 %v626
    %v2170 = vunpack.c.l.b16 %v627
    %v2171 = vunpack.c.l.b16 %v628
    %v2172 = vunpack.c.l.b16 %v629
    %v2173 = vunpack.c.l.b16 %v630
    %v2174 = vunpack.c.l.b16 %v631
    %v2175 = vunpack.c.l.b16 %v632
    %v2176 = vunpack.c.l.b16 %v633
    %v2177 = vunpack.c.l.b16 %v634
    %v2178 = vunpack.c.l.b16 %v635
    %v2179 = vunpack.c.l.b16 %v636
    %v2180 = vunpack.c.l.b16 %v637
    %v2181 = vunpack.c.l.b16 %v638
    %v2182 = vunpack.c.l.b16 %v639
    %v2183 = vunpack.c.l.b16 %v640
    %v2184 = vunpack.c.l.b16 %v641
    %v2185 = vunpack.c.l.b16 %v642
    %v2186 = vunpack.c.l.b16 %v643
    %v2187 = vunpack.c.l.b16 %v644
    %v2188 = vunpack.c.l.b16 %v645
    %v2189 = vunpack.c.l.b16 %v646
    %v2190 = vunpack.c.l.b16 %v647
    %v2191 = vunpack.c.l.b16 %v648
    %v2192 = vunpack.c.l.b16 %v649
    %v2193 = vunpack.c.l.b16 %v650
    %v2194 = vunpack.c.l.b16 %v651
    %v2195 = vunpack.c.l.b16 %v652
    %v2196 = vunpack.c.l.b16 %v653
    %v2197 = vunpack.c.l.b16 %v654
    %v2198 = vunpack.c.l.b16 %v655
    %v2199 = vunpack.c.l.b16 %v656
    %v2200 = vunpack.c.l.b16 %v657
    %v2201 = vunpack.c.l.b16 %v658
    %v2202 = vunpack.c.l.b16 %v659
    %v2203 = vunpack.c.l.b16 %v660
    %v2204 = vunpack.c.l.b16 %v661
    %v2205 = vunpack.c.l.b16 %v662
    %v2206 = vunpack.c.l.b16 %v663
    %v2207 = vunpack.c.l.b16 %v664
    %v2208 = vunpack.c.l.b16 %v665
    %v2209 = vunpack.c.l.b16 %v666
    %v2210 = vunpack.c.l.b16 %v667
    %v2211 = vunpack.c.l.b16 %v668
    %v2212 = vunpack.c.l.b16 %v669
    %v2213 = vunpack.c.l.b16 %v670
    %v2214 = vunpack.c.l.b16 %v671
    %v2215 = vunpack.c.l.b16 %v672
    %v2216 = vunpack.c.l.b16 %v673
    %v2217 = vunpack.c.l.b16 %v674
    %v2218 = vunpack.c.l.b16 %v675
    %v2219 = vunpack.c.l.b16 %v676
    %v2220 = vunpack.c.l.b16 %v677
    %v2221 = vunpack.c.l.b16 %v678
    %v2222 = vunpack.c.l.b16 %v679
    %v2223 = vunpack.c.l.b16 %v680
    %v2224 = vunpack.c.l.b16 %v681
    %v2225 = vunpack.c.l.b16 %v682
    %v2226 = vunpack.c.l.b16 %v683
    %v2227 = vunpack.c.l.b16 %v684
    %v2228 = vunpack.c.l.b16 %v685
    %v2229 = vunpack.c.l.b16 %v686
    %v2230 = vunpack.c.l.b16 %v687
    %v2231 = vunpack.c.l.b16 %v688
    %v2232 = vunpack.c.l.b16 %v689
    %v2233 = vunpack.c.l.b16 %v690
    %v2234 = vunpack.c.l.b16 %v691
    %v2235 = vunpack.c.l.b16 %v692
    %v2236 = vunpack.c.l.b16 %v693
    %v2237 = vunpack.c.l.b16 %v694
    %v2238 = vunpack.c.l.b16 %v695
    %v2239 = vunpack.c.l.b16 %v696
    %v2240 = vunpack.c.l.b16 %v697
    %v2241 = vunpack.c.l.b16 %v698
    %v2242 = vunpack.c.l.b16 %v699
    %v2243 = vunpack.c.l.b16 %v700
    %v2244 = vunpack.c.l.b16 %v701
    %v2245 = vunpack.c.l.b16 %v702
    %v2246 = vunpack.c.l.b16 %v703
    %v2247 = vunpack.c.l.b16 %v704
    %v2248 = vunpack.c.l.b16 %v705
    %v2249 = vunpack.c.l.b16 %v706
    %v2250 = vunpack.c.l.b16 %v707
    %v2251 = vunpack.c.l.b16 %v708
    %v2252 = vunpack.c.l.b16 %v709
    %v2253 = vunpack.c.l.b16 %v710
    %v2254 = vunpack.c.l.b16 %v711
    %v2255 = vunpack.c.l.b16 %v712
    %v2256 = vunpack.c.l.b16 %v713
    %v2257 = vunpack.c.l.b16 %v714
    %v2258 = vunpack.c.l.b16 %v715
    %v2259 = vunpack.c.l.b16 %v716
    %v2260 = vunpack.c.l.b16 %v717
    %v2261 = vunpack.c.l.b16 %v718
    %v2262 = vunpack.c.l.b16 %v719
    %v2263 = vunpack.c.l.b16 %v720
    %v2264 = vunpack.c.l.b16 %v721
    %v2265 = vunpack.c.l.b16 %v722
    %v2266 = vunpack.c.l.b16 %v723
    %v2267 = vunpack.c.l.b16 %v724
    %v2268 = vunpack.c.l.b16 %v725
    %v2269 = vunpack.c.l.b16 %v726
    %v2270 = vunpack.c.l.b16 %v727
    %v2271 = vunpack.c.l.b16 %v728
    %v2272 = vunpack.c.l.b16 %v729
    %v2273 = vunpack.c.l.b16 %v730
    %v2274 = vunpack.c.l.b16 %v731
    %v2275 = vunpack.c.l.b16 %v732
    %v2276 = vunpack.c.l.b16 %v733
    %v2277 = vunpack.c.l.b16 %v734
    %v2278 = vunpack.c.l.b16 %v735
    %v2279 = vunpack.c.l.b16 %v736
    %v2280 = vunpack.c.l.b16 %v737
    %v2281 = vunpack.c.l.b16 %v738
    %v2282 = vunpack.c.l.b16 %v739
    %v2283 = vunpack.c.l.b16 %v740
    %v2284 = vunpack.c.l.b16 %v741
    %v2285 = vunpack.c.l.b16 %v742
    %v2286 = vunpack.c.l.b16 %v743
    %v2287 = vunpack.c.l.b16 %v744
    %v2288 = vunpack.c.l.b16 %v745
    %v2289 = vunpack.c.l.b16 %v746
    %v2290 = vunpack.c.l.b16 %v747
    %v2291 = vunpack.c.l.b16 %v748
    %v2292 = vunpack.c.l.b16 %v749
    %v2293 = vunpack.c.l.b16 %v750
    %v2294 = vunpack.c.l.b16 %v751
    %v2295 = vunpack.c.l.b16 %v752
    %v2296 = vunpack.c.l.b16 %v753
    %v2297 = vunpack.c.l.b16 %v754
    %v2298 = vunpack.c.l.b16 %v755
    %v2299 = vunpack.c.l.b16 %v756
    %v2300 = vunpack.c.l.b16 %v757
    %v2301 = vunpack.c.l.b16 %v758
    %v2302 = vunpack.c.l.b16 %v759
    %v2303 = vunpack.c.l.b16 %v760
    %v2304 = vunpack.c.l.b16 %v761
    %v2305 = vunpack.c.l.b16 %v762
    %v2306 = vunpack.c.l.b16 %v763
    %v2307 = vunpack.c.l.b16 %v764
    %v2308 = vunpack.c.l.b16 %v765
    %v2309 = vunpack.c.l.b16 %v766
    %v2310 = vunpack.c.l.b16 %v767
    %v2311 = vunpack.c.l.b16 %v768
    %v2312 = vunpack.c.l.b16 %v769
    %v2313 = vunpack.c.l.b16 %v770
    %v2314 = vunpack.c.l.b16 %v771
    %v2315 = vunpack.c.l.b16 %v772
    %v2316 = vunpack.c.l.b16 %v773
    %v2317 = vunpack.c.l.b16 %v774
    %v2318 = vunpack.c.l.b16 %v775
    %v2319 = vunpack.c.l.b16 %v776
    %v2320 = vunpack.c.l.b16 %v777
    %v2321 = vunpack.c.l.b16 %v778
    %v2322 = vunpack.c.l.b16 %v779
    %v2323 = vunpack.c.l.b16 %v780
    %v2324 = vunpack.c.l.b16 %v781
    %v2325 = vunpack.c.l.b16 %v782
    %v2326 = vunpack.c.l.b16 %v783
    %v2327 = vunpack.c.l.b16 %v784
    %v2328 = vunpack.c.l.b16 %v785
    %v2329 = vunpack.c.l.b16 %v786
    %v2330 = vunpack.c.l.b16 %v787
    %v2331 = vunpack.c.l.b16 %v788
    %v2332 = vunpack.c.l.b16 %v789
    %v2333 = vunpack.c.l.b16 %v790
    %v2334 = vunpack.c.l.b16 %v791
    %v2335 = vunpack.c.l.b16 %v792
    %v2336 = vunpack.c.l.b16 %v793
    %v2337 = vunpack.c.l.b16 %v794
    %v2338 = vunpack.c.l.b16 %v795
    %v2339 = vunpack.c.l.b16 %v796
    %v2340 = vunpack.c.l.b16 %v797
    %v2341 = vunpack.c.l.b16 %v798
    %v2342 = vunpack.c.l.b16 %v799
    %v2343 = vunpack.c.l.b16 %v800
    %v2344 = vunpack.c.l.b16 %v801
    %v2345 = vunpack.c.l.b16 %v802
    %v2346 = vunpack.c.l.b16 %v803
    %v2347 = vunpack.c.l.b16 %v804
    %v2348 = vunpack.c.l.b16 %v805
    %v2349 = vunpack.c.l.b16 %v806
    %v2350 = vunpack.c.l.b16 %v807
    %v2351 = vunpack.c.l.b16 %v808
    %v2352 = vunpack.c.l.b16 %v809
    %v2353 = vunpack.c.l.b16 %v810
    %v2354 = vunpack.c.l.b16 %v811
    %v2355 = vunpack.c.l.b16 %v812
    %v2356 = vunpack.c.l.b16 %v813
    %v2357 = vunpack.c.l.b16 %v814
    %v2358 = vunpack.c.l.b16 %v815
    %v2359 = vunpack.c.l.b16 %v816
    %v2360 = vunpack.c.l.b16 %v817
    %v2361 = vunpack.c.l.b16 %v818
    %v2362 = vunpack.c.l.b16 %v819
    %v2363 = vunpack.c.l.b16 %v820
    %v2364 = vunpack.c.l.b16 %v821
    %v2365 = vunpack.c.l.b16 %v822
    %v2366 = vunpack.c.l.b16 %v823
    %v2367 = vunpack.c.l.b16 %v824
    %v2368 = vunpack.c.l.b16 %v825
    %v2369 = vunpack.c.l.b16 %v826
    %v2370 = vunpack.c.l.b16 %v827
    %v2371 = vunpack.c.l.b16 %v828
    %v2372 = vunpack.c.l.b16 %v829
    %v2373 = vunpack.c.l.b16 %v830
    %v2374 = vunpack.c.l.b16 %v831
    %v2375 = vunpack.c.l.b16 %v832
    %v2376 = vunpack.c.l.b16 %v833
    %v2377 = vunpack.c.l.b16 %v834
    %v2378 = vunpack.c.l.b16 %v835
    %v2379 = vunpack.c.l.b16 %v836
    %v2380 = vunpack.c.l.b16 %v837
    %v2381 = vunpack.c.l.b16 %v838
    %v2382 = vunpack.c.l.b16 %v839
    %v2383 = vunpack.c.l.b16 %v840
    %v2384 = vunpack.c.l.b16 %v841
    %v2385 = vunpack.c.l.b16 %v842
    %v2386 = vunpack.c.l.b16 %v843
    %v2387 = vunpack.c.l.b16 %v844
    %v2388 = vunpack.c.l.b16 %v845
    %v2389 = vunpack.c.l.b16 %v846
    %v2390 = vunpack.c.l.b16 %v847
    %v2391 = vunpack.c.l.b16 %v848
    %v2392 = vunpack.c.l.b16 %v849
    %v2393 = vunpack.c.l.b16 %v850
    %v2394 = vunpack.c.l.b16 %v851
    %v2395 = vunpack.c.l.b16 %v852
    %v2396 = vunpack.c.l.b16 %v853
    %v2397 = vunpack.c.l.b16 %v854
    %v2398 = vunpack.c.l.b16 %v855
    %v2399 = vunpack.c.l.b16 %v856
    %v2400 = vunpack.c.l.b16 %v857
    %v2401 = vunpack.c.l.b16 %v858
    %v2402 = vunpack.c.l.b16 %v859
    %v2403 = vunpack.c.l.b16 %v860
    %v2404 = vunpack.c.l.b16 %v861
    %v2405 = vunpack.c.l.b16 %v862
    %v2406 = vunpack.c.l.b16 %v863
    %v2407 = vunpack.c.l.b16 %v864
    %v2408 = vunpack.c.l.b16 %v865
    %v2409 = vunpack.c.l.b16 %v866
    %v2410 = vunpack.c.l.b16 %v867
    %v2411 = vunpack.c.l.b16 %v868
    %v2412 = vunpack.c.l.b16 %v869
    %v2413 = vunpack.c.l.b16 %v870
    %v2414 = vunpack.c.l.b16 %v871
    %v2415 = vunpack.c.l.b16 %v872
    %v2416 = vunpack.c.l.b16 %v873
    %v2417 = vunpack.c.l.b16 %v874
    %v2418 = vunpack.c.l.b16 %v875
    %v2419 = vunpack.c.l.b16 %v876
    %v2420 = vunpack.c.l.b16 %v877
    %v2421 = vunpack.c.l.b16 %v878
    %v2422 = vunpack.c.l.b16 %v879
    %v2423 = vunpack.c.l.b16 %v880
    %v2424 = vunpack.c.l.b16 %v881
    %v2425 = vunpack.c.l.b16 %v882
    %v2426 = vunpack.c.l.b16 %v883
    %v2427 = vunpack.c.l.b16 %v884
    %v2428 = vunpack.c.l.b16 %v885
    %v2429 = vunpack.c.l.b16 %v886
    %v2430 = vunpack.c.l.b16 %v887
    %v2431 = vunpack.c.l.b16 %v888
    %v2432 = vunpack.c.l.b16 %v889
    %v2433 = vunpack.c.l.b16 %v890
    %v2434 = vunpack.c.l.b16 %v891
    %v2435 = vunpack.c.l.b16 %v892
    %v2436 = vunpack.c.l.b16 %v893
    %v2437 = vunpack.c.l.b16 %v894
    %v2438 = vunpack.c.l.b16 %v895
    %v2439 = vunpack.c.l.b16 %v896
    %v2440 = vunpack.c.l.b16 %v897
    %v2441 = vunpack.c.l.b16 %v898
    %v2442 = vunpack.c.l.b16 %v899
    %v2443 = vunpack.c.l.b16 %v900
    %v2444 = vunpack.c.l.b16 %v901
    %v2445 = vunpack.c.l.b16 %v902
    %v2446 = vunpack.c.l.b16 %v903
    %v2447 = vunpack.c.l.b16 %v904
    %v2448 = vunpack.c.l.b16 %v905
    %v2449 = vunpack.c.l.b16 %v906
    %v2450 = vunpack.c.l.b16 %v907
    %v2451 = vunpack.c.l.b16 %v908
    %v2452 = vunpack.c.l.b16 %v909
    %v2453 = vunpack.c.l.b16 %v910
    %v2454 = vunpack.c.l.b16 %v911
    %v2455 = vunpack.c.l.b16 %v912
    %v2456 = vunpack.c.l.b16 %v913
    %v2457 = vunpack.c.l.b16 %v914
    %v2458 = vunpack.c.l.b16 %v915
    %v2459 = vunpack.c.l.b16 %v916
    %v2460 = vpack.c.b16 %v1693, %v1692
    %v2461 = vpack.c.b16 %v1695, %v1694
    %v2462 = vpack.c.b16 %v1697, %v1696
    %v2463 = vpack.c.b16 %v1699, %v1698
    %v2464 = vpack.c.b16 %v1701, %v1700
    %v2465 = vpack.c.b16 %v1703, %v1702
    %v2466 = vpack.c.b16 %v1705, %v1704
    %v2467 = vpack.c.b16 %v1707, %v1706
    %v2468 = vpack.c.b16 %v1709, %v1708
    %v2469 = vpack.c.b16 %v1711, %v1710
    %v2470 = vpack.c.b16 %v1713, %v1712
    %v2471 = vpack.c.b16 %v1715, %v1714
    %v2472 = vpack.c.b16 %v1717, %v1716
    %v2473 = vpack.c.b16 %v1719, %v1718
    %v2474 = vpack.c.b16 %v1721, %v1720
    %v2475 = vpack.c.b16 %v1723, %v1722
    %v2476 = vpack.c.b16 %v1725, %v1724
    %v2477 = vpack.c.b16 %v1727, %v1726
    %v2478 = vpack.c.b16 %v1729, %v1728
    %v2479 = vpack.c.b16 %v1731, %v1730
    %v2480 = vpack.c.b16 %v1733, %v1732
    %v2481 = vpack.c.b16 %v1735, %v1734
    %v2482 = vpack.c.b16 %v1737, %v1736
    %v2483 = vpack.c.b16 %v1739, %v1738
    %v2484 = vpack.c.b16 %v1741, %v1740
    %v2485 = vpack.c.b16 %v1743, %v1742
    %v2486 = vpack.c.b16 %v1745, %v1744
    %v2487 = vpack.c.b16 %v1747, %v1746
    %v2488 = vpack.c.b16 %v1749, %v1748
    %v2489 = vpack.c.b16 %v1751, %v1750
    %v2490 = vpack.c.b16 %v1753, %v1752
    %v2491 = vpack.c.b16 %v1755, %v1754
    %v2492 = vpack.c.b16 %v1757, %v1756
    %v2493 = vpack.c.b16 %v1759, %v1758
    %v2494 = vpack.c.b16 %v1761, %v1760
    %v2495 = vpack.c.b16 %v1763, %v1762
    %v2496 = vpack.c.b16 %v1765, %v1764
    %v2497 = vpack.c.b16 %v1767, %v1766
    %v2498 = vpack.c.b16 %v1769, %v1768
    %v2499 = vpack.c.b16 %v1771, %v1770
    %v2500 = vpack.c.b16 %v1773, %v1772
    %v2501 = vpack.c.b16 %v1775, %v1774
    %v2502 = vpack.c.b16 %v1777, %v1776
    %v2503 = vpack.c.b16 %v1779, %v1778
    %v2504 = vpack.c.b16 %v1781, %v1780
    %v2505 = vpack.c.b16 %v1783, %v1782
    %v2506 = vpack.c.b16 %v1785, %v1784
    %v2507 = vpack.c.b16 %v1787, %v1786
    %v2508 = vpack.c.b16 %v1789, %v1788
    %v2509 = vpack.c.b16 %v1791, %v1790
    %v2510 = vpack.c.b16 %v1793, %v1792
    %v2511 = vpack.c.b16 %v1795, %v1794
    %v2512 = vpack.c.b16 %v1797, %v1796
    %v2513 = vpack.c.b16 %v1799, %v1798
    %v2514 = vpack.c.b16 %v1801, %v1800
    %v2515 = vpack.c.b16 %v1803, %v1802
    %v2516 = vpack.c.b16 %v1805, %v1804
    %v2517 = vpack.c.b16 %v1807, %v1806
    %v2518 = vpack.c.b16 %v1809, %v1808
    %v2519 = vpack.c.b16 %v1811, %v1810
    %v2520 = vpack.c.b16 %v1813, %v1812
    %v2521 = vpack.c.b16 %v1815, %v1814
    %v2522 = vpack.c.b16 %v1817, %v1816
    %v2523 = vpack.c.b16 %v1819, %v1818
    %v2524 = vpack.c.b16 %v1821, %v1820
    %v2525 = vpack.c.b16 %v1823, %v1822
    %v2526 = vpack.c.b16 %v1825, %v1824
    %v2527 = vpack.c.b16 %v1827, %v1826
    %v2528 = vpack.c.b16 %v1829, %v1828
    %v2529 = vpack.c.b16 %v1831, %v1830
    %v2530 = vpack.c.b16 %v1833, %v1832
    %v2531 = vpack.c.b16 %v1835, %v1834
    %v2532 = vpack.c.b16 %v1837, %v1836
    %v2533 = vpack.c.b16 %v1839, %v1838
    %v2534 = vpack.c.b16 %v1841, %v1840
    %v2535 = vpack.c.b16 %v1843, %v1842
    %v2536 = vpack.c.b16 %v1845, %v1844
    %v2537 = vpack.c.b16 %v1847, %v1846
    %v2538 = vpack.c.b16 %v1849, %v1848
    %v2539 = vpack.c.b16 %v1851, %v1850
    %v2540 = vpack.c.b16 %v1853, %v1852
    %v2541 = vpack.c.b16 %v1855, %v1854
    %v2542 = vpack.c.b16 %v1857, %v1856
    %v2543 = vpack.c.b16 %v1859, %v1858
    %v2544 = vpack.c.b16 %v1861, %v1860
    %v2545 = vpack.c.b16 %v1863, %v1862
    %v2546 = vpack.c.b16 %v1865, %v1864
    %v2547 = vpack.c.b16 %v1867, %v1866
    %v2548 = vpack.c.b16 %v1869, %v1868
    %v2549 = vpack.c.b16 %v1871, %v1870
    %v2550 = vpack.c.b16 %v1873, %v1872
    %v2551 = vpack.c.b16 %v1875, %v1874
    %v2552 = vpack.c.b16 %v1877, %v1876
    %v2553 = vpack.c.b16 %v1879, %v1878
    %v2554 = vpack.c.b16 %v1881, %v1880
    %v2555 = vpack.c.b16 %v1883, %v1882
    %v2556 = vpack.c.b16 %v1885, %v1884
    %v2557 = vpack.c.b16 %v1887, %v1886
    %v2558 = vpack.c.b16 %v1889, %v1888
    %v2559 = vpack.c.b16 %v1891, %v1890
    %v2560 = vpack.c.b16 %v1893, %v1892
    %v2561 = vpack.c.b16 %v1895, %v1894
    %v2562 = vpack.c.b16 %v1897, %v1896
    %v2563 = vpack.c.b16 %v1899, %v1898
    %v2564 = vpack.c.b16 %v1901, %v1900
    %v2565 = vpack.c.b16 %v1903, %v1902
    %v2566 = vpack.c.b16 %v1905, %v1904
    %v2567 = vpack.c.b16 %v1907, %v1906
    %v2568 = vpack.c.b16 %v1909, %v1908
    %v2569 = vpack.c.b16 %v1911, %v1910
    %v2570 = vpack.c.b16 %v1913, %v1912
    %v2571 = vpack.c.b16 %v1915, %v1914
    %v2572 = vpack.c.b16 %v1917, %v1916
    %v2573 = vpack.c.b16 %v1919, %v1918
    %v2574 = vpack.c.b16 %v1921, %v1920
    %v2575 = vpack.c.b16 %v1923, %v1922
    %v2576 = vpack.c.b16 %v1925, %v1924
    %v2577 = vpack.c.b16 %v1927, %v1926
    %v2578 = vpack.c.b16 %v1929, %v1928
    %v2579 = vpack.c.b16 %v1931, %v1930
    %v2580 = vpack.c.b16 %v1933, %v1932
    %v2581 = vpack.c.b16 %v1935, %v1934
    %v2582 = vpack.c.b16 %v1937, %v1936
    %v2583 = vpack.c.b16 %v1939, %v1938
    %v2584 = vpack.c.b16 %v1941, %v1940
    %v2585 = vpack.c.b16 %v1943, %v1942
    %v2586 = vpack.c.b16 %v1945, %v1944
    %v2587 = vpack.c.b16 %v1947, %v1946
    %v2588 = vpack.c.b16 %v1949, %v1948
    %v2589 = vpack.c.b16 %v1951, %v1950
    %v2590 = vpack.c.b16 %v1953, %v1952
    %v2591 = vpack.c.b16 %v1955, %v1954
    %v2592 = vpack.c.b16 %v1957, %v1956
    %v2593 = vpack.c.b16 %v1959, %v1958
    %v2594 = vpack.c.b16 %v1961, %v1960
    %v2595 = vpack.c.b16 %v1963, %v1962
    %v2596 = vpack.c.b16 %v1965, %v1964
    %v2597 = vpack.c.b16 %v1967, %v1966
    %v2598 = vpack.c.b16 %v1969, %v1968
    %v2599 = vpack.c.b16 %v1971, %v1970
    %v2600 = vpack.c.b16 %v1973, %v1972
    %v2601 = vpack.c.b16 %v1975, %v1974
    %v2602 = vpack.c.b16 %v1977, %v1976
    %v2603 = vpack.c.b16 %v1979, %v1978
    %v2604 = vpack.c.b16 %v1981, %v1980
    %v2605 = vpack.c.b16 %v1983, %v1982
    %v2606 = vpack.c.b16 %v1985, %v1984
    %v2607 = vpack.c.b16 %v1987, %v1986
    %v2608 = vpack.c.b16 %v1989, %v1988
    %v2609 = vpack.c.b16 %v1991, %v1990
    %v2610 = vpack.c.b16 %v1993, %v1992
    %v2611 = vpack.c.b16 %v1995, %v1994
    %v2612 = vpack.c.b16 %v1997, %v1996
    %v2613 = vpack.c.b16 %v1999, %v1998
    %v2614 = vpack.c.b16 %v2001, %v2000
    %v2615 = vpack.c.b16 %v2003, %v2002
    %v2616 = vpack.c.b16 %v2005, %v2004
    %v2617 = vpack.c.b16 %v2007, %v2006
    %v2618 = vpack.c.b16 %v2009, %v2008
    %v2619 = vpack.c.b16 %v2011, %v2010
    %v2620 = vpack.c.b16 %v2013, %v2012
    %v2621 = vpack.c.b16 %v2015, %v2014
    %v2622 = vpack.c.b16 %v2017, %v2016
    %v2623 = vpack.c.b16 %v2019, %v2018
    %v2624 = vpack.c.b16 %v2021, %v2020
    %v2625 = vpack.c.b16 %v2023, %v2022
    %v2626 = vpack.c.b16 %v2025, %v2024
    %v2627 = vpack.c.b16 %v2027, %v2026
    %v2628 = vpack.c.b16 %v2029, %v2028
    %v2629 = vpack.c.b16 %v2031, %v2030
    %v2630 = vpack.c.b16 %v2033, %v2032
    %v2631 = vpack.c.b16 %v2035, %v2034
    %v2632 = vpack.c.b16 %v2037, %v2036
    %v2633 = vpack.c.b16 %v2039, %v2038
    %v2634 = vpack.c.b16 %v2041, %v2040
    %v2635 = vpack.c.b16 %v2043, %v2042
    %v2636 = vpack.c.b16 %v2045, %v2044
    %v2637 = vpack.c.b16 %v2047, %v2046
    %v2638 = vpack.c.b16 %v2049, %v2048
    %v2639 = vpack.c.b16 %v2051, %v2050
    %v2640 = vpack.c.b16 %v2053, %v2052
    %v2641 = vpack.c.b16 %v2055, %v2054
    %v2642 = vpack.c.b16 %v2057, %v2056
    %v2643 = vpack.c.b16 %v2059, %v2058
    %v2644 = vpack.c.b16 %v2061, %v2060
    %v2645 = vpack.c.b16 %v2063, %v2062
    %v2646 = vpack.c.b16 %v2065, %v2064
    %v2647 = vpack.c.b16 %v2067, %v2066
    %v2648 = vpack.c.b16 %v2069, %v2068
    %v2649 = vpack.c.b16 %v2071, %v2070
    %v2650 = vpack.c.b16 %v2073, %v2072
    %v2651 = vpack.c.b16 %v2075, %v2074
    %v2652 = vpack.c.b16 %v2077, %v2076
    %v2653 = vpack.c.b16 %v2079, %v2078
    %v2654 = vpack.c.b16 %v2081, %v2080
    %v2655 = vpack.c.b16 %v2083, %v2082
    %v2656 = vpack.c.b16 %v2085, %v2084
    %v2657 = vpack.c.b16 %v2087, %v2086
    %v2658 = vpack.c.b16 %v2089, %v2088
    %v2659 = vpack.c.b16 %v2091, %v2090
    %v2660 = vpack.c.b16 %v2093, %v2092
    %v2661 = vpack.c.b16 %v2095, %v2094
    %v2662 = vpack.c.b16 %v2097, %v2096
    %v2663 = vpack.c.b16 %v2099, %v2098
    %v2664 = vpack.c.b16 %v2101, %v2100
    %v2665 = vpack.c.b16 %v2103, %v2102
    %v2666 = vpack.c.b16 %v2105, %v2104
    %v2667 = vpack.c.b16 %v2107, %v2106
    %v2668 = vpack.c.b16 %v2109, %v2108
    %v2669 = vpack.c.b16 %v2111, %v2110
    %v2670 = vpack.c.b16 %v2113, %v2112
    %v2671 = vpack.c.b16 %v2115, %v2114
    %v2672 = vpack.c.b16 %v2117, %v2116
    %v2673 = vpack.c.b16 %v2119, %v2118
    %v2674 = vpack.c.b16 %v2121, %v2120
    %v2675 = vpack.c.b16 %v2123, %v2122
    %v2676 = vpack.c.b16 %v2125, %v2124
    %v2677 = vpack.c.b16 %v2127, %v2126
    %v2678 = vpack.c.b16 %v2129, %v2128
    %v2679 = vpack.c.b16 %v2131, %v2130
    %v2680 = vpack.c.b16 %v2133, %v2132
    %v2681 = vpack.c.b16 %v2135, %v2134
    %v2682 = vpack.c.b16 %v2137, %v2136
    %v2683 = vpack.c.b16 %v2139, %v2138
    %v2684 = vpack.c.b16 %v2141, %v2140
    %v2685 = vpack.c.b16 %v2143, %v2142
    %v2686 = vpack.c.b16 %v2145, %v2144
    %v2687 = vpack.c.b16 %v2147, %v2146
    %v2688 = vpack.c.b16 %v2149, %v2148
    %v2689 = vpack.c.b16 %v2151, %v2150
    %v2690 = vpack.c.b16 %v2153, %v2152
    %v2691 = vpack.c.b16 %v2155, %v2154
    %v2692 = vpack.c.b16 %v2157, %v2156
    %v2693 = vpack.c.b16 %v2159, %v2158
    %v2694 = vpack.c.b16 %v2161, %v2160
    %v2695 = vpack.c.b16 %v2163, %v2162
    %v2696 = vpack.c.b16 %v2165, %v2164
    %v2697 = vpack.c.b16 %v2167, %v2166
    %v2698 = vpack.c.b16 %v2169, %v2168
    %v2699 = vpack.c.b16 %v2171, %v2170
    %v2700 = vpack.c.b16 %v2173, %v2172
    %v2701 = vpack.c.b16 %v2175, %v2174
    %v2702 = vpack.c.b16 %v2177, %v2176
    %v2703 = vpack.c.b16 %v2179, %v2178
    %v2704 = vpack.c.b16 %v2181, %v2180
    %v2705 = vpack.c.b16 %v2183, %v2182
    %v2706 = vpack.c.b16 %v2185, %v2184
    %v2707 = vpack.c.b16 %v2187, %v2186
    %v2708 = vpack.c.b16 %v2189, %v2188
    %v2709 = vpack.c.b16 %v2191, %v2190
    %v2710 = vpack.c.b16 %v2193, %v2192
    %v2711 = vpack.c.b16 %v2195, %v2194
    %v2712 = vpack.c.b16 %v2197, %v2196
    %v2713 = vpack.c.b16 %v2199, %v2198
    %v2714 = vpack.c.b16 %v2201, %v2200
    %v2715 = vpack.c.b16 %v2203, %v2202
    %v2716 = vpack.c.b16 %v2205, %v2204
    %v2717 = vpack.c.b16 %v2207, %v2206
    %v2718 = vpack.c.b16 %v2209, %v2208
    %v2719 = vpack.c.b16 %v2211, %v2210
    %v2720 = vpack.c.b16 %v2213, %v2212
    %v2721 = vpack.c.b16 %v2215, %v2214
    %v2722 = vpack.c.b16 %v2217, %v2216
    %v2723 = vpack.c.b16 %v2219, %v2218
    %v2724 = vpack.c.b16 %v2221, %v2220
    %v2725 = vpack.c.b16 %v2223, %v2222
    %v2726 = vpack.c.b16 %v2225, %v2224
    %v2727 = vpack.c.b16 %v2227, %v2226
    %v2728 = vpack.c.b16 %v2229, %v2228
    %v2729 = vpack.c.b16 %v2231, %v2230
    %v2730 = vpack.c.b16 %v2233, %v2232
    %v2731 = vpack.c.b16 %v2235, %v2234
    %v2732 = vpack.c.b16 %v2237, %v2236
    %v2733 = vpack.c.b16 %v2239, %v2238
    %v2734 = vpack.c.b16 %v2241, %v2240
    %v2735 = vpack.c.b16 %v2243, %v2242
    %v2736 = vpack.c.b16 %v2245, %v2244
    %v2737 = vpack.c.b16 %v2247, %v2246
    %v2738 = vpack.c.b16 %v2249, %v2248
    %v2739 = vpack.c.b16 %v2251, %v2250
    %v2740 = vpack.c.b16 %v2253, %v2252
    %v2741 = vpack.c.b16 %v2255, %v2254
    %v2742 = vpack.c.b16 %v2257, %v2256
    %v2743 = vpack.c.b16 %v2259, %v2258
    %v2744 = vpack.c.b16 %v2261, %v2260
    %v2745 = vpack.c.b16 %v2263, %v2262
    %v2746 = vpack.c.b16 %v2265, %v2264
    %v2747 = vpack.c.b16 %v2267, %v2266
    %v2748 = vpack.c.b16 %v2269, %v2268
    %v2749 = vpack.c.b16 %v2271, %v2270
    %v2750 = vpack.c.b16 %v2273, %v2272
    %v2751 = vpack.c.b16 %v2275, %v2274
    %v2752 = vpack.c.b16 %v2277, %v2276
    %v2753 = vpack.c.b16 %v2279, %v2278
    %v2754 = vpack.c.b16 %v2281, %v2280
    %v2755 = vpack.c.b16 %v2283, %v2282
    %v2756 = vpack.c.b16 %v2285, %v2284
    %v2757 = vpack.c.b16 %v2287, %v2286
    %v2758 = vpack.c.b16 %v2289, %v2288
    %v2759 = vpack.c.b16 %v2291, %v2290
    %v2760 = vpack.c.b16 %v2293, %v2292
    %v2761 = vpack.c.b16 %v2295, %v2294
    %v2762 = vpack.c.b16 %v2297, %v2296
    %v2763 = vpack.c.b16 %v2299, %v2298
    %v2764 = vpack.c.b16 %v2301, %v2300
    %v2765 = vpack.c.b16 %v2303, %v2302
    %v2766 = vpack.c.b16 %v2305, %v2304
    %v2767 = vpack.c.b16 %v2307, %v2306
    %v2768 = vpack.c.b16 %v2309, %v2308
    %v2769 = vpack.c.b16 %v2311, %v2310
    %v2770 = vpack.c.b16 %v2313, %v2312
    %v2771 = vpack.c.b16 %v2315, %v2314
    %v2772 = vpack.c.b16 %v2317, %v2316
    %v2773 = vpack.c.b16 %v2319, %v2318
    %v2774 = vpack.c.b16 %v2321, %v2320
    %v2775 = vpack.c.b16 %v2323, %v2322
    %v2776 = vpack.c.b16 %v2325, %v2324
    %v2777 = vpack.c.b16 %v2327, %v2326
    %v2778 = vpack.c.b16 %v2329, %v2328
    %v2779 = vpack.c.b16 %v2331, %v2330
    %v2780 = vpack.c.b16 %v2333, %v2332
    %v2781 = vpack.c.b16 %v2335, %v2334
    %v2782 = vpack.c.b16 %v2337, %v2336
    %v2783 = vpack.c.b16 %v2339, %v2338
    %v2784 = vpack.c.b16 %v2341, %v2340
    %v2785 = vpack.c.b16 %v2343, %v2342
    %v2786 = vpack.c.b16 %v2345, %v2344
    %v2787 = vpack.c.b16 %v2347, %v2346
    %v2788 = vpack.c.b16 %v2349, %v2348
    %v2789 = vpack.c.b16 %v2351, %v2350
    %v2790 = vpack.c.b16 %v2353, %v2352
    %v2791 = vpack.c.b16 %v2355, %v2354
    %v2792 = vpack.c.b16 %v2357, %v2356
    %v2793 = vpack.c.b16 %v2359, %v2358
    %v2794 = vpack.c.b16 %v2361, %v2360
    %v2795 = vpack.c.b16 %v2363, %v2362
    %v2796 = vpack.c.b16 %v2365, %v2364
    %v2797 = vpack.c.b16 %v2367, %v2366
    %v2798 = vpack.c.b16 %v2369, %v2368
    %v2799 = vpack.c.b16 %v2371, %v2370
    %v2800 = vpack.c.b16 %v2373, %v2372
    %v2801 = vpack.c.b16 %v2375, %v2374
    %v2802 = vpack.c.b16 %v2377, %v2376
    %v2803 = vpack.c.b16 %v2379, %v2378
    %v2804 = vpack.c.b16 %v2381, %v2380
    %v2805 = vpack.c.b16 %v2383, %v2382
    %v2806 = vpack.c.b16 %v2385, %v2384
    %v2807 = vpack.c.b16 %v2387, %v2386
    %v2808 = vpack.c.b16 %v2389, %v2388
    %v2809 = vpack.c.b16 %v2391, %v2390
    %v2810 = vpack.c.b16 %v2393, %v2392
    %v2811 = vpack.c.b16 %v2395, %v2394
    %v2812 = vpack.c.b16 %v2397, %v2396
    %v2813 = vpack.c.b16 %v2399, %v2398
    %v2814 = vpack.c.b16 %v2401, %v2400
    %v2815 = vpack.c.b16 %v2403, %v2402
    %v2816 = vpack.c.b16 %v2405, %v2404
    %v2817 = vpack.c.b16 %v2407, %v2406
    %v2818 = vpack.c.b16 %v2409, %v2408
    %v2819 = vpack.c.b16 %v2411, %v2410
    %v2820 = vpack.c.b16 %v2413, %v2412
    %v2821 = vpack.c.b16 %v2415, %v2414
    %v2822 = vpack.c.b16 %v2417, %v2416
    %v2823 = vpack.c.b16 %v2419, %v2418
    %v2824 = vpack.c.b16 %v2421, %v2420
    %v2825 = vpack.c.b16 %v2423, %v2422
    %v2826 = vpack.c.b16 %v2425, %v2424
    %v2827 = vpack.c.b16 %v2427, %v2426
    %v2828 = vpack.c.b16 %v2429, %v2428
    %v2829 = vpack.c.b16 %v2431, %v2430
    %v2830 = vpack.c.b16 %v2433, %v2432
    %v2831 = vpack.c.b16 %v2435, %v2434
    %v2832 = vpack.c.b16 %v2437, %v2436
    %v2833 = vpack.c.b16 %v2439, %v2438
    %v2834 = vpack.c.b16 %v2441, %v2440
    %v2835 = vpack.c.b16 %v2443, %v2442
    %v2836 = vpack.c.b16 %v2445, %v2444
    %v2837 = vpack.c.b16 %v2447, %v2446
    %v2838 = vpack.c.b16 %v2449, %v2448
    %v2839 = vpack.c.b16 %v2451, %v2450
    %v2840 = vpack.c.b16 %v2453, %v2452
    %v2841 = vpack.c.b16 %v2455, %v2454
    %v2842 = vpack.c.b16 %v2457, %v2456
    %v2843 = vpack.c.b16 %v2459, %v2458
    %3228 = vmatprep.subr.bf16.mxu0 0
    %3229 = vmatpush1.bf16.msra.mxu0 %v2460
    %3230 = vmatprep.subr.bf16.mxu0 0
    %3231 = vmatpush1.bf16.msra.mxu0 %v2461
    %3232 = vmatprep.subr.bf16.mxu0 0
    %3233 = vmatpush1.bf16.msra.mxu0 %v2462
    %3234 = vmatprep.subr.bf16.mxu0 0
    %3235 = vmatpush1.bf16.msra.mxu0 %v2463
    %3236 = vmatprep.subr.bf16.mxu0 0
    %3237 = vmatpush1.bf16.msra.mxu0 %v2464
    %3238 = vmatprep.subr.bf16.mxu0 0
    %3239 = vmatpush1.bf16.msra.mxu0 %v2465
    %3240 = vmatprep.subr.bf16.mxu0 0
    %3241 = vmatpush1.bf16.msra.mxu0 %v2466
    %3242 = vmatprep.subr.bf16.mxu0 0
    %3243 = vmatpush1.bf16.msra.mxu0 %v2467
    %3244 = vmatprep.subr.bf16.mxu0 0
    %3245 = vmatpush1.bf16.msra.mxu0 %v2468
    %3246 = vmatprep.subr.bf16.mxu0 0
    %3247 = vmatpush1.bf16.msra.mxu0 %v2469
    %3248 = vmatprep.subr.bf16.mxu0 0
    %3249 = vmatpush1.bf16.msra.mxu0 %v2470
    %3250 = vmatprep.subr.bf16.mxu0 0
    %3251 = vmatpush1.bf16.msra.mxu0 %v2471
    %3252 = vmatprep.subr.bf16.mxu0 0
    %3253 = vmatpush1.bf16.msra.mxu0 %v2472
    %3254 = vmatprep.subr.bf16.mxu0 0
    %3255 = vmatpush1.bf16.msra.mxu0 %v2473
    %3256 = vmatprep.subr.bf16.mxu0 0
    %3257 = vmatpush1.bf16.msra.mxu0 %v2474
    %3258 = vmatprep.subr.bf16.mxu0 0
    %3259 = vmatpush1.bf16.msra.mxu0 %v2475
    %3260 = vmatprep.mubr.bf16.mxu0 %v102
    %3261 = vmatmul.mubr.bf16.gmra.mrb[0].mxu0 %v101
    %v3262 = vpop.f32.mrb[0].mxu0
    %v3263 = vadd.f32 %v922, %v3262
    %v3264 = vpop.f32.mrb[0].mxu0
    %v3265 = vpop.f32.mrb[0].mxu0
    %v3266 = vpop.f32.mrb[0].mxu0
    %3267 = vdwg.mxu0
    %3268 = vmatprep.subr.bf16.mxu0 0
    %3269 = vmatpush1.bf16.msra.mxu0 %v2476
    %3270 = vmatprep.subr.bf16.mxu0 0
    %3271 = vmatpush1.bf16.msra.mxu0 %v2477
    %3272 = vmatprep.subr.bf16.mxu0 0
    %3273 = vmatpush1.bf16.msra.mxu0 %v2478
    %3274 = vmatprep.subr.bf16.mxu0 0
    %3275 = vmatpush1.bf16.msra.mxu0 %v2479
    %3276 = vmatprep.subr.bf16.mxu0 0
    %3277 = vmatpush1.bf16.msra.mxu0 %v2480
    %3278 = vmatprep.subr.bf16.mxu0 0
    %3279 = vmatpush1.bf16.msra.mxu0 %v2481
    %3280 = vmatprep.subr.bf16.mxu0 0
    %3281 = vmatpush1.bf16.msra.mxu0 %v2482
    %3282 = vmatprep.subr.bf16.mxu0 0
    %3283 = vmatpush1.bf16.msra.mxu0 %v2483
    %3284 = vmatprep.subr.bf16.mxu0 0
    %3285 = vmatpush1.bf16.msra.mxu0 %v2484
    %3286 = vmatprep.subr.bf16.mxu0 0
    %3287 = vmatpush1.bf16.msra.mxu0 %v2485
    %3288 = vmatprep.subr.bf16.mxu0 0
    %3289 = vmatpush1.bf16.msra.mxu0 %v2486
    %3290 = vmatprep.subr.bf16.mxu0 0
    %3291 = vmatpush1.bf16.msra.mxu0 %v2487
    %3292 = vmatprep.subr.bf16.mxu0 0
    %3293 = vmatpush1.bf16.msra.mxu0 %v2488
    %3294 = vmatprep.subr.bf16.mxu0 0
    %3295 = vmatpush1.bf16.msra.mxu0 %v2489
    %3296 = vmatprep.subr.bf16.mxu0 0
    %3297 = vmatpush1.bf16.msra.mxu0 %v2490
    %3298 = vmatprep.subr.bf16.mxu0 0
    %3299 = vmatpush1.bf16.msra.mxu0 %v2491
    %3300 = vmatprep.mubr.bf16.mxu0 %v104
    %3301 = vmatmul.mubr.bf16.gmra.mrb[0].mxu0 %v103
    %v3302 = vpop.f32.mrb[0].mxu0
    %v3303 = vadd.f32 %v3263, %v3302
    %v3304 = vpop.f32.mrb[0].mxu0
    %v3305 = vpop.f32.mrb[0].mxu0
    %v3306 = vpop.f32.mrb[0].mxu0
    %3307 = vdwg.mxu0
    %3308 = vmatprep.subr.bf16.mxu0 0
    %3309 = vmatpush1.bf16.msra.mxu0 %v2492
    %3310 = vmatprep.subr.bf16.mxu0 0
    %3311 = vmatpush1.bf16.msra.mxu0 %v2493
    %3312 = vmatprep.subr.bf16.mxu0 0
    %3313 = vmatpush1.bf16.msra.mxu0 %v2494
    %3314 = vmatprep.subr.bf16.mxu0 0
    %3315 = vmatpush1.bf16.msra.mxu0 %v2495
    %3316 = vmatprep.subr.bf16.mxu0 0
    %3317 = vmatpush1.bf16.msra.mxu0 %v2496
    %3318 = vmatprep.subr.bf16.mxu0 0
    %3319 = vmatpush1.bf16.msra.mxu0 %v2497
    %3320 = vmatprep.subr.bf16.mxu0 0
    %3321 = vmatpush1.bf16.msra.mxu0 %v2498
    %3322 = vmatprep.subr.bf16.mxu0 0
    %3323 = vmatpush1.bf16.msra.mxu0 %v2499
    %3324 = vmatprep.subr.bf16.mxu0 0
    %3325 = vmatpush1.bf16.msra.mxu0 %v2500
    %3326 = vmatprep.subr.bf16.mxu0 0
    %3327 = vmatpush1.bf16.msra.mxu0 %v2501
    %3328 = vmatprep.subr.bf16.mxu0 0
    %3329 = vmatpush1.bf16.msra.mxu0 %v2502
    %3330 = vmatprep.subr.bf16.mxu0 0
    %3331 = vmatpush1.bf16.msra.mxu0 %v2503
    %3332 = vmatprep.subr.bf16.mxu0 0
    %3333 = vmatpush1.bf16.msra.mxu0 %v2504
    %3334 = vmatprep.subr.bf16.mxu0 0
    %3335 = vmatpush1.bf16.msra.mxu0 %v2505
    %3336 = vmatprep.subr.bf16.mxu0 0
    %3337 = vmatpush1.bf16.msra.mxu0 %v2506
    %3338 = vmatprep.subr.bf16.mxu0 0
    %3339 = vmatpush1.bf16.msra.mxu0 %v2507
    %3340 = vmatprep.mubr.bf16.mxu0 %v106
    %3341 = vmatmul.mubr.bf16.gmra.mrb[0].mxu0 %v105
    %v3342 = vpop.f32.mrb[0].mxu0
    %v3343 = vadd.f32 %v3303, %v3342
    %v3344 = vpop.f32.mrb[0].mxu0
    %v3345 = vpop.f32.mrb[0].mxu0
    %v3346 = vpop.f32.mrb[0].mxu0
    %3347 = vdwg.mxu0
    %3348 = vmatprep.subr.bf16.mxu0 0
    %3349 = vmatpush1.bf16.msra.mxu0 %v2508
    %3350 = vmatprep.subr.bf16.mxu0 0
    %3351 = vmatpush1.bf16.msra.mxu0 %v2509
    %3352 = vmatprep.subr.bf16.mxu0 0
    %3353 = vmatpush1.bf16.msra.mxu0 %v2510
    %3354 = vmatprep.subr.bf16.mxu0 0
    %3355 = vmatpush1.bf16.msra.mxu0 %v2511
    %3356 = vmatprep.subr.bf16.mxu0 0
    %3357 = vmatpush1.bf16.msra.mxu0 %v2512
    %3358 = vmatprep.subr.bf16.mxu0 0
    %3359 = vmatpush1.bf16.msra.mxu0 %v2513
    %3360 = vmatprep.subr.bf16.mxu0 0
    %3361 = vmatpush1.bf16.msra.mxu0 %v2514
    %3362 = vmatprep.subr.bf16.mxu0 0
    %3363 = vmatpush1.bf16.msra.mxu0 %v2515
    %3364 = vmatprep.subr.bf16.mxu0 0
    %3365 = vmatpush1.bf16.msra.mxu0 %v2516
    %3366 = vmatprep.subr.bf16.mxu0 0
    %3367 = vmatpush1.bf16.msra.mxu0 %v2517
    %3368 = vmatprep.subr.bf16.mxu0 0
    %3369 = vmatpush1.bf16.msra.mxu0 %v2518
    %3370 = vmatprep.subr.bf16.mxu0 0
    %3371 = vmatpush1.bf16.msra.mxu0 %v2519
    %3372 = vmatprep.subr.bf16.mxu0 0
    %3373 = vmatpush1.bf16.msra.mxu0 %v2520
    %3374 = vmatprep.subr.bf16.mxu0 0
    %3375 = vmatpush1.bf16.msra.mxu0 %v2521
    %3376 = vmatprep.subr.bf16.mxu0 0
    %3377 = vmatpush1.bf16.msra.mxu0 %v2522
    %3378 = vmatprep.subr.bf16.mxu0 0
    %3379 = vmatpush1.bf16.msra.mxu0 %v2523
    %3380 = vmatprep.mubr.bf16.mxu0 %v108
    %3381 = vmatmul.mubr.bf16.gmra.mrb[0].mxu0 %v107
    %v3382 = vpop.f32.mrb[0].mxu0
    %v3383 = vadd.f32 %v3343, %v3382
    %v3384 = vpop.f32.mrb[0].mxu0
    %v3385 = vpop.f32.mrb[0].mxu0
    %v3386 = vpop.f32.mrb[0].mxu0
    %3387 = vdwg.mxu0
    %3388 = vmatprep.subr.bf16.mxu0 0
    %3389 = vmatpush1.bf16.msra.mxu0 %v2524
    %3390 = vmatprep.subr.bf16.mxu0 0
    %3391 = vmatpush1.bf16.msra.mxu0 %v2525
    %3392 = vmatprep.subr.bf16.mxu0 0
    %3393 = vmatpush1.bf16.msra.mxu0 %v2526
    %3394 = vmatprep.subr.bf16.mxu0 0
    %3395 = vmatpush1.bf16.msra.mxu0 %v2527
    %3396 = vmatprep.subr.bf16.mxu0 0
    %3397 = vmatpush1.bf16.msra.mxu0 %v2528
    %3398 = vmatprep.subr.bf16.mxu0 0
    %3399 = vmatpush1.bf16.msra.mxu0 %v2529
    %3400 = vmatprep.subr.bf16.mxu0 0
    %3401 = vmatpush1.bf16.msra.mxu0 %v2530
    %3402 = vmatprep.subr.bf16.mxu0 0
    %3403 = vmatpush1.bf16.msra.mxu0 %v2531
    %3404 = vmatprep.subr.bf16.mxu0 0
    %3405 = vmatpush1.bf16.msra.mxu0 %v2532
    %3406 = vmatprep.subr.bf16.mxu0 0
    %3407 = vmatpush1.bf16.msra.mxu0 %v2533
    %3408 = vmatprep.subr.bf16.mxu0 0
    %3409 = vmatpush1.bf16.msra.mxu0 %v2534
    %3410 = vmatprep.subr.bf16.mxu0 0
    %3411 = vmatpush1.bf16.msra.mxu0 %v2535
    %3412 = vmatprep.subr.bf16.mxu0 0
    %3413 = vmatpush1.bf16.msra.mxu0 %v2536
    %3414 = vmatprep.subr.bf16.mxu0 0
    %3415 = vmatpush1.bf16.msra.mxu0 %v2537
    %3416 = vmatprep.subr.bf16.mxu0 0
    %3417 = vmatpush1.bf16.msra.mxu0 %v2538
    %3418 = vmatprep.subr.bf16.mxu0 0
    %3419 = vmatpush1.bf16.msra.mxu0 %v2539
    %3420 = vmatprep.mubr.bf16.mxu0 %v110
    %3421 = vmatmul.mubr.bf16.gmra.mrb[0].mxu0 %v109
    %v3422 = vpop.f32.mrb[0].mxu0
    %v3423 = vadd.f32 %v3383, %v3422
    %v3424 = vpop.f32.mrb[0].mxu0
    %v3425 = vpop.f32.mrb[0].mxu0
    %v3426 = vpop.f32.mrb[0].mxu0
    %3427 = vdwg.mxu0
    %3428 = vmatprep.subr.bf16.mxu0 0
    %3429 = vmatpush1.bf16.msra.mxu0 %v2540
    %3430 = vmatprep.subr.bf16.mxu0 0
    %3431 = vmatpush1.bf16.msra.mxu0 %v2541
    %3432 = vmatprep.subr.bf16.mxu0 0
    %3433 = vmatpush1.bf16.msra.mxu0 %v2542
    %3434 = vmatprep.subr.bf16.mxu0 0
    %3435 = vmatpush1.bf16.msra.mxu0 %v2543
    %3436 = vmatprep.subr.bf16.mxu0 0
    %3437 = vmatpush1.bf16.msra.mxu0 %v2544
    %3438 = vmatprep.subr.bf16.mxu0 0
    %3439 = vmatpush1.bf16.msra.mxu0 %v2545
    %3440 = vmatprep.subr.bf16.mxu0 0
    %3441 = vmatpush1.bf16.msra.mxu0 %v2546
    %3442 = vmatprep.subr.bf16.mxu0 0
    %3443 = vmatpush1.bf16.msra.mxu0 %v2547
    %3444 = vmatprep.subr.bf16.mxu0 0
    %3445 = vmatpush1.bf16.msra.mxu0 %v2548
    %3446 = vmatprep.subr.bf16.mxu0 0
    %3447 = vmatpush1.bf16.msra.mxu0 %v2549
    %3448 = vmatprep.subr.bf16.mxu0 0
    %3449 = vmatpush1.bf16.msra.mxu0 %v2550
    %3450 = vmatprep.subr.bf16.mxu0 0
    %3451 = vmatpush1.bf16.msra.mxu0 %v2551
    %3452 = vmatprep.subr.bf16.mxu0 0
    %3453 = vmatpush1.bf16.msra.mxu0 %v2552
    %3454 = vmatprep.subr.bf16.mxu0 0
    %3455 = vmatpush1.bf16.msra.mxu0 %v2553
    %3456 = vmatprep.subr.bf16.mxu0 0
    %3457 = vmatpush1.bf16.msra.mxu0 %v2554
    %3458 = vmatprep.subr.bf16.mxu0 0
    %3459 = vmatpush1.bf16.msra.mxu0 %v2555
    %3460 = vmatprep.mubr.bf16.mxu0 %v112
    %3461 = vmatmul.mubr.bf16.gmra.mrb[0].mxu0 %v111
    %v3462 = vpop.f32.mrb[0].mxu0
    %v3463 = vadd.f32 %v3423, %v3462
    %v3464 = vpop.f32.mrb[0].mxu0
    %v3465 = vpop.f32.mrb[0].mxu0
    %v3466 = vpop.f32.mrb[0].mxu0
    %3467 = vdwg.mxu0
    %3468 = vmatprep.subr.bf16.mxu0 0
    %3469 = vmatpush1.bf16.msra.mxu0 %v2556
    %3470 = vmatprep.subr.bf16.mxu0 0
    %3471 = vmatpush1.bf16.msra.mxu0 %v2557
    %3472 = vmatprep.subr.bf16.mxu0 0
    %3473 = vmatpush1.bf16.msra.mxu0 %v2558
    %3474 = vmatprep.subr.bf16.mxu0 0
    %3475 = vmatpush1.bf16.msra.mxu0 %v2559
    %3476 = vmatprep.subr.bf16.mxu0 0
    %3477 = vmatpush1.bf16.msra.mxu0 %v2560
    %3478 = vmatprep.subr.bf16.mxu0 0
    %3479 = vmatpush1.bf16.msra.mxu0 %v2561
    %3480 = vmatprep.subr.bf16.mxu0 0
    %3481 = vmatpush1.bf16.msra.mxu0 %v2562
    %3482 = vmatprep.subr.bf16.mxu0 0
    %3483 = vmatpush1.bf16.msra.mxu0 %v2563
    %3484 = vmatprep.subr.bf16.mxu0 0
    %3485 = vmatpush1.bf16.msra.mxu0 %v2564
    %3486 = vmatprep.subr.bf16.mxu0 0
    %3487 = vmatpush1.bf16.msra.mxu0 %v2565
    %3488 = vmatprep.subr.bf16.mxu0 0
    %3489 = vmatpush1.bf16.msra.mxu0 %v2566
    %3490 = vmatprep.subr.bf16.mxu0 0
    %3491 = vmatpush1.bf16.msra.mxu0 %v2567
    %3492 = vmatprep.subr.bf16.mxu0 0
    %3493 = vmatpush1.bf16.msra.mxu0 %v2568
    %3494 = vmatprep.subr.bf16.mxu0 0
    %3495 = vmatpush1.bf16.msra.mxu0 %v2569
    %3496 = vmatprep.subr.bf16.mxu0 0
    %3497 = vmatpush1.bf16.msra.mxu0 %v2570
    %3498 = vmatprep.subr.bf16.mxu0 0
    %3499 = vmatpush1.bf16.msra.mxu0 %v2571
    %3500 = vmatprep.mubr.bf16.mxu0 %v114
    %3501 = vmatmul.mubr.bf16.gmra.mrb[0].mxu0 %v113
    %v3502 = vpop.f32.mrb[0].mxu0
    %v3503 = vadd.f32 %v3463, %v3502
    %v3504 = vpop.f32.mrb[0].mxu0
    %v3505 = vpop.f32.mrb[0].mxu0
    %v3506 = vpop.f32.mrb[0].mxu0
    %3507 = vdwg.mxu0
    %3508 = vmatprep.subr.bf16.mxu0 0
    %3509 = vmatpush1.bf16.msra.mxu0 %v2572
    %3510 = vmatprep.subr.bf16.mxu0 0
    %3511 = vmatpush1.bf16.msra.mxu0 %v2573
    %3512 = vmatprep.subr.bf16.mxu0 0
    %3513 = vmatpush1.bf16.msra.mxu0 %v2574
    %3514 = vmatprep.subr.bf16.mxu0 0
    %3515 = vmatpush1.bf16.msra.mxu0 %v2575
    %3516 = vmatprep.subr.bf16.mxu0 0
    %3517 = vmatpush1.bf16.msra.mxu0 %v2576
    %3518 = vmatprep.subr.bf16.mxu0 0
    %3519 = vmatpush1.bf16.msra.mxu0 %v2577
    %3520 = vmatprep.subr.bf16.mxu0 0
    %3521 = vmatpush1.bf16.msra.mxu0 %v2578
    %3522 = vmatprep.subr.bf16.mxu0 0
    %3523 = vmatpush1.bf16.msra.mxu0 %v2579
    %3524 = vmatprep.subr.bf16.mxu0 0
    %3525 = vmatpush1.bf16.msra.mxu0 %v2580
    %3526 = vmatprep.subr.bf16.mxu0 0
    %3527 = vmatpush1.bf16.msra.mxu0 %v2581
    %3528 = vmatprep.subr.bf16.mxu0 0
    %3529 = vmatpush1.bf16.msra.mxu0 %v2582
    %3530 = vmatprep.subr.bf16.mxu0 0
    %3531 = vmatpush1.bf16.msra.mxu0 %v2583
    %3532 = vmatprep.subr.bf16.mxu0 0
    %3533 = vmatpush1.bf16.msra.mxu0 %v2584
    %3534 = vmatprep.subr.bf16.mxu0 0
    %3535 = vmatpush1.bf16.msra.mxu0 %v2585
    %3536 = vmatprep.subr.bf16.mxu0 0
    %3537 = vmatpush1.bf16.msra.mxu0 %v2586
    %3538 = vmatprep.subr.bf16.mxu0 0
    %3539 = vmatpush1.bf16.msra.mxu0 %v2587
    %3540 = vmatprep.mubr.bf16.mxu0 %v116
    %3541 = vmatmul.mubr.bf16.gmra.mrb[0].mxu0 %v115
    %v3542 = vpop.f32.mrb[0].mxu0
    %v3543 = vadd.f32 %v3503, %v3542
    %v3544 = vpop.f32.mrb[0].mxu0
    %v3545 = vpop.f32.mrb[0].mxu0
    %v3546 = vpop.f32.mrb[0].mxu0
    %3547 = vdwg.mxu0
    %3548 = vmatprep.subr.bf16.mxu0 0
    %3549 = vmatpush1.bf16.msra.mxu0 %v2588
    %3550 = vmatprep.subr.bf16.mxu0 0
    %3551 = vmatpush1.bf16.msra.mxu0 %v2589
    %3552 = vmatprep.subr.bf16.mxu0 0
    %3553 = vmatpush1.bf16.msra.mxu0 %v2590
    %3554 = vmatprep.subr.bf16.mxu0 0
    %3555 = vmatpush1.bf16.msra.mxu0 %v2591
    %3556 = vmatprep.subr.bf16.mxu0 0
    %3557 = vmatpush1.bf16.msra.mxu0 %v2592
    %3558 = vmatprep.subr.bf16.mxu0 0
    %3559 = vmatpush1.bf16.msra.mxu0 %v2593
    %3560 = vmatprep.subr.bf16.mxu0 0
    %3561 = vmatpush1.bf16.msra.mxu0 %v2594
    %3562 = vmatprep.subr.bf16.mxu0 0
    %3563 = vmatpush1.bf16.msra.mxu0 %v2595
    %3564 = vmatprep.subr.bf16.mxu0 0
    %3565 = vmatpush1.bf16.msra.mxu0 %v2596
    %3566 = vmatprep.subr.bf16.mxu0 0
    %3567 = vmatpush1.bf16.msra.mxu0 %v2597
    %3568 = vmatprep.subr.bf16.mxu0 0
    %3569 = vmatpush1.bf16.msra.mxu0 %v2598
    %3570 = vmatprep.subr.bf16.mxu0 0
    %3571 = vmatpush1.bf16.msra.mxu0 %v2599
    %3572 = vmatprep.subr.bf16.mxu0 0
    %3573 = vmatpush1.bf16.msra.mxu0 %v2600
    %3574 = vmatprep.subr.bf16.mxu0 0
    %3575 = vmatpush1.bf16.msra.mxu0 %v2601
    %3576 = vmatprep.subr.bf16.mxu0 0
    %3577 = vmatpush1.bf16.msra.mxu0 %v2602
    %3578 = vmatprep.subr.bf16.mxu0 0
    %3579 = vmatpush1.bf16.msra.mxu0 %v2603
    %3580 = vmatprep.mubr.bf16.mxu0 %v118
    %3581 = vmatmul.mubr.bf16.gmra.mrb[0].mxu0 %v117
    %v3582 = vpop.f32.mrb[0].mxu0
    %v3583 = vadd.f32 %v3543, %v3582
    %v3584 = vpop.f32.mrb[0].mxu0
    %v3585 = vpop.f32.mrb[0].mxu0
    %v3586 = vpop.f32.mrb[0].mxu0
    %3587 = vdwg.mxu0
    %3588 = vmatprep.subr.bf16.mxu0 0
    %3589 = vmatpush1.bf16.msra.mxu0 %v2604
    %3590 = vmatprep.subr.bf16.mxu0 0
    %3591 = vmatpush1.bf16.msra.mxu0 %v2605
    %3592 = vmatprep.subr.bf16.mxu0 0
    %3593 = vmatpush1.bf16.msra.mxu0 %v2606
    %3594 = vmatprep.subr.bf16.mxu0 0
    %3595 = vmatpush1.bf16.msra.mxu0 %v2607
    %3596 = vmatprep.subr.bf16.mxu0 0
    %3597 = vmatpush1.bf16.msra.mxu0 %v2608
    %3598 = vmatprep.subr.bf16.mxu0 0
    %3599 = vmatpush1.bf16.msra.mxu0 %v2609
    %3600 = vmatprep.subr.bf16.mxu0 0
    %3601 = vmatpush1.bf16.msra.mxu0 %v2610
    %3602 = vmatprep.subr.bf16.mxu0 0
    %3603 = vmatpush1.bf16.msra.mxu0 %v2611
    %3604 = vmatprep.subr.bf16.mxu0 0
    %3605 = vmatpush1.bf16.msra.mxu0 %v2612
    %3606 = vmatprep.subr.bf16.mxu0 0
    %3607 = vmatpush1.bf16.msra.mxu0 %v2613
    %3608 = vmatprep.subr.bf16.mxu0 0
    %3609 = vmatpush1.bf16.msra.mxu0 %v2614
    %3610 = vmatprep.subr.bf16.mxu0 0
    %3611 = vmatpush1.bf16.msra.mxu0 %v2615
    %3612 = vmatprep.subr.bf16.mxu0 0
    %3613 = vmatpush1.bf16.msra.mxu0 %v2616
    %3614 = vmatprep.subr.bf16.mxu0 0
    %3615 = vmatpush1.bf16.msra.mxu0 %v2617
    %3616 = vmatprep.subr.bf16.mxu0 0
    %3617 = vmatpush1.bf16.msra.mxu0 %v2618
    %3618 = vmatprep.subr.bf16.mxu0 0
    %3619 = vmatpush1.bf16.msra.mxu0 %v2619
    %3620 = vmatprep.mubr.bf16.mxu0 %v120
    %3621 = vmatmul.mubr.bf16.gmra.mrb[0].mxu0 %v119
    %v3622 = vpop.f32.mrb[0].mxu0
    %v3623 = vadd.f32 %v3583, %v3622
    %v3624 = vpop.f32.mrb[0].mxu0
    %v3625 = vpop.f32.mrb[0].mxu0
    %v3626 = vpop.f32.mrb[0].mxu0
    %3627 = vdwg.mxu0
    %3628 = vmatprep.subr.bf16.mxu0 0
    %3629 = vmatpush1.bf16.msra.mxu0 %v2620
    %3630 = vmatprep.subr.bf16.mxu0 0
    %3631 = vmatpush1.bf16.msra.mxu0 %v2621
    %3632 = vmatprep.subr.bf16.mxu0 0
    %3633 = vmatpush1.bf16.msra.mxu0 %v2622
    %3634 = vmatprep.subr.bf16.mxu0 0
    %3635 = vmatpush1.bf16.msra.mxu0 %v2623
    %3636 = vmatprep.subr.bf16.mxu0 0
    %3637 = vmatpush1.bf16.msra.mxu0 %v2624
    %3638 = vmatprep.subr.bf16.mxu0 0
    %3639 = vmatpush1.bf16.msra.mxu0 %v2625
    %3640 = vmatprep.subr.bf16.mxu0 0
    %3641 = vmatpush1.bf16.msra.mxu0 %v2626
    %3642 = vmatprep.subr.bf16.mxu0 0
    %3643 = vmatpush1.bf16.msra.mxu0 %v2627
    %3644 = vmatprep.subr.bf16.mxu0 0
    %3645 = vmatpush1.bf16.msra.mxu0 %v2628
    %3646 = vmatprep.subr.bf16.mxu0 0
    %3647 = vmatpush1.bf16.msra.mxu0 %v2629
    %3648 = vmatprep.subr.bf16.mxu0 0
    %3649 = vmatpush1.bf16.msra.mxu0 %v2630
    %3650 = vmatprep.subr.bf16.mxu0 0
    %3651 = vmatpush1.bf16.msra.mxu0 %v2631
    %3652 = vmatprep.subr.bf16.mxu0 0
    %3653 = vmatpush1.bf16.msra.mxu0 %v2632
    %3654 = vmatprep.subr.bf16.mxu0 0
    %3655 = vmatpush1.bf16.msra.mxu0 %v2633
    %3656 = vmatprep.subr.bf16.mxu0 0
    %3657 = vmatpush1.bf16.msra.mxu0 %v2634
    %3658 = vmatprep.subr.bf16.mxu0 0
    %3659 = vmatpush1.bf16.msra.mxu0 %v2635
    %3660 = vmatprep.mubr.bf16.mxu0 %v122
    %3661 = vmatmul.mubr.bf16.gmra.mrb[0].mxu0 %v121
    %v3662 = vpop.f32.mrb[0].mxu0
    %v3663 = vadd.f32 %v3623, %v3662
    %v3664 = vpop.f32.mrb[0].mxu0
    %v3665 = vpop.f32.mrb[0].mxu0
    %v3666 = vpop.f32.mrb[0].mxu0
    %3667 = vdwg.mxu0
    %3668 = vmatprep.subr.bf16.mxu0 0
    %3669 = vmatpush1.bf16.msra.mxu0 %v2636
    %3670 = vmatprep.subr.bf16.mxu0 0
    %3671 = vmatpush1.bf16.msra.mxu0 %v2637
    %3672 = vmatprep.subr.bf16.mxu0 0
    %3673 = vmatpush1.bf16.msra.mxu0 %v2638
    %3674 = vmatprep.subr.bf16.mxu0 0
    %3675 = vmatpush1.bf16.msra.mxu0 %v2639
    %3676 = vmatprep.subr.bf16.mxu0 0
    %3677 = vmatpush1.bf16.msra.mxu0 %v2640
    %3678 = vmatprep.subr.bf16.mxu0 0
    %3679 = vmatpush1.bf16.msra.mxu0 %v2641
    %3680 = vmatprep.subr.bf16.mxu0 0
    %3681 = vmatpush1.bf16.msra.mxu0 %v2642
    %3682 = vmatprep.subr.bf16.mxu0 0
    %3683 = vmatpush1.bf16.msra.mxu0 %v2643
    %3684 = vmatprep.subr.bf16.mxu0 0
    %3685 = vmatpush1.bf16.msra.mxu0 %v2644
    %3686 = vmatprep.subr.bf16.mxu0 0
    %3687 = vmatpush1.bf16.msra.mxu0 %v2645
    %3688 = vmatprep.subr.bf16.mxu0 0
    %3689 = vmatpush1.bf16.msra.mxu0 %v2646
    %3690 = vmatprep.subr.bf16.mxu0 0
    %3691 = vmatpush1.bf16.msra.mxu0 %v2647
    %3692 = vmatprep.subr.bf16.mxu0 0
    %3693 = vmatpush1.bf16.msra.mxu0 %v2648
    %3694 = vmatprep.subr.bf16.mxu0 0
    %3695 = vmatpush1.bf16.msra.mxu0 %v2649
    %3696 = vmatprep.subr.bf16.mxu0 0
    %3697 = vmatpush1.bf16.msra.mxu0 %v2650
    %3698 = vmatprep.subr.bf16.mxu0 0
    %3699 = vmatpush1.bf16.msra.mxu0 %v2651
    %3700 = vmatprep.mubr.bf16.mxu0 %v124
    %3701 = vmatmul.mubr.bf16.gmra.mrb[0].mxu0 %v123
    %v3702 = vpop.f32.mrb[0].mxu0
    %v3703 = vadd.f32 %v3663, %v3702
    %v3704 = vpop.f32.mrb[0].mxu0
    %v3705 = vpop.f32.mrb[0].mxu0
    %v3706 = vpop.f32.mrb[0].mxu0
    %3707 = vdwg.mxu0
    %3708 = vmatprep.subr.bf16.mxu0 0
    %3709 = vmatpush1.bf16.msra.mxu0 %v2652
    %3710 = vmatprep.subr.bf16.mxu0 0
    %3711 = vmatpush1.bf16.msra.mxu0 %v2653
    %3712 = vmatprep.subr.bf16.mxu0 0
    %3713 = vmatpush1.bf16.msra.mxu0 %v2654
    %3714 = vmatprep.subr.bf16.mxu0 0
    %3715 = vmatpush1.bf16.msra.mxu0 %v2655
    %3716 = vmatprep.subr.bf16.mxu0 0
    %3717 = vmatpush1.bf16.msra.mxu0 %v2656
    %3718 = vmatprep.subr.bf16.mxu0 0
    %3719 = vmatpush1.bf16.msra.mxu0 %v2657
    %3720 = vmatprep.subr.bf16.mxu0 0
    %3721 = vmatpush1.bf16.msra.mxu0 %v2658
    %3722 = vmatprep.subr.bf16.mxu0 0
    %3723 = vmatpush1.bf16.msra.mxu0 %v2659
    %3724 = vmatprep.subr.bf16.mxu0 0
    %3725 = vmatpush1.bf16.msra.mxu0 %v2660
    %3726 = vmatprep.subr.bf16.mxu0 0
    %3727 = vmatpush1.bf16.msra.mxu0 %v2661
    %3728 = vmatprep.subr.bf16.mxu0 0
    %3729 = vmatpush1.bf16.msra.mxu0 %v2662
    %3730 = vmatprep.subr.bf16.mxu0 0
    %3731 = vmatpush1.bf16.msra.mxu0 %v2663
    %3732 = vmatprep.subr.bf16.mxu0 0
    %3733 = vmatpush1.bf16.msra.mxu0 %v2664
    %3734 = vmatprep.subr.bf16.mxu0 0
    %3735 = vmatpush1.bf16.msra.mxu0 %v2665
    %3736 = vmatprep.subr.bf16.mxu0 0
    %3737 = vmatpush1.bf16.msra.mxu0 %v2666
    %3738 = vmatprep.subr.bf16.mxu0 0
    %3739 = vmatpush1.bf16.msra.mxu0 %v2667
    %3740 = vmatprep.mubr.bf16.mxu0 %v126
    %3741 = vmatmul.mubr.bf16.gmra.mrb[0].mxu0 %v125
    %v3742 = vpop.f32.mrb[0].mxu0
    %v3743 = vadd.f32 %v3703, %v3742
    %v3744 = vpop.f32.mrb[0].mxu0
    %v3745 = vpop.f32.mrb[0].mxu0
    %v3746 = vpop.f32.mrb[0].mxu0
    %3747 = vdwg.mxu0
    %3748 = vmatprep.subr.bf16.mxu0 0
    %3749 = vmatpush1.bf16.msra.mxu0 %v2668
    %3750 = vmatprep.subr.bf16.mxu0 0
    %3751 = vmatpush1.bf16.msra.mxu0 %v2669
    %3752 = vmatprep.subr.bf16.mxu0 0
    %3753 = vmatpush1.bf16.msra.mxu0 %v2670
    %3754 = vmatprep.subr.bf16.mxu0 0
    %3755 = vmatpush1.bf16.msra.mxu0 %v2671
    %3756 = vmatprep.subr.bf16.mxu0 0
    %3757 = vmatpush1.bf16.msra.mxu0 %v2672
    %3758 = vmatprep.subr.bf16.mxu0 0
    %3759 = vmatpush1.bf16.msra.mxu0 %v2673
    %3760 = vmatprep.subr.bf16.mxu0 0
    %3761 = vmatpush1.bf16.msra.mxu0 %v2674
    %3762 = vmatprep.subr.bf16.mxu0 0
    %3763 = vmatpush1.bf16.msra.mxu0 %v2675
    %3764 = vmatprep.subr.bf16.mxu0 0
    %3765 = vmatpush1.bf16.msra.mxu0 %v2676
    %3766 = vmatprep.subr.bf16.mxu0 0
    %3767 = vmatpush1.bf16.msra.mxu0 %v2677
    %3768 = vmatprep.subr.bf16.mxu0 0
    %3769 = vmatpush1.bf16.msra.mxu0 %v2678
    %3770 = vmatprep.subr.bf16.mxu0 0
    %3771 = vmatpush1.bf16.msra.mxu0 %v2679
    %3772 = vmatprep.subr.bf16.mxu0 0
    %3773 = vmatpush1.bf16.msra.mxu0 %v2680
    %3774 = vmatprep.subr.bf16.mxu0 0
    %3775 = vmatpush1.bf16.msra.mxu0 %v2681
    %3776 = vmatprep.subr.bf16.mxu0 0
    %3777 = vmatpush1.bf16.msra.mxu0 %v2682
    %3778 = vmatprep.subr.bf16.mxu0 0
    %3779 = vmatpush1.bf16.msra.mxu0 %v2683
    %3780 = vmatprep.mubr.bf16.mxu0 %v128
    %3781 = vmatmul.mubr.bf16.gmra.mrb[0].mxu0 %v127
    %v3782 = vpop.f32.mrb[0].mxu0
    %v3783 = vadd.f32 %v3743, %v3782
    %v3784 = vpop.f32.mrb[0].mxu0
    %v3785 = vpop.f32.mrb[0].mxu0
    %v3786 = vpop.f32.mrb[0].mxu0
    %3787 = vdwg.mxu0
    %3788 = vmatprep.subr.bf16.mxu0 0
    %3789 = vmatpush1.bf16.msra.mxu0 %v2684
    %3790 = vmatprep.subr.bf16.mxu0 0
    %3791 = vmatpush1.bf16.msra.mxu0 %v2685
    %3792 = vmatprep.subr.bf16.mxu0 0
    %3793 = vmatpush1.bf16.msra.mxu0 %v2686
    %3794 = vmatprep.subr.bf16.mxu0 0
    %3795 = vmatpush1.bf16.msra.mxu0 %v2687
    %3796 = vmatprep.subr.bf16.mxu0 0
    %3797 = vmatpush1.bf16.msra.mxu0 %v2688
    %3798 = vmatprep.subr.bf16.mxu0 0
    %3799 = vmatpush1.bf16.msra.mxu0 %v2689
    %3800 = vmatprep.subr.bf16.mxu0 0
    %3801 = vmatpush1.bf16.msra.mxu0 %v2690
    %3802 = vmatprep.subr.bf16.mxu0 0
    %3803 = vmatpush1.bf16.msra.mxu0 %v2691
    %3804 = vmatprep.subr.bf16.mxu0 0
    %3805 = vmatpush1.bf16.msra.mxu0 %v2692
    %3806 = vmatprep.subr.bf16.mxu0 0
    %3807 = vmatpush1.bf16.msra.mxu0 %v2693
    %3808 = vmatprep.subr.bf16.mxu0 0
    %3809 = vmatpush1.bf16.msra.mxu0 %v2694
    %3810 = vmatprep.subr.bf16.mxu0 0
    %3811 = vmatpush1.bf16.msra.mxu0 %v2695
    %3812 = vmatprep.subr.bf16.mxu0 0
    %3813 = vmatpush1.bf16.msra.mxu0 %v2696
    %3814 = vmatprep.subr.bf16.mxu0 0
    %3815 = vmatpush1.bf16.msra.mxu0 %v2697
    %3816 = vmatprep.subr.bf16.mxu0 0
    %3817 = vmatpush1.bf16.msra.mxu0 %v2698
    %3818 = vmatprep.subr.bf16.mxu0 0
    %3819 = vmatpush1.bf16.msra.mxu0 %v2699
    %3820 = vmatprep.mubr.bf16.mxu0 %v130
    %3821 = vmatmul.mubr.bf16.gmra.mrb[0].mxu0 %v129
    %v3822 = vpop.f32.mrb[0].mxu0
    %v3823 = vadd.f32 %v3783, %v3822
    %v3824 = vpop.f32.mrb[0].mxu0
    %v3825 = vpop.f32.mrb[0].mxu0
    %v3826 = vpop.f32.mrb[0].mxu0
    %3827 = vdwg.mxu0
    %3828 = vmatprep.subr.bf16.mxu0 0
    %3829 = vmatpush1.bf16.msra.mxu0 %v2700
    %3830 = vmatprep.subr.bf16.mxu0 0
    %3831 = vmatpush1.bf16.msra.mxu0 %v2701
    %3832 = vmatprep.subr.bf16.mxu0 0
    %3833 = vmatpush1.bf16.msra.mxu0 %v2702
    %3834 = vmatprep.subr.bf16.mxu0 0
    %3835 = vmatpush1.bf16.msra.mxu0 %v2703
    %3836 = vmatprep.subr.bf16.mxu0 0
    %3837 = vmatpush1.bf16.msra.mxu0 %v2704
    %3838 = vmatprep.subr.bf16.mxu0 0
    %3839 = vmatpush1.bf16.msra.mxu0 %v2705
    %3840 = vmatprep.subr.bf16.mxu0 0
    %3841 = vmatpush1.bf16.msra.mxu0 %v2706
    %3842 = vmatprep.subr.bf16.mxu0 0
    %3843 = vmatpush1.bf16.msra.mxu0 %v2707
    %3844 = vmatprep.subr.bf16.mxu0 0
    %3845 = vmatpush1.bf16.msra.mxu0 %v2708
    %3846 = vmatprep.subr.bf16.mxu0 0
    %3847 = vmatpush1.bf16.msra.mxu0 %v2709
    %3848 = vmatprep.subr.bf16.mxu0 0
    %3849 = vmatpush1.bf16.msra.mxu0 %v2710
    %3850 = vmatprep.subr.bf16.mxu0 0
    %3851 = vmatpush1.bf16.msra.mxu0 %v2711
    %3852 = vmatprep.subr.bf16.mxu0 0
    %3853 = vmatpush1.bf16.msra.mxu0 %v2712
    %3854 = vmatprep.subr.bf16.mxu0 0
    %3855 = vmatpush1.bf16.msra.mxu0 %v2713
    %3856 = vmatprep.subr.bf16.mxu0 0
    %3857 = vmatpush1.bf16.msra.mxu0 %v2714
    %3858 = vmatprep.subr.bf16.mxu0 0
    %3859 = vmatpush1.bf16.msra.mxu0 %v2715
    %3860 = vmatprep.mubr.bf16.mxu0 %v132
    %3861 = vmatmul.mubr.bf16.gmra.mrb[0].mxu0 %v131
    %v3862 = vpop.f32.mrb[0].mxu0
    %v3863 = vadd.f32 %v3823, %v3862
    %v3864 = vpop.f32.mrb[0].mxu0
    %v3865 = vpop.f32.mrb[0].mxu0
    %v3866 = vpop.f32.mrb[0].mxu0
    %3867 = vdwg.mxu0
    %3868 = vmatprep.subr.bf16.mxu0 0
    %3869 = vmatpush1.bf16.msra.mxu0 %v2716
    %3870 = vmatprep.subr.bf16.mxu0 0
    %3871 = vmatpush1.bf16.msra.mxu0 %v2717
    %3872 = vmatprep.subr.bf16.mxu0 0
    %3873 = vmatpush1.bf16.msra.mxu0 %v2718
    %3874 = vmatprep.subr.bf16.mxu0 0
    %3875 = vmatpush1.bf16.msra.mxu0 %v2719
    %3876 = vmatprep.subr.bf16.mxu0 0
    %3877 = vmatpush1.bf16.msra.mxu0 %v2720
    %3878 = vmatprep.subr.bf16.mxu0 0
    %3879 = vmatpush1.bf16.msra.mxu0 %v2721
    %3880 = vmatprep.subr.bf16.mxu0 0
    %3881 = vmatpush1.bf16.msra.mxu0 %v2722
    %3882 = vmatprep.subr.bf16.mxu0 0
    %3883 = vmatpush1.bf16.msra.mxu0 %v2723
    %3884 = vmatprep.subr.bf16.mxu0 0
    %3885 = vmatpush1.bf16.msra.mxu0 %v2724
    %3886 = vmatprep.subr.bf16.mxu0 0
    %3887 = vmatpush1.bf16.msra.mxu0 %v2725
    %3888 = vmatprep.subr.bf16.mxu0 0
    %3889 = vmatpush1.bf16.msra.mxu0 %v2726
    %3890 = vmatprep.subr.bf16.mxu0 0
    %3891 = vmatpush1.bf16.msra.mxu0 %v2727
    %3892 = vmatprep.subr.bf16.mxu0 0
    %3893 = vmatpush1.bf16.msra.mxu0 %v2728
    %3894 = vmatprep.subr.bf16.mxu0 0
    %3895 = vmatpush1.bf16.msra.mxu0 %v2729
    %3896 = vmatprep.subr.bf16.mxu0 0
    %3897 = vmatpush1.bf16.msra.mxu0 %v2730
    %3898 = vmatprep.subr.bf16.mxu0 0
    %3899 = vmatpush1.bf16.msra.mxu0 %v2731
    %3900 = vmatprep.mubr.bf16.mxu0 %v134
    %3901 = vmatmul.mubr.bf16.gmra.mrb[0].mxu0 %v133
    %v3902 = vpop.f32.mrb[0].mxu0
    %v3903 = vadd.f32 %v3863, %v3902
    %v3904 = vpop.f32.mrb[0].mxu0
    %v3905 = vpop.f32.mrb[0].mxu0
    %v3906 = vpop.f32.mrb[0].mxu0
    %3907 = vdwg.mxu0
    %3908 = vmatprep.subr.bf16.mxu0 0
    %3909 = vmatpush1.bf16.msra.mxu0 %v2732
    %3910 = vmatprep.subr.bf16.mxu0 0
    %3911 = vmatpush1.bf16.msra.mxu0 %v2733
    %3912 = vmatprep.subr.bf16.mxu0 0
    %3913 = vmatpush1.bf16.msra.mxu0 %v2734
    %3914 = vmatprep.subr.bf16.mxu0 0
    %3915 = vmatpush1.bf16.msra.mxu0 %v2735
    %3916 = vmatprep.subr.bf16.mxu0 0
    %3917 = vmatpush1.bf16.msra.mxu0 %v2736
    %3918 = vmatprep.subr.bf16.mxu0 0
    %3919 = vmatpush1.bf16.msra.mxu0 %v2737
    %3920 = vmatprep.subr.bf16.mxu0 0
    %3921 = vmatpush1.bf16.msra.mxu0 %v2738
    %3922 = vmatprep.subr.bf16.mxu0 0
    %3923 = vmatpush1.bf16.msra.mxu0 %v2739
    %3924 = vmatprep.subr.bf16.mxu0 0
    %3925 = vmatpush1.bf16.msra.mxu0 %v2740
    %3926 = vmatprep.subr.bf16.mxu0 0
    %3927 = vmatpush1.bf16.msra.mxu0 %v2741
    %3928 = vmatprep.subr.bf16.mxu0 0
    %3929 = vmatpush1.bf16.msra.mxu0 %v2742
    %3930 = vmatprep.subr.bf16.mxu0 0
    %3931 = vmatpush1.bf16.msra.mxu0 %v2743
    %3932 = vmatprep.subr.bf16.mxu0 0
    %3933 = vmatpush1.bf16.msra.mxu0 %v2744
    %3934 = vmatprep.subr.bf16.mxu0 0
    %3935 = vmatpush1.bf16.msra.mxu0 %v2745
    %3936 = vmatprep.subr.bf16.mxu0 0
    %3937 = vmatpush1.bf16.msra.mxu0 %v2746
    %3938 = vmatprep.subr.bf16.mxu0 0
    %3939 = vmatpush1.bf16.msra.mxu0 %v2747
    %3940 = vmatprep.mubr.bf16.mxu0 %v136
    %3941 = vmatmul.mubr.bf16.gmra.mrb[0].mxu0 %v135
    %v3942 = vpop.f32.mrb[0].mxu0
    %v3943 = vadd.f32 %v3903, %v3942
    %v3944 = vpop.f32.mrb[0].mxu0
    %v3945 = vpop.f32.mrb[0].mxu0
    %v3946 = vpop.f32.mrb[0].mxu0
    %3947 = vdwg.mxu0
    %3948 = vmatprep.subr.bf16.mxu0 0
    %3949 = vmatpush1.bf16.msra.mxu0 %v2748
    %3950 = vmatprep.subr.bf16.mxu0 0
    %3951 = vmatpush1.bf16.msra.mxu0 %v2749
    %3952 = vmatprep.subr.bf16.mxu0 0
    %3953 = vmatpush1.bf16.msra.mxu0 %v2750
    %3954 = vmatprep.subr.bf16.mxu0 0
    %3955 = vmatpush1.bf16.msra.mxu0 %v2751
    %3956 = vmatprep.subr.bf16.mxu0 0
    %3957 = vmatpush1.bf16.msra.mxu0 %v2752
    %3958 = vmatprep.subr.bf16.mxu0 0
    %3959 = vmatpush1.bf16.msra.mxu0 %v2753
    %3960 = vmatprep.subr.bf16.mxu0 0
    %3961 = vmatpush1.bf16.msra.mxu0 %v2754
    %3962 = vmatprep.subr.bf16.mxu0 0
    %3963 = vmatpush1.bf16.msra.mxu0 %v2755
    %3964 = vmatprep.subr.bf16.mxu0 0
    %3965 = vmatpush1.bf16.msra.mxu0 %v2756
    %3966 = vmatprep.subr.bf16.mxu0 0
    %3967 = vmatpush1.bf16.msra.mxu0 %v2757
    %3968 = vmatprep.subr.bf16.mxu0 0
    %3969 = vmatpush1.bf16.msra.mxu0 %v2758
    %3970 = vmatprep.subr.bf16.mxu0 0
    %3971 = vmatpush1.bf16.msra.mxu0 %v2759
    %3972 = vmatprep.subr.bf16.mxu0 0
    %3973 = vmatpush1.bf16.msra.mxu0 %v2760
    %3974 = vmatprep.subr.bf16.mxu0 0
    %3975 = vmatpush1.bf16.msra.mxu0 %v2761
    %3976 = vmatprep.subr.bf16.mxu0 0
    %3977 = vmatpush1.bf16.msra.mxu0 %v2762
    %3978 = vmatprep.subr.bf16.mxu0 0
    %3979 = vmatpush1.bf16.msra.mxu0 %v2763
    %3980 = vmatprep.mubr.bf16.mxu0 %v138
    %3981 = vmatmul.mubr.bf16.gmra.mrb[0].mxu0 %v137
    %v3982 = vpop.f32.mrb[0].mxu0
    %v3983 = vadd.f32 %v3943, %v3982
    %v3984 = vpop.f32.mrb[0].mxu0
    %v3985 = vpop.f32.mrb[0].mxu0
    %v3986 = vpop.f32.mrb[0].mxu0
    %3987 = vdwg.mxu0
    %3988 = vmatprep.subr.bf16.mxu0 0
    %3989 = vmatpush1.bf16.msra.mxu0 %v2764
    %3990 = vmatprep.subr.bf16.mxu0 0
    %3991 = vmatpush1.bf16.msra.mxu0 %v2765
    %3992 = vmatprep.subr.bf16.mxu0 0
    %3993 = vmatpush1.bf16.msra.mxu0 %v2766
    %3994 = vmatprep.subr.bf16.mxu0 0
    %3995 = vmatpush1.bf16.msra.mxu0 %v2767
    %3996 = vmatprep.subr.bf16.mxu0 0
    %3997 = vmatpush1.bf16.msra.mxu0 %v2768
    %3998 = vmatprep.subr.bf16.mxu0 0
    %3999 = vmatpush1.bf16.msra.mxu0 %v2769
    %4000 = vmatprep.subr.bf16.mxu0 0
    %4001 = vmatpush1.bf16.msra.mxu0 %v2770
    %4002 = vmatprep.subr.bf16.mxu0 0
    %4003 = vmatpush1.bf16.msra.mxu0 %v2771
    %4004 = vmatprep.subr.bf16.mxu0 0
    %4005 = vmatpush1.bf16.msra.mxu0 %v2772
    %4006 = vmatprep.subr.bf16.mxu0 0
    %4007 = vmatpush1.bf16.msra.mxu0 %v2773
    %4008 = vmatprep.subr.bf16.mxu0 0
    %4009 = vmatpush1.bf16.msra.mxu0 %v2774
    %4010 = vmatprep.subr.bf16.mxu0 0
    %4011 = vmatpush1.bf16.msra.mxu0 %v2775
    %4012 = vmatprep.subr.bf16.mxu0 0
    %4013 = vmatpush1.bf16.msra.mxu0 %v2776
    %4014 = vmatprep.subr.bf16.mxu0 0
    %4015 = vmatpush1.bf16.msra.mxu0 %v2777
    %4016 = vmatprep.subr.bf16.mxu0 0
    %4017 = vmatpush1.bf16.msra.mxu0 %v2778
    %4018 = vmatprep.subr.bf16.mxu0 0
    %4019 = vmatpush1.bf16.msra.mxu0 %v2779
    %4020 = vmatprep.mubr.bf16.mxu0 %v140
    %4021 = vmatmul.mubr.bf16.gmra.mrb[0].mxu0 %v139
    %v4022 = vpop.f32.mrb[0].mxu0
    %v4023 = vadd.f32 %v3983, %v4022
    %v4024 = vpop.f32.mrb[0].mxu0
    %v4025 = vpop.f32.mrb[0].mxu0
    %v4026 = vpop.f32.mrb[0].mxu0
    %4027 = vdwg.mxu0
    %4028 = vmatprep.subr.bf16.mxu0 0
    %4029 = vmatpush1.bf16.msra.mxu0 %v2780
    %4030 = vmatprep.subr.bf16.mxu0 0
    %4031 = vmatpush1.bf16.msra.mxu0 %v2781
    %4032 = vmatprep.subr.bf16.mxu0 0
    %4033 = vmatpush1.bf16.msra.mxu0 %v2782
    %4034 = vmatprep.subr.bf16.mxu0 0
    %4035 = vmatpush1.bf16.msra.mxu0 %v2783
    %4036 = vmatprep.subr.bf16.mxu0 0
    %4037 = vmatpush1.bf16.msra.mxu0 %v2784
    %4038 = vmatprep.subr.bf16.mxu0 0
    %4039 = vmatpush1.bf16.msra.mxu0 %v2785
    %4040 = vmatprep.subr.bf16.mxu0 0
    %4041 = vmatpush1.bf16.msra.mxu0 %v2786
    %4042 = vmatprep.subr.bf16.mxu0 0
    %4043 = vmatpush1.bf16.msra.mxu0 %v2787
    %4044 = vmatprep.subr.bf16.mxu0 0
    %4045 = vmatpush1.bf16.msra.mxu0 %v2788
    %4046 = vmatprep.subr.bf16.mxu0 0
    %4047 = vmatpush1.bf16.msra.mxu0 %v2789
    %4048 = vmatprep.subr.bf16.mxu0 0
    %4049 = vmatpush1.bf16.msra.mxu0 %v2790
    %4050 = vmatprep.subr.bf16.mxu0 0
    %4051 = vmatpush1.bf16.msra.mxu0 %v2791
    %4052 = vmatprep.subr.bf16.mxu0 0
    %4053 = vmatpush1.bf16.msra.mxu0 %v2792
    %4054 = vmatprep.subr.bf16.mxu0 0
    %4055 = vmatpush1.bf16.msra.mxu0 %v2793
    %4056 = vmatprep.subr.bf16.mxu0 0
    %4057 = vmatpush1.bf16.msra.mxu0 %v2794
    %4058 = vmatprep.subr.bf16.mxu0 0
    %4059 = vmatpush1.bf16.msra.mxu0 %v2795
    %4060 = vmatprep.mubr.bf16.mxu0 %v142
    %4061 = vmatmul.mubr.bf16.gmra.mrb[0].mxu0 %v141
    %v4062 = vpop.f32.mrb[0].mxu0
    %v4063 = vadd.f32 %v4023, %v4062
    %v4064 = vpop.f32.mrb[0].mxu0
    %v4065 = vpop.f32.mrb[0].mxu0
    %v4066 = vpop.f32.mrb[0].mxu0
    %4067 = vdwg.mxu0
    %4068 = vmatprep.subr.bf16.mxu0 0
    %4069 = vmatpush1.bf16.msra.mxu0 %v2796
    %4070 = vmatprep.subr.bf16.mxu0 0
    %4071 = vmatpush1.bf16.msra.mxu0 %v2797
    %4072 = vmatprep.subr.bf16.mxu0 0
    %4073 = vmatpush1.bf16.msra.mxu0 %v2798
    %4074 = vmatprep.subr.bf16.mxu0 0
    %4075 = vmatpush1.bf16.msra.mxu0 %v2799
    %4076 = vmatprep.subr.bf16.mxu0 0
    %4077 = vmatpush1.bf16.msra.mxu0 %v2800
    %4078 = vmatprep.subr.bf16.mxu0 0
    %4079 = vmatpush1.bf16.msra.mxu0 %v2801
    %4080 = vmatprep.subr.bf16.mxu0 0
    %4081 = vmatpush1.bf16.msra.mxu0 %v2802
    %4082 = vmatprep.subr.bf16.mxu0 0
    %4083 = vmatpush1.bf16.msra.mxu0 %v2803
    %4084 = vmatprep.subr.bf16.mxu0 0
    %4085 = vmatpush1.bf16.msra.mxu0 %v2804
    %4086 = vmatprep.subr.bf16.mxu0 0
    %4087 = vmatpush1.bf16.msra.mxu0 %v2805
    %4088 = vmatprep.subr.bf16.mxu0 0
    %4089 = vmatpush1.bf16.msra.mxu0 %v2806
    %4090 = vmatprep.subr.bf16.mxu0 0
    %4091 = vmatpush1.bf16.msra.mxu0 %v2807
    %4092 = vmatprep.subr.bf16.mxu0 0
    %4093 = vmatpush1.bf16.msra.mxu0 %v2808
    %4094 = vmatprep.subr.bf16.mxu0 0
    %4095 = vmatpush1.bf16.msra.mxu0 %v2809
    %4096 = vmatprep.subr.bf16.mxu0 0
    %4097 = vmatpush1.bf16.msra.mxu0 %v2810
    %4098 = vmatprep.subr.bf16.mxu0 0
    %4099 = vmatpush1.bf16.msra.mxu0 %v2811
    %4100 = vmatprep.mubr.bf16.mxu0 %v144
    %4101 = vmatmul.mubr.bf16.gmra.mrb[0].mxu0 %v143
    %v4102 = vpop.f32.mrb[0].mxu0
    %v4103 = vadd.f32 %v4063, %v4102
    %v4104 = vpop.f32.mrb[0].mxu0
    %v4105 = vpop.f32.mrb[0].mxu0
    %v4106 = vpop.f32.mrb[0].mxu0
    %4107 = vdwg.mxu0
    %4108 = vmatprep.subr.bf16.mxu0 0
    %4109 = vmatpush1.bf16.msra.mxu0 %v2812
    %4110 = vmatprep.subr.bf16.mxu0 0
    %4111 = vmatpush1.bf16.msra.mxu0 %v2813
    %4112 = vmatprep.subr.bf16.mxu0 0
    %4113 = vmatpush1.bf16.msra.mxu0 %v2814
    %4114 = vmatprep.subr.bf16.mxu0 0
    %4115 = vmatpush1.bf16.msra.mxu0 %v2815
    %4116 = vmatprep.subr.bf16.mxu0 0
    %4117 = vmatpush1.bf16.msra.mxu0 %v2816
    %4118 = vmatprep.subr.bf16.mxu0 0
    %4119 = vmatpush1.bf16.msra.mxu0 %v2817
    %4120 = vmatprep.subr.bf16.mxu0 0
    %4121 = vmatpush1.bf16.msra.mxu0 %v2818
    %4122 = vmatprep.subr.bf16.mxu0 0
    %4123 = vmatpush1.bf16.msra.mxu0 %v2819
    %4124 = vmatprep.subr.bf16.mxu0 0
    %4125 = vmatpush1.bf16.msra.mxu0 %v2820
    %4126 = vmatprep.subr.bf16.mxu0 0
    %4127 = vmatpush1.bf16.msra.mxu0 %v2821
    %4128 = vmatprep.subr.bf16.mxu0 0
    %4129 = vmatpush1.bf16.msra.mxu0 %v2822
    %4130 = vmatprep.subr.bf16.mxu0 0
    %4131 = vmatpush1.bf16.msra.mxu0 %v2823
    %4132 = vmatprep.subr.bf16.mxu0 0
    %4133 = vmatpush1.bf16.msra.mxu0 %v2824
    %4134 = vmatprep.subr.bf16.mxu0 0
    %4135 = vmatpush1.bf16.msra.mxu0 %v2825
    %4136 = vmatprep.subr.bf16.mxu0 0
    %4137 = vmatpush1.bf16.msra.mxu0 %v2826
    %4138 = vmatprep.subr.bf16.mxu0 0
    %4139 = vmatpush1.bf16.msra.mxu0 %v2827
    %4140 = vmatprep.mubr.bf16.mxu0 %v146
    %4141 = vmatmul.mubr.bf16.gmra.mrb[0].mxu0 %v145
    %v4142 = vpop.f32.mrb[0].mxu0
    %v4143 = vadd.f32 %v4103, %v4142
    %v4144 = vpop.f32.mrb[0].mxu0
    %v4145 = vpop.f32.mrb[0].mxu0
    %v4146 = vpop.f32.mrb[0].mxu0
    %4147 = vdwg.mxu0
    %4148 = vmatprep.subr.bf16.mxu0 0
    %4149 = vmatpush1.bf16.msra.mxu0 %v2828
    %4150 = vmatprep.subr.bf16.mxu0 0
    %4151 = vmatpush1.bf16.msra.mxu0 %v2829
    %4152 = vmatprep.subr.bf16.mxu0 0
    %4153 = vmatpush1.bf16.msra.mxu0 %v2830
    %4154 = vmatprep.subr.bf16.mxu0 0
    %4155 = vmatpush1.bf16.msra.mxu0 %v2831
    %4156 = vmatprep.subr.bf16.mxu0 0
    %4157 = vmatpush1.bf16.msra.mxu0 %v2832
    %4158 = vmatprep.subr.bf16.mxu0 0
    %4159 = vmatpush1.bf16.msra.mxu0 %v2833
    %4160 = vmatprep.subr.bf16.mxu0 0
    %4161 = vmatpush1.bf16.msra.mxu0 %v2834
    %4162 = vmatprep.subr.bf16.mxu0 0
    %4163 = vmatpush1.bf16.msra.mxu0 %v2835
    %4164 = vmatprep.subr.bf16.mxu0 0
    %4165 = vmatpush1.bf16.msra.mxu0 %v2836
    %4166 = vmatprep.subr.bf16.mxu0 0
    %4167 = vmatpush1.bf16.msra.mxu0 %v2837
    %4168 = vmatprep.subr.bf16.mxu0 0
    %4169 = vmatpush1.bf16.msra.mxu0 %v2838
    %4170 = vmatprep.subr.bf16.mxu0 0
    %4171 = vmatpush1.bf16.msra.mxu0 %v2839
    %4172 = vmatprep.subr.bf16.mxu0 0
    %4173 = vmatpush1.bf16.msra.mxu0 %v2840
    %4174 = vmatprep.subr.bf16.mxu0 0
    %4175 = vmatpush1.bf16.msra.mxu0 %v2841
    %4176 = vmatprep.subr.bf16.mxu0 0
    %4177 = vmatpush1.bf16.msra.mxu0 %v2842
    %4178 = vmatprep.subr.bf16.mxu0 0
    %4179 = vmatpush1.bf16.msra.mxu0 %v2843
    %4180 = vmatprep.mubr.bf16.mxu0 %v148
    %4181 = vmatmul.mubr.bf16.gmra.mrb[0].mxu0 %v147
    %v4182 = vpop.f32.mrb[0].mxu0
    %v4183 = vadd.f32 %v4143, %v4182
    %v4184 = vpop.f32.mrb[0].mxu0
    %v4185 = vpop.f32.mrb[0].mxu0
    %v4186 = vpop.f32.mrb[0].mxu0
    %4187 = vdwg.mxu0
    %4188 = vst [vmem:[#allocation8] sm:$0xff] %v4183
    // Predicated region
    $region26: #{tpu_custom_call.1} parent=1 // pred_check
      _
    $region27: #{tpu_custom_call.1} parent=1 // pred_check_branch
      %4190 = sbr.rel (0) target = $region29
    $region28: #{tpu_custom_call.1} parent=1 // pred_region
      %s4192 = ssub.s32 128, 128
      %4193 = vsyncadd [#allocation4], %s4192
      %s4195 = sshll.u32 [#allocation8], 4
      %s4196 = int_to_ptr.vmem [resolvable:$true] %s4195
      %4198 = dma.vmem_to_hbm [thread:$0]  %s4196, 128, %s3, [#allocation4]
    $region29: #{tpu_custom_call.1} parent=1 // pred_fallthru
      _
    // Predicated region
    $region30: #{tpu_custom_call.1} parent=1 // pred_check
      _
    $region31: #{tpu_custom_call.1} parent=1 // pred_check_branch
      %4200 = sbr.rel (0) target = $region33
    $region32: #{tpu_custom_call.1} parent=1 // pred_region
      %4201 = dma.done [#allocation4], 128
    $region33: #{tpu_custom_call.1} parent=1 // pred_fallthru
      _
    %4202 = vsyncpa [#allocation3], 1
    %4203 = vsyncpa [#allocation6], 1
    %4204 = vsyncpa [#allocation4], 1

</llo_original>
